<compile_context>
chip_gen: v7x
topology: tpu7x:2x2x1
jax: 0.10.0
libtpu: 0.0.40
codegen_flags: <defaults>
</compile_context>

<pallas_src>
import functools
import math

import jax
import jax.numpy as jnp
from jax.experimental import pallas as pl
from jax.experimental.pallas import tpu as pltpu


# ----------------------------------------------------------------------------
# Helpers
# ----------------------------------------------------------------------------

def _shift_rows(x, offset):
    """Return y with y[i] = x[i + offset]; rows shifted in are zero."""
    if offset == 0:
        return x
    S = x.shape[0]
    pad = jnp.zeros((abs(offset),) + x.shape[1:], x.dtype)
    if offset > 0:
        return jnp.concatenate([x[offset:], pad], axis=0)
    return jnp.concatenate([pad, x[:S + offset]], axis=0)


# ----------------------------------------------------------------------------
# Kernel 1: in_proj -> attention (+ in-kernel TISA bias) -> gate/GLU
#           -> residual -> T5 norm_2            (one grid step per batch elem)
# ----------------------------------------------------------------------------

def _attn_gate_norm_kernel(x_ref, w_in_ref, w_gate_ref, b_gate_ref, nw_ref,
                           amps_ref, offsets_ref, slopes_ref, o_ref,
                           *, num_heads, head_dim, scale, eps):
    S, C = x_ref.shape
    x = x_ref[...]                                     # (S, C) f32, residual
    xb = x.astype(jnp.bfloat16)

    # in_proj (bias-free). Column layout: [0,C)=K, [C,2C)=V, [2C,3C)=Q.
    proj = jnp.dot(xb, w_in_ref[...], preferred_element_type=jnp.float32)

    # Relative-position matrix d = j - i (shared across heads).
    col = jax.lax.broadcasted_iota(jnp.int32, (S, S), 1)
    row = jax.lax.broadcasted_iota(jnp.int32, (S, S), 0)
    rel = (col - row).astype(jnp.float32)

    num_kernels = amps_ref.shape[1]
    head_outs = []
    for h in range(num_heads):
        lo = h * head_dim
        hi = lo + head_dim
        kh = proj[:, lo:hi].astype(jnp.bfloat16)
        vh = proj[:, C + lo:C + hi].astype(jnp.bfloat16)
        qh = (proj[:, 2 * C + lo:2 * C + hi] * scale).astype(jnp.bfloat16)

        # TODO(synk): TisaV2 approximated as per-head RBF positional bias,
        # computed in-kernel from SMEM-resident (H, K) parameters.
        bias = jnp.zeros((S, S), jnp.float32)
        for kk in range(num_kernels):
            a = amps_ref[h, kk]
            off = offsets_ref[h, kk]
            sl = jnp.abs(slopes_ref[h, kk])
            bias = bias + a * jnp.exp(-sl * (rel - off) ** 2)

        # q @ k^T (contraction on head_dim), f32 accumulation.
        s = jax.lax.dot_general(qh, kh, (((1,), (1,)), ((), ())),
                                preferred_element_type=jnp.float32) + bias
        m = jnp.max(s, axis=-1, keepdims=True)
        p = jnp.exp(s - m)
        p = p * pl.reciprocal(jnp.sum(p, axis=-1, keepdims=True), approx=True)
        head_outs.append(jnp.dot(p.astype(jnp.bfloat16), vh,
                                 preferred_element_type=jnp.float32))

    # Combine heads directly into a lane-dense (S, C) slab (== permute+view).
    attn = jnp.concatenate(head_outs, axis=-1)

    # gate = Linear(C, 2C) + GLU
    g = jnp.dot(attn.astype(jnp.bfloat16), w_gate_ref[...],
                preferred_element_type=jnp.float32) + b_gate_ref[...]
    glu = g[:, :C] * jax.nn.sigmoid(g[:, C:])

    # post-LN: residual add + T5 (RMS) norm with norm_2 weight.
    r = glu + x
    var = jnp.mean(r * r, axis=-1, keepdims=True)
    o_ref[...] = nw_ref[...] * (r * jax.lax.rsqrt(var + eps))


def attn_gate_norm(x, w_in, w_gate, b_gate, norm2_w, amps, offsets, slopes,
                   *, num_heads, eps=1e-6):
    B, S, C = x.shape
    D = C // num_heads
    scale = 1.0 / math.sqrt(float(D))
    kernel = functools.partial(_attn_gate_norm_kernel, num_heads=num_heads,
                               head_dim=D, scale=scale, eps=eps)
    bsc = lambda b: (b, 0, 0)
    smem_spec = pl.BlockSpec(memory_space=pltpu.MemorySpace.SMEM)
    return pl.pallas_call(
        kernel,
        out_shape=jax.ShapeDtypeStruct((B, S, C), jnp.float32),
        grid=(B,),
        in_specs=[
            pl.BlockSpec((pl.Squeezed(), S, C), bsc),          # x
            pl.BlockSpec((C, 3 * C), lambda b: (0, 0)),        # w_in (bf16)
            pl.BlockSpec((C, 2 * C), lambda b: (0, 0)),        # w_gate (bf16)
            pl.BlockSpec((1, 2 * C), lambda b: (0, 0)),        # b_gate
            pl.BlockSpec((1, C), lambda b: (0, 0)),            # norm_2 weight
            smem_spec, smem_spec, smem_spec,                   # TISA params
        ],
        out_specs=pl.BlockSpec((pl.Squeezed(), S, C), bsc),
        compiler_params=pltpu.CompilerParams(
            dimension_semantics=("parallel",)),
    )(x, w_in, w_gate, b_gate, norm2_w, amps, offsets, slopes)


# ----------------------------------------------------------------------------
# Kernel 2: conv_1 + ReLU + conv_2 + residual + T5 norm_1
#           (one grid step per batch elem; hidden never leaves VMEM)
# ----------------------------------------------------------------------------

def _conv_ff_kernel(x_ref, w1_ref, w2_ref, nw_ref, o_ref, *, dilation, eps):
    x = x_ref[...]                                     # (S, C) f32, residual
    d = dilation

    def tap(src_f32, w_tap_bf16):
        return jnp.dot(src_f32.astype(jnp.bfloat16), w_tap_bf16,
                       preferred_element_type=jnp.float32)

    # conv_1 ('same' 3-tap dilated conv) + ReLU. Hidden stays on-chip.
    h = tap(_shift_rows(x, -d), w1_ref[0])
    h += tap(x, w1_ref[1])
    h += tap(_shift_rows(x, d), w1_ref[2])
    h = jnp.maximum(h, 0.0)                            # (S, D_FF) f32

    # conv_2
    y = tap(_shift_rows(h, -d), w2_ref[0])
    y += tap(h, w2_ref[1])
    y += tap(_shift_rows(h, d), w2_ref[2])

    # post-LN: residual add + T5 (RMS) norm with norm_1 weight.
    r = y + x
    var = jnp.mean(r * r, axis=-1, keepdims=True)
    o_ref[...] = nw_ref[...] * (r * jax.lax.rsqrt(var + eps))


def conv_ff_norm(x, w1, w2, norm1_w, *, dilation, eps=1e-6):
    B, S, C = x.shape
    D_FF = w1.shape[-1]
    kernel = functools.partial(_conv_ff_kernel, dilation=dilation, eps=eps)
    bsc = lambda b: (b, 0, 0)
    return pl.pallas_call(
        kernel,
        out_shape=jax.ShapeDtypeStruct((B, S, C), jnp.float32),
        grid=(B,),
        in_specs=[
            pl.BlockSpec((pl.Squeezed(), S, C), bsc),          # x
            pl.BlockSpec((3, C, D_FF), lambda b: (0, 0, 0)),   # conv1 w (bf16)
            pl.BlockSpec((3, D_FF, C), lambda b: (0, 0, 0)),   # conv2 w (bf16)
            pl.BlockSpec((1, C), lambda b: (0, 0)),            # norm_1 weight
        ],
        out_specs=pl.BlockSpec((pl.Squeezed(), S, C), bsc),
        compiler_params=pltpu.CompilerParams(
            dimension_semantics=("parallel",)),
    )(x, w1, w2, norm1_w)


# ----------------------------------------------------------------------------
# AttnBlock forward (post-LN, norm='T5', ff=ConvLayer, dropout=identity)
# ----------------------------------------------------------------------------

def attn_block_forward(x, params, *, num_heads, dilation=1):
    x = attn_gate_norm(x, params["w_in"], params["w_gate"], params["b_gate"],
                       params["norm2_w"], params["tisa_amps"],
                       params["tisa_offsets"], params["tisa_slopes"],
                       num_heads=num_heads)
    x = conv_ff_norm(x, params["conv1_w"], params["conv2_w"],
                     params["norm1_w"], dilation=dilation)
    return x


# ----------------------------------------------------------------------------
# Driver
# ----------------------------------------------------------------------------

if __name__ == "__main__":
    B, S, C = 2, 16, 32
    H = 4
    D_FF = 64
    TISA_K = 5
    max_field_view = S // 2

    key = jax.random.PRNGKey(0)
    ks = jax.random.split(key, 8)

    params = {
        # nn.Linear(d_model, 3*d_model, bias=False): stored as (C, 3C) = W.T
        "w_in": (jax.random.normal(ks[0], (C, 3 * C), jnp.float32) * 0.05
                 ).astype(jnp.bfloat16),
        # nn.Linear(d_model, 2*d_model) with bias
        "w_gate": (jax.random.normal(ks[1], (C, 2 * C), jnp.float32) * 0.05
                   ).astype(jnp.bfloat16),
        "b_gate": jax.random.normal(ks[2], (1, 2 * C), jnp.float32) * 0.05,
        # Conv1d(d_model, d_ff, 3) / Conv1d(d_ff, d_model, 3): (tap, Cin, Cout)
        "conv1_w": (jax.random.normal(ks[3], (3, C, D_FF), jnp.float32) * 0.05
                    ).astype(jnp.bfloat16),
        "conv2_w": (jax.random.normal(ks[4], (3, D_FF, C), jnp.float32) * 0.05
                    ).astype(jnp.bfloat16),
        # T5LayerNorm weights init to ones
        "norm1_w": jnp.ones((1, C), jnp.float32),
        "norm2_w": jnp.ones((1, C), jnp.float32),
        # TISA kernel parameters (deterministic)
        "tisa_amps": jax.random.normal(ks[5], (H, TISA_K), jnp.float32) * 0.1,
        "tisa_offsets": jnp.tile(
            jnp.linspace(-float(max_field_view), float(max_field_view),
                         TISA_K, dtype=jnp.float32)[None, :], (H, 1)),
        "tisa_slopes": jnp.abs(
            jax.random.normal(ks[6], (H, TISA_K), jnp.float32)) * 0.2 + 0.05,
    }

    x = jax.random.normal(ks[7], (B, S, C), jnp.float32)

    fwd = jax.jit(functools.partial(attn_block_forward, num_heads=H,
                                    dilation=1))
    out = jax.block_until_ready(fwd(x, params))
    assert out.shape == (B, S, C), out.shape
    assert bool(jnp.all(jnp.isfinite(out)))
    print("KERNEL_OK")
</pallas_src>

<mosaic_0001>
module attributes {stable_mosaic.version = 11 : i64} {
  func.func @_conv_ff_kernel(%arg0: i32, %arg1: memref<1x16x32xf32, #tpu.memory_space<vmem>>, %arg2: memref<3x32x64xbf16, #tpu.memory_space<vmem>>, %arg3: memref<3x64x32xbf16, #tpu.memory_space<vmem>>, %arg4: memref<1x32xf32, #tpu.memory_space<vmem>>, %arg5: memref<1x16x32xf32, #tpu.memory_space<vmem>>) attributes {dimension_semantics = [#tpu.dimension_semantics<parallel>], iteration_bounds = array<i64: 2>, scalar_prefetch = 0 : i64, scratch_operands = 0 : i64, tpu.core_type = #tpu.core_type<tc>, window_params = [{transform_indices = @transform_0, window_bounds = array<i64: 1, 16, 32>}, {pipeline_mode = #tpu.pipeline_mode<synchronous>, transform_indices = @transform_1, window_bounds = array<i64: 3, 32, 64>}, {pipeline_mode = #tpu.pipeline_mode<synchronous>, transform_indices = @transform_2, window_bounds = array<i64: 3, 64, 32>}, {pipeline_mode = #tpu.pipeline_mode<synchronous>, transform_indices = @transform_3, window_bounds = array<i64: 1, 32>}, {transform_indices = @transform_4, window_bounds = array<i64: 1, 16, 32>}]} {
    %c0 = arith.constant 0 : index
    %c0_0 = arith.constant 0 : index
    %c0_1 = arith.constant 0 : index
    %0 = vector.load %arg1[%c0, %c0_0, %c0_1] : memref<1x16x32xf32, #tpu.memory_space<vmem>>, vector<1x16x32xf32>
    %1 = vector.shape_cast %0 : vector<1x16x32xf32> to vector<16x32xf32>
    %cst = arith.constant 0.000000e+00 : f32
    %2 = vector.broadcast %cst : f32 to vector<1x32xf32>
    %3 = vector.extract_strided_slice %1 {offsets = [0, 0], sizes = [15, 32], strides = [1, 1]} : vector<16x32xf32> to vector<15x32xf32>
    %4 = tpu.concatenate %2, %3 in 0 : vector<1x32xf32>, vector<15x32xf32> -> vector<16x32xf32>
    %c0_2 = arith.constant 0 : index
    %c0_3 = arith.constant 0 : index
    %c0_4 = arith.constant 0 : index
    %5 = vector.load %arg2[%c0_2, %c0_3, %c0_4] : memref<3x32x64xbf16, #tpu.memory_space<vmem>>, vector<1x32x64xbf16>
    %6 = vector.shape_cast %5 : vector<1x32x64xbf16> to vector<32x64xbf16>
    %7 = arith.truncf %4 : vector<16x32xf32> to vector<16x32xbf16>
    %cst_5 = arith.constant dense<0.000000e+00> : vector<16x64xf32>
    %8 = tpu.matmul %7, %6, %cst_5 {dimension_numbers = #tpu.dot_dimension_numbers<[1], [0], [0], [1], [0, 0, 1, 1], [], []>} : vector<16x32xbf16>, vector<32x64xbf16>, vector<16x64xf32> -> vector<16x64xf32>
    %c1 = arith.constant 1 : index
    %c0_6 = arith.constant 0 : index
    %c0_7 = arith.constant 0 : index
    %9 = vector.load %arg2[%c1, %c0_6, %c0_7] : memref<3x32x64xbf16, #tpu.memory_space<vmem>>, vector<1x32x64xbf16>
    %10 = vector.shape_cast %9 : vector<1x32x64xbf16> to vector<32x64xbf16>
    %11 = arith.truncf %1 : vector<16x32xf32> to vector<16x32xbf16>
    %cst_8 = arith.constant dense<0.000000e+00> : vector<16x64xf32>
    %12 = tpu.matmul %11, %10, %cst_8 {dimension_numbers = #tpu.dot_dimension_numbers<[1], [0], [0], [1], [0, 0, 1, 1], [], []>} : vector<16x32xbf16>, vector<32x64xbf16>, vector<16x64xf32> -> vector<16x64xf32>
    %13 = arith.addf %8, %12 : vector<16x64xf32>
    %cst_9 = arith.constant 0.000000e+00 : f32
    %14 = vector.broadcast %cst_9 : f32 to vector<1x32xf32>
    %15 = vector.extract_strided_slice %1 {offsets = [1, 0], sizes = [15, 32], strides = [1, 1]} : vector<16x32xf32> to vector<15x32xf32>
    %16 = tpu.concatenate %15, %14 in 0 : vector<15x32xf32>, vector<1x32xf32> -> vector<16x32xf32>
    %c2 = arith.constant 2 : index
    %c0_10 = arith.constant 0 : index
    %c0_11 = arith.constant 0 : index
    %17 = vector.load %arg2[%c2, %c0_10, %c0_11] : memref<3x32x64xbf16, #tpu.memory_space<vmem>>, vector<1x32x64xbf16>
    %18 = vector.shape_cast %17 : vector<1x32x64xbf16> to vector<32x64xbf16>
    %19 = arith.truncf %16 : vector<16x32xf32> to vector<16x32xbf16>
    %cst_12 = arith.constant dense<0.000000e+00> : vector<16x64xf32>
    %20 = tpu.matmul %19, %18, %cst_12 {dimension_numbers = #tpu.dot_dimension_numbers<[1], [0], [0], [1], [0, 0, 1, 1], [], []>} : vector<16x32xbf16>, vector<32x64xbf16>, vector<16x64xf32> -> vector<16x64xf32>
    %21 = arith.addf %13, %20 : vector<16x64xf32>
    %cst_13 = arith.constant 0.000000e+00 : f32
    %22 = vector.broadcast %cst_13 : f32 to vector<16x64xf32>
    %23 = arith.maximumf %21, %22 : vector<16x64xf32>
    %cst_14 = arith.constant 0.000000e+00 : f32
    %24 = vector.broadcast %cst_14 : f32 to vector<1x64xf32>
    %25 = vector.extract_strided_slice %23 {offsets = [0, 0], sizes = [15, 64], strides = [1, 1]} : vector<16x64xf32> to vector<15x64xf32>
    %26 = tpu.concatenate %24, %25 in 0 : vector<1x64xf32>, vector<15x64xf32> -> vector<16x64xf32>
    %c0_15 = arith.constant 0 : index
    %c0_16 = arith.constant 0 : index
    %c0_17 = arith.constant 0 : index
    %27 = vector.load %arg3[%c0_15, %c0_16, %c0_17] : memref<3x64x32xbf16, #tpu.memory_space<vmem>>, vector<1x64x32xbf16>
    %28 = vector.shape_cast %27 : vector<1x64x32xbf16> to vector<64x32xbf16>
    %29 = arith.truncf %26 : vector<16x64xf32> to vector<16x64xbf16>
    %cst_18 = arith.constant dense<0.000000e+00> : vector<16x32xf32>
    %30 = tpu.matmul %29, %28, %cst_18 {dimension_numbers = #tpu.dot_dimension_numbers<[1], [0], [0], [1], [0, 0, 1, 1], [], []>} : vector<16x64xbf16>, vector<64x32xbf16>, vector<16x32xf32> -> vector<16x32xf32>
    %c1_19 = arith.constant 1 : index
    %c0_20 = arith.constant 0 : index
    %c0_21 = arith.constant 0 : index
    %31 = vector.load %arg3[%c1_19, %c0_20, %c0_21] : memref<3x64x32xbf16, #tpu.memory_space<vmem>>, vector<1x64x32xbf16>
    %32 = vector.shape_cast %31 : vector<1x64x32xbf16> to vector<64x32xbf16>
    %33 = arith.truncf %23 : vector<16x64xf32> to vector<16x64xbf16>
    %cst_22 = arith.constant dense<0.000000e+00> : vector<16x32xf32>
    %34 = tpu.matmul %33, %32, %cst_22 {dimension_numbers = #tpu.dot_dimension_numbers<[1], [0], [0], [1], [0, 0, 1, 1], [], []>} : vector<16x64xbf16>, vector<64x32xbf16>, vector<16x32xf32> -> vector<16x32xf32>
    %35 = arith.addf %30, %34 : vector<16x32xf32>
    %cst_23 = arith.constant 0.000000e+00 : f32
    %36 = vector.broadcast %cst_23 : f32 to vector<1x64xf32>
    %37 = vector.extract_strided_slice %23 {offsets = [1, 0], sizes = [15, 64], strides = [1, 1]} : vector<16x64xf32> to vector<15x64xf32>
    %38 = tpu.concatenate %37, %36 in 0 : vector<15x64xf32>, vector<1x64xf32> -> vector<16x64xf32>
    %c2_24 = arith.constant 2 : index
    %c0_25 = arith.constant 0 : index
    %c0_26 = arith.constant 0 : index
    %39 = vector.load %arg3[%c2_24, %c0_25, %c0_26] : memref<3x64x32xbf16, #tpu.memory_space<vmem>>, vector<1x64x32xbf16>
    %40 = vector.shape_cast %39 : vector<1x64x32xbf16> to vector<64x32xbf16>
    %41 = arith.truncf %38 : vector<16x64xf32> to vector<16x64xbf16>
    %cst_27 = arith.constant dense<0.000000e+00> : vector<16x32xf32>
    %42 = tpu.matmul %41, %40, %cst_27 {dimension_numbers = #tpu.dot_dimension_numbers<[1], [0], [0], [1], [0, 0, 1, 1], [], []>} : vector<16x64xbf16>, vector<64x32xbf16>, vector<16x32xf32> -> vector<16x32xf32>
    %43 = arith.addf %35, %42 : vector<16x32xf32>
    %44 = arith.addf %43, %1 : vector<16x32xf32>
    %45 = arith.mulf %44, %44 : vector<16x32xf32>
    %cst_28 = arith.constant dense<0.000000e+00> : vector<16xf32>
    %46 = vector.multi_reduction <add>, %45, %cst_28 [1] : vector<16x32xf32> to vector<16xf32>
    %47 = vector.shape_cast %46 : vector<16xf32> to vector<16x1xf32>
    %cst_29 = arith.constant 3.200000e+01 : f32
    %48 = vector.broadcast %cst_29 : f32 to vector<16x1xf32>
    %49 = arith.divf %47, %48 : vector<16x1xf32>
    %c0_30 = arith.constant 0 : index
    %c0_31 = arith.constant 0 : index
    %50 = vector.load %arg4[%c0_30, %c0_31] : memref<1x32xf32, #tpu.memory_space<vmem>>, vector<1x32xf32>
    %cst_32 = arith.constant 9.99999997E-7 : f32
    %51 = vector.broadcast %cst_32 : f32 to vector<16x1xf32>
    %52 = arith.addf %49, %51 : vector<16x1xf32>
    %53 = math.rsqrt %52 : vector<16x1xf32>
    %54 = vector.broadcast %53 : vector<16x1xf32> to vector<16x32xf32>
    %55 = arith.mulf %44, %54 : vector<16x32xf32>
    %56 = vector.broadcast %50 : vector<1x32xf32> to vector<16x32xf32>
    %57 = arith.mulf %56, %55 : vector<16x32xf32>
    %c0_33 = arith.constant 0 : index
    %c0_34 = arith.constant 0 : index
    %c0_35 = arith.constant 0 : index
    %58 = vector.load %arg5[%c0_33, %c0_34, %c0_35] : memref<1x16x32xf32, #tpu.memory_space<vmem>>, vector<1x16x32xf32>
    %59 = vector.shape_cast %58 : vector<1x16x32xf32> to vector<16x32xf32>
    %60 = vector.shape_cast %57 : vector<16x32xf32> to vector<1x16x32xf32>
    tpu.vector_store %arg5[%c0_33, %c0_34, %c0_35], %60 {strides = array<i32>} : memref<1x16x32xf32, #tpu.memory_space<vmem>>, vector<1x16x32xf32>,
    return
  }
  func.func @transform_0(%arg0: i32) -> (i32, i32, i32) {
    %c0_i32 = arith.constant 0 : i32
    %c0_i32_0 = arith.constant 0 : i32
    %c0_i32_1 = arith.constant 0 : i32
    return %arg0, %c0_i32, %c0_i32_0 : i32, i32, i32
  }
  func.func @transform_1(%arg0: i32) -> (i32, i32, i32) {
    %c0_i32 = arith.constant 0 : i32
    %c0_i32_0 = arith.constant 0 : i32
    %c0_i32_1 = arith.constant 0 : i32
    %c0_i32_2 = arith.constant 0 : i32
    return %c0_i32, %c0_i32_0, %c0_i32_1 : i32, i32, i32
  }
  func.func @transform_2(%arg0: i32) -> (i32, i32, i32) {
    %c0_i32 = arith.constant 0 : i32
    %c0_i32_0 = arith.constant 0 : i32
    %c0_i32_1 = arith.constant 0 : i32
    %c0_i32_2 = arith.constant 0 : i32
    return %c0_i32, %c0_i32_0, %c0_i32_1 : i32, i32, i32
  }
  func.func @transform_3(%arg0: i32) -> (i32, i32) {
    %c0_i32 = arith.constant 0 : i32
    %c0_i32_0 = arith.constant 0 : i32
    %c0_i32_1 = arith.constant 0 : i32
    return %c0_i32, %c0_i32_0 : i32, i32
  }
  func.func @transform_4(%arg0: i32) -> (i32, i32, i32) {
    %c0_i32 = arith.constant 0 : i32
    %c0_i32_0 = arith.constant 0 : i32
    %c0_i32_1 = arith.constant 0 : i32
    return %arg0, %c0_i32, %c0_i32_0 : i32, i32, i32
  }
}

module attributes {stable_mosaic.version = 11 : i64} {
  func.func @_attn_gate_norm_kernel(%arg0: i32, %arg1: memref<1x16x32xf32, #tpu.memory_space<vmem>>, %arg2: memref<32x96xbf16, #tpu.memory_space<vmem>>, %arg3: memref<32x64xbf16, #tpu.memory_space<vmem>>, %arg4: memref<1x64xf32, #tpu.memory_space<vmem>>, %arg5: memref<1x32xf32, #tpu.memory_space<vmem>>, %arg6: memref<4x5xf32, #tpu.memory_space<smem>>, %arg7: memref<4x5xf32, #tpu.memory_space<smem>>, %arg8: memref<4x5xf32, #tpu.memory_space<smem>>, %arg9: memref<1x16x32xf32, #tpu.memory_space<vmem>>) attributes {dimension_semantics = [#tpu.dimension_semantics<parallel>], iteration_bounds = array<i64: 2>, scalar_prefetch = 0 : i64, scratch_operands = 0 : i64, tpu.core_type = #tpu.core_type<tc>, window_params = [{transform_indices = @transform_0, window_bounds = array<i64: 1, 16, 32>}, {pipeline_mode = #tpu.pipeline_mode<synchronous>, transform_indices = @transform_1, window_bounds = array<i64: 32, 96>}, {pipeline_mode = #tpu.pipeline_mode<synchronous>, transform_indices = @transform_2, window_bounds = array<i64: 32, 64>}, {pipeline_mode = #tpu.pipeline_mode<synchronous>, transform_indices = @transform_3, window_bounds = array<i64: 1, 64>}, {pipeline_mode = #tpu.pipeline_mode<synchronous>, transform_indices = @transform_4, window_bounds = array<i64: 1, 32>}, {transform_indices = @transform_5, window_bounds = array<i64: 4, 5>}, {transform_indices = @transform_6, window_bounds = array<i64: 4, 5>}, {transform_indices = @transform_7, window_bounds = array<i64: 4, 5>}, {transform_indices = @transform_8, window_bounds = array<i64: 1, 16, 32>}]} {
    %c0 = arith.constant 0 : index
    %c0_0 = arith.constant 0 : index
    %c0_1 = arith.constant 0 : index
    %0 = vector.load %arg1[%c0, %c0_0, %c0_1] : memref<1x16x32xf32, #tpu.memory_space<vmem>>, vector<1x16x32xf32>
    %1 = vector.shape_cast %0 : vector<1x16x32xf32> to vector<16x32xf32>
    %2 = arith.truncf %1 : vector<16x32xf32> to vector<16x32xbf16>
    %c0_2 = arith.constant 0 : index
    %c0_3 = arith.constant 0 : index
    %3 = vector.load %arg2[%c0_2, %c0_3] : memref<32x96xbf16, #tpu.memory_space<vmem>>, vector<32x96xbf16>
    %cst = arith.constant dense<0.000000e+00> : vector<16x96xf32>
    %4 = tpu.matmul %2, %3, %cst {dimension_numbers = #tpu.dot_dimension_numbers<[1], [0], [0], [1], [0, 0, 1, 1], [], []>} : vector<16x32xbf16>, vector<32x96xbf16>, vector<16x96xf32> -> vector<16x96xf32>
    %5 = tpu.iota {dimensions = array<i32: 1>} : vector<16x16xi32>
    %6 = tpu.iota {dimensions = array<i32: 0>} : vector<16x16xi32>
    %7 = arith.subi %5, %6 : vector<16x16xi32>
    %8 = arith.sitofp %7 : vector<16x16xi32> to vector<16x16xf32>
    %9 = vector.extract_strided_slice %4 {offsets = [0, 0], sizes = [16, 8], strides = [1, 1]} : vector<16x96xf32> to vector<16x8xf32>
    %10 = arith.truncf %9 : vector<16x8xf32> to vector<16x8xbf16>
    %11 = vector.extract_strided_slice %4 {offsets = [0, 32], sizes = [16, 8], strides = [1, 1]} : vector<16x96xf32> to vector<16x8xf32>
    %12 = arith.truncf %11 : vector<16x8xf32> to vector<16x8xbf16>
    %13 = vector.extract_strided_slice %4 {offsets = [0, 64], sizes = [16, 8], strides = [1, 1]} : vector<16x96xf32> to vector<16x8xf32>
    %cst_4 = arith.constant 0.353553385 : f32
    %14 = vector.broadcast %cst_4 : f32 to vector<16x8xf32>
    %15 = arith.mulf %13, %14 : vector<16x8xf32>
    %16 = arith.truncf %15 : vector<16x8xf32> to vector<16x8xbf16>
    %cst_5 = arith.constant 0.000000e+00 : f32
    %17 = vector.broadcast %cst_5 : f32 to vector<16x16xf32>
    %c0_6 = arith.constant 0 : index
    %c0_7 = arith.constant 0 : index
    %18 = memref.load %arg6[%c0_6, %c0_7] : memref<4x5xf32, #tpu.memory_space<smem>>
    %c0_8 = arith.constant 0 : index
    %c0_9 = arith.constant 0 : index
    %19 = memref.load %arg7[%c0_8, %c0_9] : memref<4x5xf32, #tpu.memory_space<smem>>
    %c0_10 = arith.constant 0 : index
    %c0_11 = arith.constant 0 : index
    %20 = memref.load %arg8[%c0_10, %c0_11] : memref<4x5xf32, #tpu.memory_space<smem>>
    %21 = math.absf %20 : f32
    %cst_12 = arith.constant 0.000000e+00 : f32
    %22 = arith.subf %cst_12, %21 : f32
    %23 = vector.broadcast %19 : f32 to vector<16x16xf32>
    %24 = arith.subf %8, %23 : vector<16x16xf32>
    %25 = arith.mulf %24, %24 : vector<16x16xf32>
    %26 = vector.broadcast %22 : f32 to vector<16x16xf32>
    %27 = arith.mulf %26, %25 : vector<16x16xf32>
    %28 = math.exp %27 : vector<16x16xf32>
    %29 = vector.broadcast %18 : f32 to vector<16x16xf32>
    %30 = arith.mulf %29, %28 : vector<16x16xf32>
    %31 = arith.addf %17, %30 : vector<16x16xf32>
    %c0_13 = arith.constant 0 : index
    %c1 = arith.constant 1 : index
    %32 = memref.load %arg6[%c0_13, %c1] : memref<4x5xf32, #tpu.memory_space<smem>>
    %c0_14 = arith.constant 0 : index
    %c1_15 = arith.constant 1 : index
    %33 = memref.load %arg7[%c0_14, %c1_15] : memref<4x5xf32, #tpu.memory_space<smem>>
    %c0_16 = arith.constant 0 : index
    %c1_17 = arith.constant 1 : index
    %34 = memref.load %arg8[%c0_16, %c1_17] : memref<4x5xf32, #tpu.memory_space<smem>>
    %35 = math.absf %34 : f32
    %cst_18 = arith.constant 0.000000e+00 : f32
    %36 = arith.subf %cst_18, %35 : f32
    %37 = vector.broadcast %33 : f32 to vector<16x16xf32>
    %38 = arith.subf %8, %37 : vector<16x16xf32>
    %39 = arith.mulf %38, %38 : vector<16x16xf32>
    %40 = vector.broadcast %36 : f32 to vector<16x16xf32>
    %41 = arith.mulf %40, %39 : vector<16x16xf32>
    %42 = math.exp %41 : vector<16x16xf32>
    %43 = vector.broadcast %32 : f32 to vector<16x16xf32>
    %44 = arith.mulf %43, %42 : vector<16x16xf32>
    %45 = arith.addf %31, %44 : vector<16x16xf32>
    %c0_19 = arith.constant 0 : index
    %c2 = arith.constant 2 : index
    %46 = memref.load %arg6[%c0_19, %c2] : memref<4x5xf32, #tpu.memory_space<smem>>
    %c0_20 = arith.constant 0 : index
    %c2_21 = arith.constant 2 : index
    %47 = memref.load %arg7[%c0_20, %c2_21] : memref<4x5xf32, #tpu.memory_space<smem>>
    %c0_22 = arith.constant 0 : index
    %c2_23 = arith.constant 2 : index
    %48 = memref.load %arg8[%c0_22, %c2_23] : memref<4x5xf32, #tpu.memory_space<smem>>
    %49 = math.absf %48 : f32
    %cst_24 = arith.constant 0.000000e+00 : f32
    %50 = arith.subf %cst_24, %49 : f32
    %51 = vector.broadcast %47 : f32 to vector<16x16xf32>
    %52 = arith.subf %8, %51 : vector<16x16xf32>
    %53 = arith.mulf %52, %52 : vector<16x16xf32>
    %54 = vector.broadcast %50 : f32 to vector<16x16xf32>
    %55 = arith.mulf %54, %53 : vector<16x16xf32>
    %56 = math.exp %55 : vector<16x16xf32>
    %57 = vector.broadcast %46 : f32 to vector<16x16xf32>
    %58 = arith.mulf %57, %56 : vector<16x16xf32>
    %59 = arith.addf %45, %58 : vector<16x16xf32>
    %c0_25 = arith.constant 0 : index
    %c3 = arith.constant 3 : index
    %60 = memref.load %arg6[%c0_25, %c3] : memref<4x5xf32, #tpu.memory_space<smem>>
    %c0_26 = arith.constant 0 : index
    %c3_27 = arith.constant 3 : index
    %61 = memref.load %arg7[%c0_26, %c3_27] : memref<4x5xf32, #tpu.memory_space<smem>>
    %c0_28 = arith.constant 0 : index
    %c3_29 = arith.constant 3 : index
    %62 = memref.load %arg8[%c0_28, %c3_29] : memref<4x5xf32, #tpu.memory_space<smem>>
    %63 = math.absf %62 : f32
    %cst_30 = arith.constant 0.000000e+00 : f32
    %64 = arith.subf %cst_30, %63 : f32
    %65 = vector.broadcast %61 : f32 to vector<16x16xf32>
    %66 = arith.subf %8, %65 : vector<16x16xf32>
    %67 = arith.mulf %66, %66 : vector<16x16xf32>
    %68 = vector.broadcast %64 : f32 to vector<16x16xf32>
    %69 = arith.mulf %68, %67 : vector<16x16xf32>
    %70 = math.exp %69 : vector<16x16xf32>
    %71 = vector.broadcast %60 : f32 to vector<16x16xf32>
    %72 = arith.mulf %71, %70 : vector<16x16xf32>
    %73 = arith.addf %59, %72 : vector<16x16xf32>
    %c0_31 = arith.constant 0 : index
    %c4 = arith.constant 4 : index
    %74 = memref.load %arg6[%c0_31, %c4] : memref<4x5xf32, #tpu.memory_space<smem>>
    %c0_32 = arith.constant 0 : index
    %c4_33 = arith.constant 4 : index
    %75 = memref.load %arg7[%c0_32, %c4_33] : memref<4x5xf32, #tpu.memory_space<smem>>
    %c0_34 = arith.constant 0 : index
    %c4_35 = arith.constant 4 : index
    %76 = memref.load %arg8[%c0_34, %c4_35] : memref<4x5xf32, #tpu.memory_space<smem>>
    %77 = math.absf %76 : f32
    %cst_36 = arith.constant 0.000000e+00 : f32
    %78 = arith.subf %cst_36, %77 : f32
    %79 = vector.broadcast %75 : f32 to vector<16x16xf32>
    %80 = arith.subf %8, %79 : vector<16x16xf32>
    %81 = arith.mulf %80, %80 : vector<16x16xf32>
    %82 = vector.broadcast %78 : f32 to vector<16x16xf32>
    %83 = arith.mulf %82, %81 : vector<16x16xf32>
    %84 = math.exp %83 : vector<16x16xf32>
    %85 = vector.broadcast %74 : f32 to vector<16x16xf32>
    %86 = arith.mulf %85, %84 : vector<16x16xf32>
    %87 = arith.addf %73, %86 : vector<16x16xf32>
    %cst_37 = arith.constant dense<0.000000e+00> : vector<16x16xf32>
    %88 = tpu.matmul %16, %10, %cst_37 {dimension_numbers = #tpu.dot_dimension_numbers<[1], [1], [0], [0], [0, 0, 1, 0], [], []>} : vector<16x8xbf16>, vector<16x8xbf16>, vector<16x16xf32> -> vector<16x16xf32>
    %89 = arith.addf %88, %87 : vector<16x16xf32>
    %cst_38 = arith.constant dense<0xFF800000> : vector<16xf32>
    %90 = vector.multi_reduction <maximumf>, %89, %cst_38 [1] : vector<16x16xf32> to vector<16xf32>
    %91 = vector.shape_cast %90 : vector<16xf32> to vector<16x1xf32>
    %92 = vector.broadcast %91 : vector<16x1xf32> to vector<16x16xf32>
    %93 = arith.subf %89, %92 : vector<16x16xf32>
    %94 = math.exp %93 : vector<16x16xf32>
    %cst_39 = arith.constant dense<0.000000e+00> : vector<16xf32>
    %95 = vector.multi_reduction <add>, %94, %cst_39 [1] : vector<16x16xf32> to vector<16xf32>
    %96 = vector.shape_cast %95 : vector<16xf32> to vector<16x1xf32>
    %97 = tpu.reciprocal %96 {approx = true} : vector<16x1xf32> -> vector<16x1xf32>
    %98 = vector.broadcast %97 : vector<16x1xf32> to vector<16x16xf32>
    %99 = arith.mulf %94, %98 : vector<16x16xf32>
    %100 = arith.truncf %99 : vector<16x16xf32> to vector<16x16xbf16>
    %cst_40 = arith.constant dense<0.000000e+00> : vector<16x8xf32>
    %101 = tpu.matmul %100, %12, %cst_40 {dimension_numbers = #tpu.dot_dimension_numbers<[1], [0], [0], [1], [0, 0, 1, 1], [], []>} : vector<16x16xbf16>, vector<16x8xbf16>, vector<16x8xf32> -> vector<16x8xf32>
    %102 = vector.extract_strided_slice %4 {offsets = [0, 8], sizes = [16, 8], strides = [1, 1]} : vector<16x96xf32> to vector<16x8xf32>
    %103 = arith.truncf %102 : vector<16x8xf32> to vector<16x8xbf16>
    %104 = vector.extract_strided_slice %4 {offsets = [0, 40], sizes = [16, 8], strides = [1, 1]} : vector<16x96xf32> to vector<16x8xf32>
    %105 = arith.truncf %104 : vector<16x8xf32> to vector<16x8xbf16>
    %106 = vector.extract_strided_slice %4 {offsets = [0, 72], sizes = [16, 8], strides = [1, 1]} : vector<16x96xf32> to vector<16x8xf32>
    %cst_41 = arith.constant 0.353553385 : f32
    %107 = vector.broadcast %cst_41 : f32 to vector<16x8xf32>
    %108 = arith.mulf %106, %107 : vector<16x8xf32>
    %109 = arith.truncf %108 : vector<16x8xf32> to vector<16x8xbf16>
    %cst_42 = arith.constant 0.000000e+00 : f32
    %110 = vector.broadcast %cst_42 : f32 to vector<16x16xf32>
    %c1_43 = arith.constant 1 : index
    %c0_44 = arith.constant 0 : index
    %111 = memref.load %arg6[%c1_43, %c0_44] : memref<4x5xf32, #tpu.memory_space<smem>>
    %c1_45 = arith.constant 1 : index
    %c0_46 = arith.constant 0 : index
    %112 = memref.load %arg7[%c1_45, %c0_46] : memref<4x5xf32, #tpu.memory_space<smem>>
    %c1_47 = arith.constant 1 : index
    %c0_48 = arith.constant 0 : index
    %113 = memref.load %arg8[%c1_47, %c0_48] : memref<4x5xf32, #tpu.memory_space<smem>>
    %114 = math.absf %113 : f32
    %cst_49 = arith.constant 0.000000e+00 : f32
    %115 = arith.subf %cst_49, %114 : f32
    %116 = vector.broadcast %112 : f32 to vector<16x16xf32>
    %117 = arith.subf %8, %116 : vector<16x16xf32>
    %118 = arith.mulf %117, %117 : vector<16x16xf32>
    %119 = vector.broadcast %115 : f32 to vector<16x16xf32>
    %120 = arith.mulf %119, %118 : vector<16x16xf32>
    %121 = math.exp %120 : vector<16x16xf32>
    %122 = vector.broadcast %111 : f32 to vector<16x16xf32>
    %123 = arith.mulf %122, %121 : vector<16x16xf32>
    %124 = arith.addf %110, %123 : vector<16x16xf32>
    %c1_50 = arith.constant 1 : index
    %c1_51 = arith.constant 1 : index
    %125 = memref.load %arg6[%c1_50, %c1_51] : memref<4x5xf32, #tpu.memory_space<smem>>
    %c1_52 = arith.constant 1 : index
    %c1_53 = arith.constant 1 : index
    %126 = memref.load %arg7[%c1_52, %c1_53] : memref<4x5xf32, #tpu.memory_space<smem>>
    %c1_54 = arith.constant 1 : index
    %c1_55 = arith.constant 1 : index
    %127 = memref.load %arg8[%c1_54, %c1_55] : memref<4x5xf32, #tpu.memory_space<smem>>
    %128 = math.absf %127 : f32
    %cst_56 = arith.constant 0.000000e+00 : f32
    %129 = arith.subf %cst_56, %128 : f32
    %130 = vector.broadcast %126 : f32 to vector<16x16xf32>
    %131 = arith.subf %8, %130 : vector<16x16xf32>
    %132 = arith.mulf %131, %131 : vector<16x16xf32>
    %133 = vector.broadcast %129 : f32 to vector<16x16xf32>
    %134 = arith.mulf %133, %132 : vector<16x16xf32>
    %135 = math.exp %134 : vector<16x16xf32>
    %136 = vector.broadcast %125 : f32 to vector<16x16xf32>
    %137 = arith.mulf %136, %135 : vector<16x16xf32>
    %138 = arith.addf %124, %137 : vector<16x16xf32>
    %c1_57 = arith.constant 1 : index
    %c2_58 = arith.constant 2 : index
    %139 = memref.load %arg6[%c1_57, %c2_58] : memref<4x5xf32, #tpu.memory_space<smem>>
    %c1_59 = arith.constant 1 : index
    %c2_60 = arith.constant 2 : index
    %140 = memref.load %arg7[%c1_59, %c2_60] : memref<4x5xf32, #tpu.memory_space<smem>>
    %c1_61 = arith.constant 1 : index
    %c2_62 = arith.constant 2 : index
    %141 = memref.load %arg8[%c1_61, %c2_62] : memref<4x5xf32, #tpu.memory_space<smem>>
    %142 = math.absf %141 : f32
    %cst_63 = arith.constant 0.000000e+00 : f32
    %143 = arith.subf %cst_63, %142 : f32
    %144 = vector.broadcast %140 : f32 to vector<16x16xf32>
    %145 = arith.subf %8, %144 : vector<16x16xf32>
    %146 = arith.mulf %145, %145 : vector<16x16xf32>
    %147 = vector.broadcast %143 : f32 to vector<16x16xf32>
    %148 = arith.mulf %147, %146 : vector<16x16xf32>
    %149 = math.exp %148 : vector<16x16xf32>
    %150 = vector.broadcast %139 : f32 to vector<16x16xf32>
    %151 = arith.mulf %150, %149 : vector<16x16xf32>
    %152 = arith.addf %138, %151 : vector<16x16xf32>
    %c1_64 = arith.constant 1 : index
    %c3_65 = arith.constant 3 : index
    %153 = memref.load %arg6[%c1_64, %c3_65] : memref<4x5xf32, #tpu.memory_space<smem>>
    %c1_66 = arith.constant 1 : index
    %c3_67 = arith.constant 3 : index
    %154 = memref.load %arg7[%c1_66, %c3_67] : memref<4x5xf32, #tpu.memory_space<smem>>
    %c1_68 = arith.constant 1 : index
    %c3_69 = arith.constant 3 : index
    %155 = memref.load %arg8[%c1_68, %c3_69] : memref<4x5xf32, #tpu.memory_space<smem>>
    %156 = math.absf %155 : f32
    %cst_70 = arith.constant 0.000000e+00 : f32
    %157 = arith.subf %cst_70, %156 : f32
    %158 = vector.broadcast %154 : f32 to vector<16x16xf32>
    %159 = arith.subf %8, %158 : vector<16x16xf32>
    %160 = arith.mulf %159, %159 : vector<16x16xf32>
    %161 = vector.broadcast %157 : f32 to vector<16x16xf32>
    %162 = arith.mulf %161, %160 : vector<16x16xf32>
    %163 = math.exp %162 : vector<16x16xf32>
    %164 = vector.broadcast %153 : f32 to vector<16x16xf32>
    %165 = arith.mulf %164, %163 : vector<16x16xf32>
    %166 = arith.addf %152, %165 : vector<16x16xf32>
    %c1_71 = arith.constant 1 : index
    %c4_72 = arith.constant 4 : index
    %167 = memref.load %arg6[%c1_71, %c4_72] : memref<4x5xf32, #tpu.memory_space<smem>>
    %c1_73 = arith.constant 1 : index
    %c4_74 = arith.constant 4 : index
    %168 = memref.load %arg7[%c1_73, %c4_74] : memref<4x5xf32, #tpu.memory_space<smem>>
    %c1_75 = arith.constant 1 : index
    %c4_76 = arith.constant 4 : index
    %169 = memref.load %arg8[%c1_75, %c4_76] : memref<4x5xf32, #tpu.memory_space<smem>>
    %170 = math.absf %169 : f32
    %cst_77 = arith.constant 0.000000e+00 : f32
    %171 = arith.subf %cst_77, %170 : f32
    %172 = vector.broadcast %168 : f32 to vector<16x16xf32>
    %173 = arith.subf %8, %172 : vector<16x16xf32>
    %174 = arith.mulf %173, %173 : vector<16x16xf32>
    %175 = vector.broadcast %171 : f32 to vector<16x16xf32>
    %176 = arith.mulf %175, %174 : vector<16x16xf32>
    %177 = math.exp %176 : vector<16x16xf32>
    %178 = vector.broadcast %167 : f32 to vector<16x16xf32>
    %179 = arith.mulf %178, %177 : vector<16x16xf32>
    %180 = arith.addf %166, %179 : vector<16x16xf32>
    %cst_78 = arith.constant dense<0.000000e+00> : vector<16x16xf32>
    %181 = tpu.matmul %109, %103, %cst_78 {dimension_numbers = #tpu.dot_dimension_numbers<[1], [1], [0], [0], [0, 0, 1, 0], [], []>} : vector<16x8xbf16>, vector<16x8xbf16>, vector<16x16xf32> -> vector<16x16xf32>
    %182 = arith.addf %181, %180 : vector<16x16xf32>
    %cst_79 = arith.constant dense<0xFF800000> : vector<16xf32>
    %183 = vector.multi_reduction <maximumf>, %182, %cst_79 [1] : vector<16x16xf32> to vector<16xf32>
    %184 = vector.shape_cast %183 : vector<16xf32> to vector<16x1xf32>
    %185 = vector.broadcast %184 : vector<16x1xf32> to vector<16x16xf32>
    %186 = arith.subf %182, %185 : vector<16x16xf32>
    %187 = math.exp %186 : vector<16x16xf32>
    %cst_80 = arith.constant dense<0.000000e+00> : vector<16xf32>
    %188 = vector.multi_reduction <add>, %187, %cst_80 [1] : vector<16x16xf32> to vector<16xf32>
    %189 = vector.shape_cast %188 : vector<16xf32> to vector<16x1xf32>
    %190 = tpu.reciprocal %189 {approx = true} : vector<16x1xf32> -> vector<16x1xf32>
    %191 = vector.broadcast %190 : vector<16x1xf32> to vector<16x16xf32>
    %192 = arith.mulf %187, %191 : vector<16x16xf32>
    %193 = arith.truncf %192 : vector<16x16xf32> to vector<16x16xbf16>
    %cst_81 = arith.constant dense<0.000000e+00> : vector<16x8xf32>
    %194 = tpu.matmul %193, %105, %cst_81 {dimension_numbers = #tpu.dot_dimension_numbers<[1], [0], [0], [1], [0, 0, 1, 1], [], []>} : vector<16x16xbf16>, vector<16x8xbf16>, vector<16x8xf32> -> vector<16x8xf32>
    %195 = vector.extract_strided_slice %4 {offsets = [0, 16], sizes = [16, 8], strides = [1, 1]} : vector<16x96xf32> to vector<16x8xf32>
    %196 = arith.truncf %195 : vector<16x8xf32> to vector<16x8xbf16>
    %197 = vector.extract_strided_slice %4 {offsets = [0, 48], sizes = [16, 8], strides = [1, 1]} : vector<16x96xf32> to vector<16x8xf32>
    %198 = arith.truncf %197 : vector<16x8xf32> to vector<16x8xbf16>
    %199 = vector.extract_strided_slice %4 {offsets = [0, 80], sizes = [16, 8], strides = [1, 1]} : vector<16x96xf32> to vector<16x8xf32>
    %cst_82 = arith.constant 0.353553385 : f32
    %200 = vector.broadcast %cst_82 : f32 to vector<16x8xf32>
    %201 = arith.mulf %199, %200 : vector<16x8xf32>
    %202 = arith.truncf %201 : vector<16x8xf32> to vector<16x8xbf16>
    %cst_83 = arith.constant 0.000000e+00 : f32
    %203 = vector.broadcast %cst_83 : f32 to vector<16x16xf32>
    %c2_84 = arith.constant 2 : index
    %c0_85 = arith.constant 0 : index
    %204 = memref.load %arg6[%c2_84, %c0_85] : memref<4x5xf32, #tpu.memory_space<smem>>
    %c2_86 = arith.constant 2 : index
    %c0_87 = arith.constant 0 : index
    %205 = memref.load %arg7[%c2_86, %c0_87] : memref<4x5xf32, #tpu.memory_space<smem>>
    %c2_88 = arith.constant 2 : index
    %c0_89 = arith.constant 0 : index
    %206 = memref.load %arg8[%c2_88, %c0_89] : memref<4x5xf32, #tpu.memory_space<smem>>
    %207 = math.absf %206 : f32
    %cst_90 = arith.constant 0.000000e+00 : f32
    %208 = arith.subf %cst_90, %207 : f32
    %209 = vector.broadcast %205 : f32 to vector<16x16xf32>
    %210 = arith.subf %8, %209 : vector<16x16xf32>
    %211 = arith.mulf %210, %210 : vector<16x16xf32>
    %212 = vector.broadcast %208 : f32 to vector<16x16xf32>
    %213 = arith.mulf %212, %211 : vector<16x16xf32>
    %214 = math.exp %213 : vector<16x16xf32>
    %215 = vector.broadcast %204 : f32 to vector<16x16xf32>
    %216 = arith.mulf %215, %214 : vector<16x16xf32>
    %217 = arith.addf %203, %216 : vector<16x16xf32>
    %c2_91 = arith.constant 2 : index
    %c1_92 = arith.constant 1 : index
    %218 = memref.load %arg6[%c2_91, %c1_92] : memref<4x5xf32, #tpu.memory_space<smem>>
    %c2_93 = arith.constant 2 : index
    %c1_94 = arith.constant 1 : index
    %219 = memref.load %arg7[%c2_93, %c1_94] : memref<4x5xf32, #tpu.memory_space<smem>>
    %c2_95 = arith.constant 2 : index
    %c1_96 = arith.constant 1 : index
    %220 = memref.load %arg8[%c2_95, %c1_96] : memref<4x5xf32, #tpu.memory_space<smem>>
    %221 = math.absf %220 : f32
    %cst_97 = arith.constant 0.000000e+00 : f32
    %222 = arith.subf %cst_97, %221 : f32
    %223 = vector.broadcast %219 : f32 to vector<16x16xf32>
    %224 = arith.subf %8, %223 : vector<16x16xf32>
    %225 = arith.mulf %224, %224 : vector<16x16xf32>
    %226 = vector.broadcast %222 : f32 to vector<16x16xf32>
    %227 = arith.mulf %226, %225 : vector<16x16xf32>
    %228 = math.exp %227 : vector<16x16xf32>
    %229 = vector.broadcast %218 : f32 to vector<16x16xf32>
    %230 = arith.mulf %229, %228 : vector<16x16xf32>
    %231 = arith.addf %217, %230 : vector<16x16xf32>
    %c2_98 = arith.constant 2 : index
    %c2_99 = arith.constant 2 : index
    %232 = memref.load %arg6[%c2_98, %c2_99] : memref<4x5xf32, #tpu.memory_space<smem>>
    %c2_100 = arith.constant 2 : index
    %c2_101 = arith.constant 2 : index
    %233 = memref.load %arg7[%c2_100, %c2_101] : memref<4x5xf32, #tpu.memory_space<smem>>
    %c2_102 = arith.constant 2 : index
    %c2_103 = arith.constant 2 : index
    %234 = memref.load %arg8[%c2_102, %c2_103] : memref<4x5xf32, #tpu.memory_space<smem>>
    %235 = math.absf %234 : f32
    %cst_104 = arith.constant 0.000000e+00 : f32
    %236 = arith.subf %cst_104, %235 : f32
    %237 = vector.broadcast %233 : f32 to vector<16x16xf32>
    %238 = arith.subf %8, %237 : vector<16x16xf32>
    %239 = arith.mulf %238, %238 : vector<16x16xf32>
    %240 = vector.broadcast %236 : f32 to vector<16x16xf32>
    %241 = arith.mulf %240, %239 : vector<16x16xf32>
    %242 = math.exp %241 : vector<16x16xf32>
    %243 = vector.broadcast %232 : f32 to vector<16x16xf32>
    %244 = arith.mulf %243, %242 : vector<16x16xf32>
    %245 = arith.addf %231, %244 : vector<16x16xf32>
    %c2_105 = arith.constant 2 : index
    %c3_106 = arith.constant 3 : index
    %246 = memref.load %arg6[%c2_105, %c3_106] : memref<4x5xf32, #tpu.memory_space<smem>>
    %c2_107 = arith.constant 2 : index
    %c3_108 = arith.constant 3 : index
    %247 = memref.load %arg7[%c2_107, %c3_108] : memref<4x5xf32, #tpu.memory_space<smem>>
    %c2_109 = arith.constant 2 : index
    %c3_110 = arith.constant 3 : index
    %248 = memref.load %arg8[%c2_109, %c3_110] : memref<4x5xf32, #tpu.memory_space<smem>>
    %249 = math.absf %248 : f32
    %cst_111 = arith.constant 0.000000e+00 : f32
    %250 = arith.subf %cst_111, %249 : f32
    %251 = vector.broadcast %247 : f32 to vector<16x16xf32>
    %252 = arith.subf %8, %251 : vector<16x16xf32>
    %253 = arith.mulf %252, %252 : vector<16x16xf32>
    %254 = vector.broadcast %250 : f32 to vector<16x16xf32>
    %255 = arith.mulf %254, %253 : vector<16x16xf32>
    %256 = math.exp %255 : vector<16x16xf32>
    %257 = vector.broadcast %246 : f32 to vector<16x16xf32>
    %258 = arith.mulf %257, %256 : vector<16x16xf32>
    %259 = arith.addf %245, %258 : vector<16x16xf32>
    %c2_112 = arith.constant 2 : index
    %c4_113 = arith.constant 4 : index
    %260 = memref.load %arg6[%c2_112, %c4_113] : memref<4x5xf32, #tpu.memory_space<smem>>
    %c2_114 = arith.constant 2 : index
    %c4_115 = arith.constant 4 : index
    %261 = memref.load %arg7[%c2_114, %c4_115] : memref<4x5xf32, #tpu.memory_space<smem>>
    %c2_116 = arith.constant 2 : index
    %c4_117 = arith.constant 4 : index
    %262 = memref.load %arg8[%c2_116, %c4_117] : memref<4x5xf32, #tpu.memory_space<smem>>
    %263 = math.absf %262 : f32
    %cst_118 = arith.constant 0.000000e+00 : f32
    %264 = arith.subf %cst_118, %263 : f32
    %265 = vector.broadcast %261 : f32 to vector<16x16xf32>
    %266 = arith.subf %8, %265 : vector<16x16xf32>
    %267 = arith.mulf %266, %266 : vector<16x16xf32>
    %268 = vector.broadcast %264 : f32 to vector<16x16xf32>
    %269 = arith.mulf %268, %267 : vector<16x16xf32>
    %270 = math.exp %269 : vector<16x16xf32>
    %271 = vector.broadcast %260 : f32 to vector<16x16xf32>
    %272 = arith.mulf %271, %270 : vector<16x16xf32>
    %273 = arith.addf %259, %272 : vector<16x16xf32>
    %cst_119 = arith.constant dense<0.000000e+00> : vector<16x16xf32>
    %274 = tpu.matmul %202, %196, %cst_119 {dimension_numbers = #tpu.dot_dimension_numbers<[1], [1], [0], [0], [0, 0, 1, 0], [], []>} : vector<16x8xbf16>, vector<16x8xbf16>, vector<16x16xf32> -> vector<16x16xf32>
    %275 = arith.addf %274, %273 : vector<16x16xf32>
    %cst_120 = arith.constant dense<0xFF800000> : vector<16xf32>
    %276 = vector.multi_reduction <maximumf>, %275, %cst_120 [1] : vector<16x16xf32> to vector<16xf32>
    %277 = vector.shape_cast %276 : vector<16xf32> to vector<16x1xf32>
    %278 = vector.broadcast %277 : vector<16x1xf32> to vector<16x16xf32>
    %279 = arith.subf %275, %278 : vector<16x16xf32>
    %280 = math.exp %279 : vector<16x16xf32>
    %cst_121 = arith.constant dense<0.000000e+00> : vector<16xf32>
    %281 = vector.multi_reduction <add>, %280, %cst_121 [1] : vector<16x16xf32> to vector<16xf32>
    %282 = vector.shape_cast %281 : vector<16xf32> to vector<16x1xf32>
    %283 = tpu.reciprocal %282 {approx = true} : vector<16x1xf32> -> vector<16x1xf32>
    %284 = vector.broadcast %283 : vector<16x1xf32> to vector<16x16xf32>
    %285 = arith.mulf %280, %284 : vector<16x16xf32>
    %286 = arith.truncf %285 : vector<16x16xf32> to vector<16x16xbf16>
    %cst_122 = arith.constant dense<0.000000e+00> : vector<16x8xf32>
    %287 = tpu.matmul %286, %198, %cst_122 {dimension_numbers = #tpu.dot_dimension_numbers<[1], [0], [0], [1], [0, 0, 1, 1], [], []>} : vector<16x16xbf16>, vector<16x8xbf16>, vector<16x8xf32> -> vector<16x8xf32>
    %288 = vector.extract_strided_slice %4 {offsets = [0, 24], sizes = [16, 8], strides = [1, 1]} : vector<16x96xf32> to vector<16x8xf32>
    %289 = arith.truncf %288 : vector<16x8xf32> to vector<16x8xbf16>
    %290 = vector.extract_strided_slice %4 {offsets = [0, 56], sizes = [16, 8], strides = [1, 1]} : vector<16x96xf32> to vector<16x8xf32>
    %291 = arith.truncf %290 : vector<16x8xf32> to vector<16x8xbf16>
    %292 = vector.extract_strided_slice %4 {offsets = [0, 88], sizes = [16, 8], strides = [1, 1]} : vector<16x96xf32> to vector<16x8xf32>
    %cst_123 = arith.constant 0.353553385 : f32
    %293 = vector.broadcast %cst_123 : f32 to vector<16x8xf32>
    %294 = arith.mulf %292, %293 : vector<16x8xf32>
    %295 = arith.truncf %294 : vector<16x8xf32> to vector<16x8xbf16>
    %cst_124 = arith.constant 0.000000e+00 : f32
    %296 = vector.broadcast %cst_124 : f32 to vector<16x16xf32>
    %c3_125 = arith.constant 3 : index
    %c0_126 = arith.constant 0 : index
    %297 = memref.load %arg6[%c3_125, %c0_126] : memref<4x5xf32, #tpu.memory_space<smem>>
    %c3_127 = arith.constant 3 : index
    %c0_128 = arith.constant 0 : index
    %298 = memref.load %arg7[%c3_127, %c0_128] : memref<4x5xf32, #tpu.memory_space<smem>>
    %c3_129 = arith.constant 3 : index
    %c0_130 = arith.constant 0 : index
    %299 = memref.load %arg8[%c3_129, %c0_130] : memref<4x5xf32, #tpu.memory_space<smem>>
    %300 = math.absf %299 : f32
    %cst_131 = arith.constant 0.000000e+00 : f32
    %301 = arith.subf %cst_131, %300 : f32
    %302 = vector.broadcast %298 : f32 to vector<16x16xf32>
    %303 = arith.subf %8, %302 : vector<16x16xf32>
    %304 = arith.mulf %303, %303 : vector<16x16xf32>
    %305 = vector.broadcast %301 : f32 to vector<16x16xf32>
    %306 = arith.mulf %305, %304 : vector<16x16xf32>
    %307 = math.exp %306 : vector<16x16xf32>
    %308 = vector.broadcast %297 : f32 to vector<16x16xf32>
    %309 = arith.mulf %308, %307 : vector<16x16xf32>
    %310 = arith.addf %296, %309 : vector<16x16xf32>
    %c3_132 = arith.constant 3 : index
    %c1_133 = arith.constant 1 : index
    %311 = memref.load %arg6[%c3_132, %c1_133] : memref<4x5xf32, #tpu.memory_space<smem>>
    %c3_134 = arith.constant 3 : index
    %c1_135 = arith.constant 1 : index
    %312 = memref.load %arg7[%c3_134, %c1_135] : memref<4x5xf32, #tpu.memory_space<smem>>
    %c3_136 = arith.constant 3 : index
    %c1_137 = arith.constant 1 : index
    %313 = memref.load %arg8[%c3_136, %c1_137] : memref<4x5xf32, #tpu.memory_space<smem>>
    %314 = math.absf %313 : f32
    %cst_138 = arith.constant 0.000000e+00 : f32
    %315 = arith.subf %cst_138, %314 : f32
    %316 = vector.broadcast %312 : f32 to vector<16x16xf32>
    %317 = arith.subf %8, %316 : vector<16x16xf32>
    %318 = arith.mulf %317, %317 : vector<16x16xf32>
    %319 = vector.broadcast %315 : f32 to vector<16x16xf32>
    %320 = arith.mulf %319, %318 : vector<16x16xf32>
    %321 = math.exp %320 : vector<16x16xf32>
    %322 = vector.broadcast %311 : f32 to vector<16x16xf32>
    %323 = arith.mulf %322, %321 : vector<16x16xf32>
    %324 = arith.addf %310, %323 : vector<16x16xf32>
    %c3_139 = arith.constant 3 : index
    %c2_140 = arith.constant 2 : index
    %325 = memref.load %arg6[%c3_139, %c2_140] : memref<4x5xf32, #tpu.memory_space<smem>>
    %c3_141 = arith.constant 3 : index
    %c2_142 = arith.constant 2 : index
    %326 = memref.load %arg7[%c3_141, %c2_142] : memref<4x5xf32, #tpu.memory_space<smem>>
    %c3_143 = arith.constant 3 : index
    %c2_144 = arith.constant 2 : index
    %327 = memref.load %arg8[%c3_143, %c2_144] : memref<4x5xf32, #tpu.memory_space<smem>>
    %328 = math.absf %327 : f32
    %cst_145 = arith.constant 0.000000e+00 : f32
    %329 = arith.subf %cst_145, %328 : f32
    %330 = vector.broadcast %326 : f32 to vector<16x16xf32>
    %331 = arith.subf %8, %330 : vector<16x16xf32>
    %332 = arith.mulf %331, %331 : vector<16x16xf32>
    %333 = vector.broadcast %329 : f32 to vector<16x16xf32>
    %334 = arith.mulf %333, %332 : vector<16x16xf32>
    %335 = math.exp %334 : vector<16x16xf32>
    %336 = vector.broadcast %325 : f32 to vector<16x16xf32>
    %337 = arith.mulf %336, %335 : vector<16x16xf32>
    %338 = arith.addf %324, %337 : vector<16x16xf32>
    %c3_146 = arith.constant 3 : index
    %c3_147 = arith.constant 3 : index
    %339 = memref.load %arg6[%c3_146, %c3_147] : memref<4x5xf32, #tpu.memory_space<smem>>
    %c3_148 = arith.constant 3 : index
    %c3_149 = arith.constant 3 : index
    %340 = memref.load %arg7[%c3_148, %c3_149] : memref<4x5xf32, #tpu.memory_space<smem>>
    %c3_150 = arith.constant 3 : index
    %c3_151 = arith.constant 3 : index
    %341 = memref.load %arg8[%c3_150, %c3_151] : memref<4x5xf32, #tpu.memory_space<smem>>
    %342 = math.absf %341 : f32
    %cst_152 = arith.constant 0.000000e+00 : f32
    %343 = arith.subf %cst_152, %342 : f32
    %344 = vector.broadcast %340 : f32 to vector<16x16xf32>
    %345 = arith.subf %8, %344 : vector<16x16xf32>
    %346 = arith.mulf %345, %345 : vector<16x16xf32>
    %347 = vector.broadcast %343 : f32 to vector<16x16xf32>
    %348 = arith.mulf %347, %346 : vector<16x16xf32>
    %349 = math.exp %348 : vector<16x16xf32>
    %350 = vector.broadcast %339 : f32 to vector<16x16xf32>
    %351 = arith.mulf %350, %349 : vector<16x16xf32>
    %352 = arith.addf %338, %351 : vector<16x16xf32>
    %c3_153 = arith.constant 3 : index
    %c4_154 = arith.constant 4 : index
    %353 = memref.load %arg6[%c3_153, %c4_154] : memref<4x5xf32, #tpu.memory_space<smem>>
    %c3_155 = arith.constant 3 : index
    %c4_156 = arith.constant 4 : index
    %354 = memref.load %arg7[%c3_155, %c4_156] : memref<4x5xf32, #tpu.memory_space<smem>>
    %c3_157 = arith.constant 3 : index
    %c4_158 = arith.constant 4 : index
    %355 = memref.load %arg8[%c3_157, %c4_158] : memref<4x5xf32, #tpu.memory_space<smem>>
    %356 = math.absf %355 : f32
    %cst_159 = arith.constant 0.000000e+00 : f32
    %357 = arith.subf %cst_159, %356 : f32
    %358 = vector.broadcast %354 : f32 to vector<16x16xf32>
    %359 = arith.subf %8, %358 : vector<16x16xf32>
    %360 = arith.mulf %359, %359 : vector<16x16xf32>
    %361 = vector.broadcast %357 : f32 to vector<16x16xf32>
    %362 = arith.mulf %361, %360 : vector<16x16xf32>
    %363 = math.exp %362 : vector<16x16xf32>
    %364 = vector.broadcast %353 : f32 to vector<16x16xf32>
    %365 = arith.mulf %364, %363 : vector<16x16xf32>
    %366 = arith.addf %352, %365 : vector<16x16xf32>
    %cst_160 = arith.constant dense<0.000000e+00> : vector<16x16xf32>
    %367 = tpu.matmul %295, %289, %cst_160 {dimension_numbers = #tpu.dot_dimension_numbers<[1], [1], [0], [0], [0, 0, 1, 0], [], []>} : vector<16x8xbf16>, vector<16x8xbf16>, vector<16x16xf32> -> vector<16x16xf32>
    %368 = arith.addf %367, %366 : vector<16x16xf32>
    %cst_161 = arith.constant dense<0xFF800000> : vector<16xf32>
    %369 = vector.multi_reduction <maximumf>, %368, %cst_161 [1] : vector<16x16xf32> to vector<16xf32>
    %370 = vector.shape_cast %369 : vector<16xf32> to vector<16x1xf32>
    %371 = vector.broadcast %370 : vector<16x1xf32> to vector<16x16xf32>
    %372 = arith.subf %368, %371 : vector<16x16xf32>
    %373 = math.exp %372 : vector<16x16xf32>
    %cst_162 = arith.constant dense<0.000000e+00> : vector<16xf32>
    %374 = vector.multi_reduction <add>, %373, %cst_162 [1] : vector<16x16xf32> to vector<16xf32>
    %375 = vector.shape_cast %374 : vector<16xf32> to vector<16x1xf32>
    %376 = tpu.reciprocal %375 {approx = true} : vector<16x1xf32> -> vector<16x1xf32>
    %377 = vector.broadcast %376 : vector<16x1xf32> to vector<16x16xf32>
    %378 = arith.mulf %373, %377 : vector<16x16xf32>
    %379 = arith.truncf %378 : vector<16x16xf32> to vector<16x16xbf16>
    %cst_163 = arith.constant dense<0.000000e+00> : vector<16x8xf32>
    %380 = tpu.matmul %379, %291, %cst_163 {dimension_numbers = #tpu.dot_dimension_numbers<[1], [0], [0], [1], [0, 0, 1, 1], [], []>} : vector<16x16xbf16>, vector<16x8xbf16>, vector<16x8xf32> -> vector<16x8xf32>
    %381 = tpu.concatenate %101, %194, %287, %380 in 1 : vector<16x8xf32>, vector<16x8xf32>, vector<16x8xf32>, vector<16x8xf32> -> vector<16x32xf32>
    %382 = arith.truncf %381 : vector<16x32xf32> to vector<16x32xbf16>
    %c0_164 = arith.constant 0 : index
    %c0_165 = arith.constant 0 : index
    %383 = vector.load %arg3[%c0_164, %c0_165] : memref<32x64xbf16, #tpu.memory_space<vmem>>, vector<32x64xbf16>
    %cst_166 = arith.constant dense<0.000000e+00> : vector<16x64xf32>
    %384 = tpu.matmul %382, %383, %cst_166 {dimension_numbers = #tpu.dot_dimension_numbers<[1], [0], [0], [1], [0, 0, 1, 1], [], []>} : vector<16x32xbf16>, vector<32x64xbf16>, vector<16x64xf32> -> vector<16x64xf32>
    %c0_167 = arith.constant 0 : index
    %c0_168 = arith.constant 0 : index
    %385 = vector.load %arg4[%c0_167, %c0_168] : memref<1x64xf32, #tpu.memory_space<vmem>>, vector<1x64xf32>
    %386 = vector.broadcast %385 : vector<1x64xf32> to vector<16x64xf32>
    %387 = arith.addf %384, %386 : vector<16x64xf32>
    %388 = vector.extract_strided_slice %387 {offsets = [0, 0], sizes = [16, 32], strides = [1, 1]} : vector<16x64xf32> to vector<16x32xf32>
    %389 = vector.extract_strided_slice %387 {offsets = [0, 32], sizes = [16, 32], strides = [1, 1]} : vector<16x64xf32> to vector<16x32xf32>
    %390 = arith.negf %389 : vector<16x32xf32>
    %391 = math.exp %390 : vector<16x32xf32>
    %cst_169 = arith.constant 1.000000e+00 : f32
    %392 = vector.broadcast %cst_169 : f32 to vector<16x32xf32>
    %393 = arith.addf %392, %391 : vector<16x32xf32>
    %394 = arith.divf %392, %393 : vector<16x32xf32>
    %395 = arith.mulf %388, %394 : vector<16x32xf32>
    %396 = arith.addf %395, %1 : vector<16x32xf32>
    %397 = arith.mulf %396, %396 : vector<16x32xf32>
    %cst_170 = arith.constant dense<0.000000e+00> : vector<16xf32>
    %398 = vector.multi_reduction <add>, %397, %cst_170 [1] : vector<16x32xf32> to vector<16xf32>
    %399 = vector.shape_cast %398 : vector<16xf32> to vector<16x1xf32>
    %cst_171 = arith.constant 3.200000e+01 : f32
    %400 = vector.broadcast %cst_171 : f32 to vector<16x1xf32>
    %401 = arith.divf %399, %400 : vector<16x1xf32>
    %c0_172 = arith.constant 0 : index
    %c0_173 = arith.constant 0 : index
    %402 = vector.load %arg5[%c0_172, %c0_173] : memref<1x32xf32, #tpu.memory_space<vmem>>, vector<1x32xf32>
    %cst_174 = arith.constant 9.99999997E-7 : f32
    %403 = vector.broadcast %cst_174 : f32 to vector<16x1xf32>
    %404 = arith.addf %401, %403 : vector<16x1xf32>
    %405 = math.rsqrt %404 : vector<16x1xf32>
    %406 = vector.broadcast %405 : vector<16x1xf32> to vector<16x32xf32>
    %407 = arith.mulf %396, %406 : vector<16x32xf32>
    %408 = vector.broadcast %402 : vector<1x32xf32> to vector<16x32xf32>
    %409 = arith.mulf %408, %407 : vector<16x32xf32>
    %c0_175 = arith.constant 0 : index
    %c0_176 = arith.constant 0 : index
    %c0_177 = arith.constant 0 : index
    %410 = vector.load %arg9[%c0_175, %c0_176, %c0_177] : memref<1x16x32xf32, #tpu.memory_space<vmem>>, vector<1x16x32xf32>
    %411 = vector.shape_cast %410 : vector<1x16x32xf32> to vector<16x32xf32>
    %412 = vector.shape_cast %409 : vector<16x32xf32> to vector<1x16x32xf32>
    tpu.vector_store %arg9[%c0_175, %c0_176, %c0_177], %412 {strides = array<i32>} : memref<1x16x32xf32, #tpu.memory_space<vmem>>, vector<1x16x32xf32>,
    return
  }
  func.func @transform_0(%arg0: i32) -> (i32, i32, i32) {
    %c0_i32 = arith.constant 0 : i32
    %c0_i32_0 = arith.constant 0 : i32
    %c0_i32_1 = arith.constant 0 : i32
    return %arg0, %c0_i32, %c0_i32_0 : i32, i32, i32
  }
  func.func @transform_1(%arg0: i32) -> (i32, i32) {
    %c0_i32 = arith.constant 0 : i32
    %c0_i32_0 = arith.constant 0 : i32
    %c0_i32_1 = arith.constant 0 : i32
    return %c0_i32, %c0_i32_0 : i32, i32
  }
  func.func @transform_2(%arg0: i32) -> (i32, i32) {
    %c0_i32 = arith.constant 0 : i32
    %c0_i32_0 = arith.constant 0 : i32
    %c0_i32_1 = arith.constant 0 : i32
    return %c0_i32, %c0_i32_0 : i32, i32
  }
  func.func @transform_3(%arg0: i32) -> (i32, i32) {
    %c0_i32 = arith.constant 0 : i32
    %c0_i32_0 = arith.constant 0 : i32
    %c0_i32_1 = arith.constant 0 : i32
    return %c0_i32, %c0_i32_0 : i32, i32
  }
  func.func @transform_4(%arg0: i32) -> (i32, i32) {
    %c0_i32 = arith.constant 0 : i32
    %c0_i32_0 = arith.constant 0 : i32
    %c0_i32_1 = arith.constant 0 : i32
    return %c0_i32, %c0_i32_0 : i32, i32
  }
  func.func @transform_5(%arg0: i32) -> (i32, i32) {
    %c0_i32 = arith.constant 0 : i32
    %c0_i32_0 = arith.constant 0 : i32
    %c0_i32_1 = arith.constant 0 : i32
    return %c0_i32, %c0_i32_0 : i32, i32
  }
  func.func @transform_6(%arg0: i32) -> (i32, i32) {
    %c0_i32 = arith.constant 0 : i32
    %c0_i32_0 = arith.constant 0 : i32
    %c0_i32_1 = arith.constant 0 : i32
    return %c0_i32, %c0_i32_0 : i32, i32
  }
  func.func @transform_7(%arg0: i32) -> (i32, i32) {
    %c0_i32 = arith.constant 0 : i32
    %c0_i32_0 = arith.constant 0 : i32
    %c0_i32_1 = arith.constant 0 : i32
    return %c0_i32, %c0_i32_0 : i32, i32
  }
  func.func @transform_8(%arg0: i32) -> (i32, i32, i32) {
    %c0_i32 = arith.constant 0 : i32
    %c0_i32_0 = arith.constant 0 : i32
    %c0_i32_1 = arith.constant 0 : i32
    return %arg0, %c0_i32, %c0_i32_0 : i32, i32, i32
  }
}

</mosaic_0001>

<llo_original>
// kernel: attn_block_forward.3
$region0: #{attn_block_forward.3}
  #allocation0 [shape = 'u32[]', space=smem, size = 0x4, offset = 0x4, fixed_abs, tag = 'smem constant byte address 0x4 - core index']
  #allocation1 [shape = 'u32[144,128]{1,0:T(1,128)}', space=vmem, size = 0x12000, scoped, tag = 'internal scratch']
  %s0 = inlined_call_operand.vmem [shape: f32[2,16,32], index: 0, kind: input, shape index: {}]
  %s1 = inlined_call_operand.vmem [shape: bf16[3,32,64], index: 1, kind: input, shape index: {}]
  %s2 = inlined_call_operand.vmem [shape: bf16[3,64,32], index: 2, kind: input, shape index: {}]
  %s3 = inlined_call_operand.vmem [shape: f32[1,32], index: 3, kind: input, shape index: {}]
  %s4 = inlined_call_operand.hbm [shape: f32[2,16,32], index: 4, kind: output, shape index: {}]
  %s5 = sld [smem:[#allocation0]]
  $region49: #{attn_block_forward.3} parent=0
    _
  %s7 = ssub.s32 1, %s5
  %s8 = scalar_select 0, %s7, %s5
  $region1: #{attn_block_forward.3} parent=0
    #allocation2 [shape = 'u8[16384]{0}', space=vmem, size = 0x4000, scoped, tag = 'output window, operand 0']
    #allocation3 [shape = 's32[2]{0}', space=sflag, size = 0x8, scoped, tag = 'scoped memory for attn_block_forward.3']
    %9 = vsyncpa [#allocation3], 0
    %s10 = scalar_lea.sflag [#allocation3], 1
    %11 = vsyncpa %s10, 0
    loop: start=0, step=1, limit=4
    $region2: #{attn_block_forward.3} parent=1 // loop_pre_header
      _
    $region3: #{attn_block_forward.3} parent=1 // loop_header
      %s13 = sphi 0, %s17
      %p14 = scmp.ge.s32.totalorder %s13, 4
      %s23 = sphi 0, %s25
      %s26 = sphi 0, %s23
      %s27 = sphi 0, %s26
      %s43 = sphi 0, %s27
      %s47 = sphi 0, %s47
      %s49 = sphi 0, %s47
      %s50 = sphi 0, %s49
      %s64 = sphi 0, %s50
      %s68 = sphi 0, %s68
      %s70 = sphi 0, %s68
      %s71 = sphi 0, %s70
      %s85 = sphi 0, %s71
      %s89 = sphi 0, %s89
      %s91 = sphi 0, %s89
      %s92 = sphi 0, %s91
      %s106 = sphi 0, %s92
      %s112 = sphi 0, %s114
      %s115 = sphi 0, %s112
      %s116 = sphi 0, %s115
      %s132 = sphi 0, %s116
    $region4: #{attn_block_forward.3} parent=1 // loop_header_branch
      %16 = sbr.rel (%p14) target = $region8
    $region5: #{attn_block_forward.3} parent=1 // loop_body
      %s18 = ssub.s32 %s13, 1
      %s19 = ssub.s32 %s13, 2
      %s20 = sadd.s32 %s13, 1
      %s21 = ssub.s32 %s13, %s20
      %p22 = scmp.eq.s32.totalorder %s21, 0
      %s24 = sadd.s32 %s23, 1
      %s25 = scalar_select %p22, %s23, %s24
      %p28 = pneg %p22
      %p29 = scmp.eq.s32.totalorder %s13, 1
      %p30 = por %p28, %p29
      %p31 = scmp.ne.s32.totalorder %s23, %s26
      %p32 = scmp.eq.s32.totalorder %s13, 0
      %p33 = por %p31, %p32
      %p34 = scmp.ne.s32.totalorder %s23, %s26
      %p35 = scmp.eq.s32.totalorder %s18, 1
      %p36 = por %p34, %p35
      %p37 = scmp.ne.s32.totalorder %s26, %s27
      %p38 = scmp.eq.s32.totalorder %s18, 0
      %p39 = por %p37, %p38
      %p40 = scmp.ne.s32.totalorder %s26, %s27
      %p41 = scmp.eq.s32.totalorder %s19, 1
      %p42 = por %p40, %p41
      %p44 = scmp.ne.s32.totalorder %s27, %s43
      %p45 = scmp.eq.s32.totalorder %s19, 0
      %p46 = por %p44, %p45
      %s48 = sadd.s32 %s47, 1
      %p51 = scmp.eq.s32.totalorder %s13, 1
      %p52 = scmp.ne.s32.totalorder %s47, %s49
      %p53 = scmp.eq.s32.totalorder %s13, 0
      %p54 = por %p52, %p53
      %p55 = scmp.ne.s32.totalorder %s47, %s49
      %p56 = scmp.eq.s32.totalorder %s18, 1
      %p57 = por %p55, %p56
      %p58 = scmp.ne.s32.totalorder %s49, %s50
      %p59 = scmp.eq.s32.totalorder %s18, 0
      %p60 = por %p58, %p59
      %p61 = scmp.ne.s32.totalorder %s49, %s50
      %p62 = scmp.eq.s32.totalorder %s19, 1
      %p63 = por %p61, %p62
      %p65 = scmp.ne.s32.totalorder %s50, %s64
      %p66 = scmp.eq.s32.totalorder %s19, 0
      %p67 = por %p65, %p66
      %s69 = sadd.s32 %s68, 1
      %p72 = scmp.eq.s32.totalorder %s13, 1
      %p73 = scmp.ne.s32.totalorder %s68, %s70
      %p74 = scmp.eq.s32.totalorder %s13, 0
      %p75 = por %p73, %p74
      %p76 = scmp.ne.s32.totalorder %s68, %s70
      %p77 = scmp.eq.s32.totalorder %s18, 1
      %p78 = por %p76, %p77
      %p79 = scmp.ne.s32.totalorder %s70, %s71
      %p80 = scmp.eq.s32.totalorder %s18, 0
      %p81 = por %p79, %p80
      %p82 = scmp.ne.s32.totalorder %s70, %s71
      %p83 = scmp.eq.s32.totalorder %s19, 1
      %p84 = por %p82, %p83
      %p86 = scmp.ne.s32.totalorder %s71, %s85
      %p87 = scmp.eq.s32.totalorder %s19, 0
      %p88 = por %p86, %p87
      %s90 = sadd.s32 %s89, 1
      %p93 = scmp.eq.s32.totalorder %s13, 1
      %p94 = scmp.ne.s32.totalorder %s89, %s91
      %p95 = scmp.eq.s32.totalorder %s13, 0
      %p96 = por %p94, %p95
      %p97 = scmp.ne.s32.totalorder %s89, %s91
      %p98 = scmp.eq.s32.totalorder %s18, 1
      %p99 = por %p97, %p98
      %p100 = scmp.ne.s32.totalorder %s91, %s92
      %p101 = scmp.eq.s32.totalorder %s18, 0
      %p102 = por %p100, %p101
      %p103 = scmp.ne.s32.totalorder %s91, %s92
      %p104 = scmp.eq.s32.totalorder %s19, 1
      %p105 = por %p103, %p104
      %p107 = scmp.ne.s32.totalorder %s92, %s106
      %p108 = scmp.eq.s32.totalorder %s19, 0
      %p109 = por %p107, %p108
      %s110 = ssub.s32 %s13, %s20
      %p111 = scmp.eq.s32.totalorder %s110, 0
      %s113 = sadd.s32 %s112, 1
      %s114 = scalar_select %p111, %s112, %s113
      %p117 = pneg %p111
      %p118 = scmp.eq.s32.totalorder %s13, 1
      %p119 = por %p117, %p118
      %p120 = scmp.ne.s32.totalorder %s112, %s115
      %p121 = scmp.eq.s32.totalorder %s13, 0
      %p122 = por %p120, %p121
      %p123 = scmp.ne.s32.totalorder %s112, %s115
      %p124 = scmp.eq.s32.totalorder %s18, 1
      %p125 = por %p123, %p124
      %p126 = scmp.ne.s32.totalorder %s115, %s116
      %p127 = scmp.eq.s32.totalorder %s18, 0
      %p128 = por %p126, %p127
      %p129 = scmp.ne.s32.totalorder %s115, %s116
      %p130 = scmp.eq.s32.totalorder %s19, 1
      %p131 = por %p129, %p130
      %p133 = scmp.ne.s32.totalorder %s116, %s132
      %p134 = scmp.eq.s32.totalorder %s19, 0
      %p135 = por %p133, %p134
      %p136 = scmp.le.s32.totalorder 1, %s13
      %p137 = scmp.lt.s32.totalorder %s13, 3
      %p138 = pnand %p136, %p137
      %p139 = pneg %p138
      // Predicated region
      $region9: #{attn_block_forward.3} parent=5 // pred_check
        _
      $region10: #{attn_block_forward.3} parent=5 // pred_check_branch
        %141 = sbr.rel (%p138) target = $region12
      $region11: #{attn_block_forward.3} parent=5 // pred_region
        %s142 = ssub.s32 %s13, 1
        // Predicated region
        $region13: #{attn_block_forward.3} parent=11 // pred_check
          %p143 = pneg %p60
        $region14: #{attn_block_forward.3} parent=11 // pred_check_branch
          %145 = sbr.rel (%p143) target = $region16
        $region15: #{attn_block_forward.3} parent=11 // pred_region
          _
        $region16: #{attn_block_forward.3} parent=11 // pred_fallthru
          _
        // Predicated region
        $region17: #{attn_block_forward.3} parent=11 // pred_check
          %p146 = pneg %p81
        $region18: #{attn_block_forward.3} parent=11 // pred_check_branch
          %148 = sbr.rel (%p146) target = $region20
        $region19: #{attn_block_forward.3} parent=11 // pred_region
          _
        $region20: #{attn_block_forward.3} parent=11 // pred_fallthru
          _
        // Predicated region
        $region21: #{attn_block_forward.3} parent=11 // pred_check
          %p149 = pneg %p102
        $region22: #{attn_block_forward.3} parent=11 // pred_check_branch
          %151 = sbr.rel (%p149) target = $region24
        $region23: #{attn_block_forward.3} parent=11 // pred_region
          _
        $region24: #{attn_block_forward.3} parent=11 // pred_fallthru
          _
      $region12: #{attn_block_forward.3} parent=5 // pred_fallthru
        _
      %p152 = scmp.lt.s32.totalorder %s13, 2
      // Predicated region
      $region25: #{attn_block_forward.3} parent=5 // pred_check
        %p153 = pneg %p152
      $region26: #{attn_block_forward.3} parent=5 // pred_check_branch
        %155 = sbr.rel (%p153) target = $region28
      $region27: #{attn_block_forward.3} parent=5 // pred_region
        // Predicated region
        $region29: #{attn_block_forward.3} parent=27 // pred_check
          %p156 = pneg %p33
        $region30: #{attn_block_forward.3} parent=27 // pred_check_branch
          %158 = sbr.rel (%p156) target = $region32
        $region31: #{attn_block_forward.3} parent=27 // pred_region
          %p159 = scmp.lt.s32.totalorder %s13, 1
          %s160 = scalar_select %p159, %s13, 1
          %s161 = smul.addr %s160, 2
          %s162 = smul.addr %s161, 8
          %s163 = scalar_lea.vmem %s0, %s162
        $region32: #{attn_block_forward.3} parent=27 // pred_fallthru
          _
      $region28: #{attn_block_forward.3} parent=5 // pred_fallthru
        _
      %p164 = scmp.le.s32.totalorder 1, %s13
      %p165 = scmp.lt.s32.totalorder %s13, 3
      %p166 = pnand %p164, %p165
      %p167 = pneg %p166
      // Predicated region
      $region33: #{attn_block_forward.3} parent=5 // pred_check
        _
      $region34: #{attn_block_forward.3} parent=5 // pred_check_branch
        %169 = sbr.rel (%p166) target = $region36
      $region35: #{attn_block_forward.3} parent=5 // pred_region
        %s170 = ssub.s32 %s13, 1
        %p171 = scmp.lt.s32.totalorder %s18, 1
        %s172 = scalar_select %p171, %s18, 1
        %s173 = smul.addr %s172, 2
        %s174 = smul.addr %s173, 8
        %s175 = scalar_lea.vmem %s0, %s174
        %p176 = pneg %p39
        %p177 = pneg %p36
        %p178 = pneg %p60
        %p179 = pneg %p57
        %p180 = pneg %p81
        %p181 = pneg %p78
        %p182 = pneg %p102
        %p183 = pneg %p99
        %p184 = pneg %p128
        %p185 = pneg %p125
        %s186 = sand.u32 %s115, 1
        %s187 = scalar_lea.sflag [#allocation3], %s186
        %s188 = sand.u32 %s115, 1
        %s189 = smul.addr %s188, 16
        %s190 = scalar_lea.vmem [#allocation2], %s189
        %p191 = scmp.lt.s32.totalorder %s18, 1
        %s192 = scalar_select %p191, %s18, 1
        %s193 = smul.addr %s192, 2
        %s194 = smul.addr %s193, 8
        %s195 = scalar_lea.vmem %s0, %s194
        %v197 = vld [vmem:[%s195] sm:$0xff]
        %v198 = vld [vmem:[%s195 + $0x8] sm:$0xff]
        %vm201 = vcmask 1040384
        %v202 = vrot.slane %v197, 7
        %v203 = vrot.slane %v198, 7
        %v204 = vsel %vm201, %v202, %v203
        %v207 = vsel %vm201, 0.0, %v202
        %v208 = vld [vmem:[%s1] sm:$0xf]
        %v209 = vld [vmem:[%s1 + $0x4] sm:$0xf]
        %v210 = vld [vmem:[%s1 + $0x8] sm:$0xf]
        %v211 = vld [vmem:[%s1 + $0xc] sm:$0xf]
        %v212 = vpack.c.bf16 %v204, %v207
        %s213 = scalar_lea.vmem %s1, 16
        %v214 = vld [vmem:[%s213] sm:$0xf]
        %v215 = vld [vmem:[%s213 + $0x4] sm:$0xf]
        %v216 = vld [vmem:[%s213 + $0x8] sm:$0xf]
        %v217 = vld [vmem:[%s213 + $0xc] sm:$0xf]
        %v218 = vpack.c.bf16 %v198, %v197
        %v223 = vunpack.c.l.b16 %v214
        %v224 = vunpack.c.l.b16 %v215
        %v225 = vunpack.c.l.b16 %v216
        %v226 = vunpack.c.l.b16 %v217
        %v227 = vpack.c.b16 %v224, %v223
        %v228 = vpack.c.b16 %v226, %v225
        %vm231 = vcmask 261120
        %v233 = vsel %vm231, %v218, 0
        %235 = vmatprep.subr.bf16.mxu0 0
        %236 = vmatpush1.bf16.msra.mxu0 %v227
        %237 = vmatprep.subr.bf16.mxu0 0
        %238 = vmatpush1.bf16.msra.mxu0 %v228
        %239 = vmatprep.subr.bf16.mxu0 0
        %240 = vmatpush1.bf16.msra.mxu0 0
        %241 = vmatprep.subr.bf16.mxu0 0
        %242 = vmatpush1.bf16.msra.mxu0 0
        %243 = vmatprep.subr.bf16.mxu0 0
        %244 = vmatpush1.bf16.msra.mxu0 0
        %245 = vmatprep.subr.bf16.mxu0 0
        %246 = vmatpush1.bf16.msra.mxu0 0
        %247 = vmatprep.subr.bf16.mxu0 0
        %248 = vmatpush1.bf16.msra.mxu0 0
        %249 = vmatprep.subr.bf16.mxu0 0
        %250 = vmatpush1.bf16.msra.mxu0 0
        %251 = vmatprep.subr.bf16.mxu0 0
        %252 = vmatpush1.bf16.msra.mxu0 0
        %253 = vmatprep.subr.bf16.mxu0 0
        %254 = vmatpush1.bf16.msra.mxu0 0
        %255 = vmatprep.subr.bf16.mxu0 0
        %256 = vmatpush1.bf16.msra.mxu0 0
        %257 = vmatprep.subr.bf16.mxu0 0
        %258 = vmatpush1.bf16.msra.mxu0 0
        %259 = vmatprep.subr.bf16.mxu0 0
        %260 = vmatpush1.bf16.msra.mxu0 0
        %261 = vmatprep.subr.bf16.mxu0 0
        %262 = vmatpush1.bf16.msra.mxu0 0
        %263 = vmatprep.subr.bf16.mxu0 0
        %264 = vmatpush1.bf16.msra.mxu0 0
        %265 = vmatprep.subr.bf16.mxu0 0
        %266 = vmatpush1.bf16.msra.mxu0 0
        %267 = vmatprep.mubr.bf16.mxu0 0
        %268 = vmatmul.mubr.bf16.gmra.mrb[0].mxu0 %v233
        %v269 = vpop.f32.mrb[0].mxu0
        %v270 = vadd.f32 0.0, %v269
        %v271 = vpop.f32.mrb[0].mxu0
        %v272 = vpop.f32.mrb[0].mxu0
        %v273 = vadd.f32 0.0, %v272
        %v274 = vpop.f32.mrb[0].mxu0
        %275 = vdwg.mxu0
        %v280 = vunpack.c.l.b16 %v208
        %v281 = vunpack.c.l.b16 %v209
        %v282 = vunpack.c.l.b16 %v210
        %v283 = vunpack.c.l.b16 %v211
        %v284 = vpack.c.b16 %v281, %v280
        %v285 = vpack.c.b16 %v283, %v282
        %v289 = vsel %vm231, %v212, 0
        %291 = vmatprep.subr.bf16.mxu0 0
        %292 = vmatpush1.bf16.msra.mxu0 %v284
        %293 = vmatprep.subr.bf16.mxu0 0
        %294 = vmatpush1.bf16.msra.mxu0 %v285
        %295 = vmatprep.subr.bf16.mxu0 0
        %296 = vmatpush1.bf16.msra.mxu0 0
        %297 = vmatprep.subr.bf16.mxu0 0
        %298 = vmatpush1.bf16.msra.mxu0 0
        %299 = vmatprep.subr.bf16.mxu0 0
        %300 = vmatpush1.bf16.msra.mxu0 0
        %301 = vmatprep.subr.bf16.mxu0 0
        %302 = vmatpush1.bf16.msra.mxu0 0
        %303 = vmatprep.subr.bf16.mxu0 0
        %304 = vmatpush1.bf16.msra.mxu0 0
        %305 = vmatprep.subr.bf16.mxu0 0
        %306 = vmatpush1.bf16.msra.mxu0 0
        %307 = vmatprep.subr.bf16.mxu0 0
        %308 = vmatpush1.bf16.msra.mxu0 0
        %309 = vmatprep.subr.bf16.mxu0 0
        %310 = vmatpush1.bf16.msra.mxu0 0
        %311 = vmatprep.subr.bf16.mxu0 0
        %312 = vmatpush1.bf16.msra.mxu0 0
        %313 = vmatprep.subr.bf16.mxu0 0
        %314 = vmatpush1.bf16.msra.mxu0 0
        %315 = vmatprep.subr.bf16.mxu0 0
        %316 = vmatpush1.bf16.msra.mxu0 0
        %317 = vmatprep.subr.bf16.mxu0 0
        %318 = vmatpush1.bf16.msra.mxu0 0
        %319 = vmatprep.subr.bf16.mxu0 0
        %320 = vmatpush1.bf16.msra.mxu0 0
        %321 = vmatprep.subr.bf16.mxu0 0
        %322 = vmatpush1.bf16.msra.mxu0 0
        %323 = vmatprep.mubr.bf16.mxu0 0
        %324 = vmatmul.mubr.bf16.gmra.mrb[0].mxu0 %v289
        %v325 = vpop.f32.mrb[0].mxu0
        %v326 = vadd.f32 %v270, %v325
        %v327 = vpop.f32.mrb[0].mxu0
        %v328 = vpop.f32.mrb[0].mxu0
        %v329 = vadd.f32 %v273, %v328
        %v330 = vpop.f32.mrb[0].mxu0
        %331 = vdwg.mxu0
        %vm332 = vcmask 1046528
        %v333 = vrot.slane %v197, 1
        %v334 = vrot.slane %v198, 1
        %v335 = vsel %vm332, %v333, %v334
        %v338 = vsel %vm332, %v334, 0.0
        %s339 = scalar_lea.vmem %s1, 32
        %v340 = vld [vmem:[%s339] sm:$0xf]
        %v341 = vld [vmem:[%s339 + $0x4] sm:$0xf]
        %v342 = vld [vmem:[%s339 + $0x8] sm:$0xf]
        %v343 = vld [vmem:[%s339 + $0xc] sm:$0xf]
        %v344 = vpack.c.bf16 %v338, %v335
        %v349 = vunpack.c.l.b16 %v340
        %v350 = vunpack.c.l.b16 %v341
        %v351 = vunpack.c.l.b16 %v342
        %v352 = vunpack.c.l.b16 %v343
        %v353 = vpack.c.b16 %v350, %v349
        %v354 = vpack.c.b16 %v352, %v351
        %v358 = vsel %vm231, %v344, 0
        %360 = vmatprep.subr.bf16.mxu0 0
        %361 = vmatpush1.bf16.msra.mxu0 %v353
        %362 = vmatprep.subr.bf16.mxu0 0
        %363 = vmatpush1.bf16.msra.mxu0 %v354
        %364 = vmatprep.subr.bf16.mxu0 0
        %365 = vmatpush1.bf16.msra.mxu0 0
        %366 = vmatprep.subr.bf16.mxu0 0
        %367 = vmatpush1.bf16.msra.mxu0 0
        %368 = vmatprep.subr.bf16.mxu0 0
        %369 = vmatpush1.bf16.msra.mxu0 0
        %370 = vmatprep.subr.bf16.mxu0 0
        %371 = vmatpush1.bf16.msra.mxu0 0
        %372 = vmatprep.subr.bf16.mxu0 0
        %373 = vmatpush1.bf16.msra.mxu0 0
        %374 = vmatprep.subr.bf16.mxu0 0
        %375 = vmatpush1.bf16.msra.mxu0 0
        %376 = vmatprep.subr.bf16.mxu0 0
        %377 = vmatpush1.bf16.msra.mxu0 0
        %378 = vmatprep.subr.bf16.mxu0 0
        %379 = vmatpush1.bf16.msra.mxu0 0
        %380 = vmatprep.subr.bf16.mxu0 0
        %381 = vmatpush1.bf16.msra.mxu0 0
        %382 = vmatprep.subr.bf16.mxu0 0
        %383 = vmatpush1.bf16.msra.mxu0 0
        %384 = vmatprep.subr.bf16.mxu0 0
        %385 = vmatpush1.bf16.msra.mxu0 0
        %386 = vmatprep.subr.bf16.mxu0 0
        %387 = vmatpush1.bf16.msra.mxu0 0
        %388 = vmatprep.subr.bf16.mxu0 0
        %389 = vmatpush1.bf16.msra.mxu0 0
        %390 = vmatprep.subr.bf16.mxu0 0
        %391 = vmatpush1.bf16.msra.mxu0 0
        %392 = vmatprep.mubr.bf16.mxu0 0
        %393 = vmatmul.mubr.bf16.gmra.mrb[0].mxu0 %v358
        %v394 = vpop.f32.mrb[0].mxu0
        %v395 = vadd.f32 0.0, %v394
        %v396 = vpop.f32.mrb[0].mxu0
        %v397 = vpop.f32.mrb[0].mxu0
        %v398 = vadd.f32 0.0, %v397
        %v399 = vpop.f32.mrb[0].mxu0
        %400 = vdwg.mxu0
        %v401 = vadd.f32 %v326, %v395
        %v402 = vadd.f32 %v329, %v398
        %v403 = vmax.f32 %v401, 0.0
        %v404 = vmax.f32 %v402, 0.0
        %v407 = vrot.slane %v403, 7
        %v408 = vrot.slane %v404, 7
        %v409 = vsel %vm201, %v407, %v408
        %v412 = vsel %vm201, 0.0, %v407
        %v413 = vld [vmem:[%s2] sm:$0xf]
        %v414 = vld [vmem:[%s2 + $0x4] sm:$0xf]
        %v415 = vld [vmem:[%s2 + $0x8] sm:$0xf]
        %v416 = vld [vmem:[%s2 + $0xc] sm:$0xf]
        %v417 = vld [vmem:[%s2 + $0x10] sm:$0xf]
        %v418 = vld [vmem:[%s2 + $0x14] sm:$0xf]
        %v419 = vld [vmem:[%s2 + $0x18] sm:$0xf]
        %v420 = vld [vmem:[%s2 + $0x1c] sm:$0xf]
        %v421 = vpack.c.bf16 %v409, %v412
        %s422 = scalar_lea.vmem %s2, 32
        %v423 = vld [vmem:[%s422] sm:$0xf]
        %v424 = vld [vmem:[%s422 + $0x4] sm:$0xf]
        %v425 = vld [vmem:[%s422 + $0x8] sm:$0xf]
        %v426 = vld [vmem:[%s422 + $0xc] sm:$0xf]
        %v427 = vld [vmem:[%s422 + $0x10] sm:$0xf]
        %v428 = vld [vmem:[%s422 + $0x14] sm:$0xf]
        %v429 = vld [vmem:[%s422 + $0x18] sm:$0xf]
        %v430 = vld [vmem:[%s422 + $0x1c] sm:$0xf]
        %v431 = vpack.c.bf16 %v404, %v403
        %v440 = vunpack.c.l.b16 %v423
        %v441 = vunpack.c.l.b16 %v424
        %v442 = vunpack.c.l.b16 %v425
        %v443 = vunpack.c.l.b16 %v426
        %v444 = vunpack.c.l.b16 %v427
        %v445 = vunpack.c.l.b16 %v428
        %v446 = vunpack.c.l.b16 %v429
        %v447 = vunpack.c.l.b16 %v430
        %v448 = vpack.c.b16 %v441, %v440
        %v449 = vpack.c.b16 %v443, %v442
        %v450 = vpack.c.b16 %v445, %v444
        %v451 = vpack.c.b16 %v447, %v446
        %vm456 = vcmask 523264
        %v458 = vsel %vm456, %v431, 0
        %460 = vmatprep.subr.bf16.mxu0 0
        %461 = vmatpush1.bf16.msra.mxu0 %v448
        %462 = vmatprep.subr.bf16.mxu0 0
        %463 = vmatpush1.bf16.msra.mxu0 %v449
        %464 = vmatprep.subr.bf16.mxu0 0
        %465 = vmatpush1.bf16.msra.mxu0 %v450
        %466 = vmatprep.subr.bf16.mxu0 0
        %467 = vmatpush1.bf16.msra.mxu0 %v451
        %468 = vmatprep.subr.bf16.mxu0 0
        %469 = vmatpush1.bf16.msra.mxu0 0
        %470 = vmatprep.subr.bf16.mxu0 0
        %471 = vmatpush1.bf16.msra.mxu0 0
        %472 = vmatprep.subr.bf16.mxu0 0
        %473 = vmatpush1.bf16.msra.mxu0 0
        %474 = vmatprep.subr.bf16.mxu0 0
        %475 = vmatpush1.bf16.msra.mxu0 0
        %476 = vmatprep.subr.bf16.mxu0 0
        %477 = vmatpush1.bf16.msra.mxu0 0
        %478 = vmatprep.subr.bf16.mxu0 0
        %479 = vmatpush1.bf16.msra.mxu0 0
        %480 = vmatprep.subr.bf16.mxu0 0
        %481 = vmatpush1.bf16.msra.mxu0 0
        %482 = vmatprep.subr.bf16.mxu0 0
        %483 = vmatpush1.bf16.msra.mxu0 0
        %484 = vmatprep.subr.bf16.mxu0 0
        %485 = vmatpush1.bf16.msra.mxu0 0
        %486 = vmatprep.subr.bf16.mxu0 0
        %487 = vmatpush1.bf16.msra.mxu0 0
        %488 = vmatprep.subr.bf16.mxu0 0
        %489 = vmatpush1.bf16.msra.mxu0 0
        %490 = vmatprep.subr.bf16.mxu0 0
        %491 = vmatpush1.bf16.msra.mxu0 0
        %492 = vmatprep.mubr.bf16.mxu0 0
        %493 = vmatmul.mubr.bf16.gmra.mrb[0].mxu0 %v458
        %v494 = vpop.f32.mrb[0].mxu0
        %v495 = vadd.f32 0.0, %v494
        %v496 = vpop.f32.mrb[0].mxu0
        %v497 = vpop.f32.mrb[0].mxu0
        %v498 = vadd.f32 0.0, %v497
        %v499 = vpop.f32.mrb[0].mxu0
        %500 = vdwg.mxu0
        %v509 = vunpack.c.l.b16 %v413
        %v510 = vunpack.c.l.b16 %v414
        %v511 = vunpack.c.l.b16 %v415
        %v512 = vunpack.c.l.b16 %v416
        %v513 = vunpack.c.l.b16 %v417
        %v514 = vunpack.c.l.b16 %v418
        %v515 = vunpack.c.l.b16 %v419
        %v516 = vunpack.c.l.b16 %v420
        %v517 = vpack.c.b16 %v510, %v509
        %v518 = vpack.c.b16 %v512, %v511
        %v519 = vpack.c.b16 %v514, %v513
        %v520 = vpack.c.b16 %v516, %v515
        %v526 = vsel %vm456, %v421, 0
        %528 = vmatprep.subr.bf16.mxu0 0
        %529 = vmatpush1.bf16.msra.mxu0 %v517
        %530 = vmatprep.subr.bf16.mxu0 0
        %531 = vmatpush1.bf16.msra.mxu0 %v518
        %532 = vmatprep.subr.bf16.mxu0 0
        %533 = vmatpush1.bf16.msra.mxu0 %v519
        %534 = vmatprep.subr.bf16.mxu0 0
        %535 = vmatpush1.bf16.msra.mxu0 %v520
        %536 = vmatprep.subr.bf16.mxu0 0
        %537 = vmatpush1.bf16.msra.mxu0 0
        %538 = vmatprep.subr.bf16.mxu0 0
        %539 = vmatpush1.bf16.msra.mxu0 0
        %540 = vmatprep.subr.bf16.mxu0 0
        %541 = vmatpush1.bf16.msra.mxu0 0
        %542 = vmatprep.subr.bf16.mxu0 0
        %543 = vmatpush1.bf16.msra.mxu0 0
        %544 = vmatprep.subr.bf16.mxu0 0
        %545 = vmatpush1.bf16.msra.mxu0 0
        %546 = vmatprep.subr.bf16.mxu0 0
        %547 = vmatpush1.bf16.msra.mxu0 0
        %548 = vmatprep.subr.bf16.mxu0 0
        %549 = vmatpush1.bf16.msra.mxu0 0
        %550 = vmatprep.subr.bf16.mxu0 0
        %551 = vmatpush1.bf16.msra.mxu0 0
        %552 = vmatprep.subr.bf16.mxu0 0
        %553 = vmatpush1.bf16.msra.mxu0 0
        %554 = vmatprep.subr.bf16.mxu0 0
        %555 = vmatpush1.bf16.msra.mxu0 0
        %556 = vmatprep.subr.bf16.mxu0 0
        %557 = vmatpush1.bf16.msra.mxu0 0
        %558 = vmatprep.subr.bf16.mxu0 0
        %559 = vmatpush1.bf16.msra.mxu0 0
        %560 = vmatprep.mubr.bf16.mxu0 0
        %561 = vmatmul.mubr.bf16.gmra.mrb[0].mxu0 %v526
        %v562 = vpop.f32.mrb[0].mxu0
        %v563 = vadd.f32 %v495, %v562
        %v564 = vpop.f32.mrb[0].mxu0
        %v565 = vpop.f32.mrb[0].mxu0
        %v566 = vadd.f32 %v498, %v565
        %v567 = vpop.f32.mrb[0].mxu0
        %568 = vdwg.mxu0
        %v569 = vrot.slane %v403, 1
        %v570 = vrot.slane %v404, 1
        %v571 = vsel %vm332, %v569, %v570
        %v574 = vsel %vm332, %v570, 0.0
        %s575 = scalar_lea.vmem %s2, 64
        %v576 = vld [vmem:[%s575] sm:$0xf]
        %v577 = vld [vmem:[%s575 + $0x4] sm:$0xf]
        %v578 = vld [vmem:[%s575 + $0x8] sm:$0xf]
        %v579 = vld [vmem:[%s575 + $0xc] sm:$0xf]
        %v580 = vld [vmem:[%s575 + $0x10] sm:$0xf]
        %v581 = vld [vmem:[%s575 + $0x14] sm:$0xf]
        %v582 = vld [vmem:[%s575 + $0x18] sm:$0xf]
        %v583 = vld [vmem:[%s575 + $0x1c] sm:$0xf]
        %v584 = vpack.c.bf16 %v574, %v571
        %v593 = vunpack.c.l.b16 %v576
        %v594 = vunpack.c.l.b16 %v577
        %v595 = vunpack.c.l.b16 %v578
        %v596 = vunpack.c.l.b16 %v579
        %v597 = vunpack.c.l.b16 %v580
        %v598 = vunpack.c.l.b16 %v581
        %v599 = vunpack.c.l.b16 %v582
        %v600 = vunpack.c.l.b16 %v583
        %v601 = vpack.c.b16 %v594, %v593
        %v602 = vpack.c.b16 %v596, %v595
        %v603 = vpack.c.b16 %v598, %v597
        %v604 = vpack.c.b16 %v600, %v599
        %v610 = vsel %vm456, %v584, 0
        %612 = vmatprep.subr.bf16.mxu0 0
        %613 = vmatpush1.bf16.msra.mxu0 %v601
        %614 = vmatprep.subr.bf16.mxu0 0
        %615 = vmatpush1.bf16.msra.mxu0 %v602
        %616 = vmatprep.subr.bf16.mxu0 0
        %617 = vmatpush1.bf16.msra.mxu0 %v603
        %618 = vmatprep.subr.bf16.mxu0 0
        %619 = vmatpush1.bf16.msra.mxu0 %v604
        %620 = vmatprep.subr.bf16.mxu0 0
        %621 = vmatpush1.bf16.msra.mxu0 0
        %622 = vmatprep.subr.bf16.mxu0 0
        %623 = vmatpush1.bf16.msra.mxu0 0
        %624 = vmatprep.subr.bf16.mxu0 0
        %625 = vmatpush1.bf16.msra.mxu0 0
        %626 = vmatprep.subr.bf16.mxu0 0
        %627 = vmatpush1.bf16.msra.mxu0 0
        %628 = vmatprep.subr.bf16.mxu0 0
        %629 = vmatpush1.bf16.msra.mxu0 0
        %630 = vmatprep.subr.bf16.mxu0 0
        %631 = vmatpush1.bf16.msra.mxu0 0
        %632 = vmatprep.subr.bf16.mxu0 0
        %633 = vmatpush1.bf16.msra.mxu0 0
        %634 = vmatprep.subr.bf16.mxu0 0
        %635 = vmatpush1.bf16.msra.mxu0 0
        %636 = vmatprep.subr.bf16.mxu0 0
        %637 = vmatpush1.bf16.msra.mxu0 0
        %638 = vmatprep.subr.bf16.mxu0 0
        %639 = vmatpush1.bf16.msra.mxu0 0
        %640 = vmatprep.subr.bf16.mxu0 0
        %641 = vmatpush1.bf16.msra.mxu0 0
        %642 = vmatprep.subr.bf16.mxu0 0
        %643 = vmatpush1.bf16.msra.mxu0 0
        %644 = vmatprep.mubr.bf16.mxu0 0
        %645 = vmatmul.mubr.bf16.gmra.mrb[0].mxu0 %v610
        %v646 = vpop.f32.mrb[0].mxu0
        %v647 = vadd.f32 0.0, %v646
        %v648 = vpop.f32.mrb[0].mxu0
        %v649 = vpop.f32.mrb[0].mxu0
        %v650 = vadd.f32 0.0, %v649
        %v651 = vpop.f32.mrb[0].mxu0
        %652 = vdwg.mxu0
        %v653 = vadd.f32 %v563, %v647
        %v654 = vadd.f32 %v566, %v650
        %v655 = vadd.f32 %v653, %v197
        %v656 = vadd.f32 %v654, %v198
        %v657 = vmul.f32 %v655, %v655
        %v658 = vmul.f32 %v656, %v656
        %v659 = vsel %vm231, %v657, 0.0
        %660 = vadd.xlane.f32.xlu0 %v659
        %v661 = vpop.xlane.xlu0 %660
        %v662 = vsel %vm231, %v658, 0.0
        %663 = vadd.xlane.f32.xlu0 %v662
        %v664 = vpop.xlane.xlu0 %663
        %v665 = vrcp.pop 32.0
        %v666 = vmul.f32 %v661, %v665
        %v667 = vmul.f32 %v664, %v665
        %v668 = vld [vmem:[%s3] sm:$0x1]
        %v669 = vadd.f32 %v666, 1e-06
        %v670 = vadd.f32 %v667, 1e-06
        %v671 = vrsqrt.pop %v669
        %v672 = vrsqrt.pop %v670
        %v673 = vmul.f32 %v655, %v671
        %v674 = vmul.f32 %v656, %v672
        %v676 = vlaneseq
        %v677 = vshrl.u32 %v676, 7
        %v678 = vsub.s32 0, %v677
        %v679 = vrot.slane %v668, %v678
        %v681 = vmul.f32 %v679, %v673
        %v682 = vmul.f32 %v679, %v674
        %683 = vst.msk [vmem:[%s190] sm:$0xff] %vm231, %v681
        %684 = vst.msk [vmem:[%s190 + $0x8] sm:$0xff] %vm231, %v682
        %s685 = sand.u32 %s115, 1
        %s686 = scalar_lea.sflag [#allocation3], %s685
        %s687 = sand.u32 %s115, 1
        %s688 = smul.addr %s687, 16
        %s689 = scalar_lea.vmem [#allocation2], %s688
        // Predicated region
        $region37: #{attn_block_forward.3} parent=35 // pred_check
          %p690 = pneg %p125
        $region38: #{attn_block_forward.3} parent=35 // pred_check_branch
          %692 = sbr.rel (%p690) target = $region40
        $region39: #{attn_block_forward.3} parent=35 // pred_region
          %s694 = ssub.s32 256, 256
          %695 = vsyncadd %s686, %s694
          %s696 = smul.addr %s18, 2
          %s697 = smul.addr %s696, 128
          %s698 = scalar_lea.hbm %s4, %s697
          %s699 = sshll.u32 %s689, 4
          %s700 = int_to_ptr.vmem [resolvable:$true] %s699
          %705 = dma.vmem_to_hbm [thread:$0]  %s700, 256, %s698, %s686, 128, 128, 8
        $region40: #{attn_block_forward.3} parent=35 // pred_fallthru
          _
      $region36: #{attn_block_forward.3} parent=5 // pred_fallthru
        _
      %p706 = scmp.le.s32.totalorder 2, %s13
      // Predicated region
      $region41: #{attn_block_forward.3} parent=5 // pred_check
        %p707 = pneg %p706
      $region42: #{attn_block_forward.3} parent=5 // pred_check_branch
        %709 = sbr.rel (%p707) target = $region44
      $region43: #{attn_block_forward.3} parent=5 // pred_region
        %s710 = ssub.s32 %s13, 2
        // Predicated region
        $region45: #{attn_block_forward.3} parent=43 // pred_check
          %p711 = pneg %p131
        $region46: #{attn_block_forward.3} parent=43 // pred_check_branch
          %713 = sbr.rel (%p711) target = $region48
        $region47: #{attn_block_forward.3} parent=43 // pred_region
          %s714 = sand.u32 %s116, 1
          %s715 = scalar_lea.sflag [#allocation3], %s714
          %s716 = sand.u32 %s116, 1
          %s717 = smul.addr %s716, 16
          %s718 = scalar_lea.vmem [#allocation2], %s717
          %719 = dma.done %s715, 256
        $region48: #{attn_block_forward.3} parent=43 // pred_fallthru
          _
      $region44: #{attn_block_forward.3} parent=5 // pred_fallthru
        _
    $region6: #{attn_block_forward.3} parent=1 // loop_footer
      %s17 = sadd.s32 1, %s13
    $region7: #{attn_block_forward.3} parent=1 // loop_footer_branch
      %12 = sbr.rel target = $region3
    $region8: #{attn_block_forward.3} parent=1 // loop_exit
      _
    %720 = vsyncpa [#allocation3], 1
    %s721 = scalar_lea.sflag [#allocation3], 1
    %722 = vsyncpa %s721, 1

// kernel: attn_block_forward.2
$region0: #{attn_block_forward.2}
  #allocation0 [shape = 'u32[]', space=smem, size = 0x4, offset = 0x4, fixed_abs, tag = 'smem constant byte address 0x4 - core index']
  #allocation1 [shape = 'u32[144,128]{1,0:T(1,128)}', space=vmem, size = 0x12000, scoped, tag = 'internal scratch']
  %s0 = inlined_call_operand.hbm [shape: f32[2,16,32], index: 0, kind: input, shape index: {}]
  %s1 = inlined_call_operand.vmem [shape: bf16[32,96], index: 1, kind: input, shape index: {}]
  %s2 = inlined_call_operand.vmem [shape: bf16[32,64], index: 2, kind: input, shape index: {}]
  %s3 = inlined_call_operand.vmem [shape: f32[1,64], index: 3, kind: input, shape index: {}]
  %s4 = inlined_call_operand.vmem [shape: f32[1,32], index: 4, kind: input, shape index: {}]
  %s5 = inlined_call_operand.hbm [shape: f32[4,5], index: 5, kind: input, shape index: {}]
  %s6 = inlined_call_operand.hbm [shape: f32[4,5], index: 6, kind: input, shape index: {}]
  %s7 = inlined_call_operand.hbm [shape: f32[4,5], index: 7, kind: input, shape index: {}]
  %s8 = inlined_call_operand.vmem [shape: f32[2,16,32], index: 8, kind: output, shape index: {}]
  %s9 = sld [smem:[#allocation0]]
  $region81: #{attn_block_forward.2} parent=0
    _
  %s11 = ssub.s32 1, %s9
  %s12 = scalar_select 0, %s11, %s9
  $region1: #{attn_block_forward.2} parent=0
    #allocation2 [shape = 'u8[16384]{0}', space=vmem, size = 0x4000, scoped, tag = 'input window, operand 0']
    #allocation3 [shape = 's32[2]{0}', space=sflag, size = 0x8, scoped, tag = 'scoped memory for attn_block_forward.2']
    #allocation4 [shape = 's32[2]{0}', space=sflag, size = 0x8, scoped, tag = 'scoped memory for attn_block_forward.2']
    #allocation5 [shape = 'u8[2048]{0}', space=smem, size = 0x800, scoped, tag = 'input window, operand 5, single buffered']
    #allocation6 [shape = 'u8[2048]{0}', space=smem, size = 0x800, scoped, tag = 'input window, operand 6, single buffered']
    #allocation7 [shape = 's32[1]{0}', space=sflag, size = 0x4, scoped, tag = 'scoped memory for attn_block_forward.2']
    #allocation8 [shape = 'u8[2048]{0}', space=smem, size = 0x800, scoped, tag = 'input window, operand 7, single buffered']
    %13 = vsyncpa [#allocation3], 0
    %s14 = scalar_lea.sflag [#allocation3], 1
    %15 = vsyncpa %s14, 0
    %16 = vsyncpa [#allocation4], 0
    %17 = vsyncpa [#allocation7], 0
    loop: start=0, step=1, limit=4
    $region2: #{attn_block_forward.2} parent=1 // loop_pre_header
      _
    $region3: #{attn_block_forward.2} parent=1 // loop_header
      %s19 = sphi 0, %s23
      %p20 = scmp.ge.s32.totalorder %s19, 4
      %s29 = sphi 0, %s31
      %s32 = sphi 0, %s29
      %s33 = sphi 0, %s32
      %s49 = sphi 0, %s33
      %s53 = sphi 0, %s53
      %s55 = sphi 0, %s53
      %s56 = sphi 0, %s55
      %s70 = sphi 0, %s56
      %s74 = sphi 0, %s74
      %s76 = sphi 0, %s74
      %s77 = sphi 0, %s76
      %s91 = sphi 0, %s77
      %s95 = sphi 0, %s95
      %s97 = sphi 0, %s95
      %s98 = sphi 0, %s97
      %s112 = sphi 0, %s98
      %s116 = sphi 0, %s116
      %s118 = sphi 0, %s116
      %s119 = sphi 0, %s118
      %s133 = sphi 0, %s119
      %s137 = sphi 0, %s137
      %s139 = sphi 0, %s137
      %s140 = sphi 0, %s139
      %s154 = sphi 0, %s140
      %s158 = sphi 0, %s158
      %s160 = sphi 0, %s158
      %s161 = sphi 0, %s160
      %s175 = sphi 0, %s161
      %s179 = sphi 0, %s179
      %s181 = sphi 0, %s179
      %s182 = sphi 0, %s181
      %s196 = sphi 0, %s182
      %s202 = sphi 0, %s204
      %s205 = sphi 0, %s202
      %s206 = sphi 0, %s205
      %s222 = sphi 0, %s206
    $region4: #{attn_block_forward.2} parent=1 // loop_header_branch
      %22 = sbr.rel (%p20) target = $region8
    $region5: #{attn_block_forward.2} parent=1 // loop_body
      %s24 = ssub.s32 %s19, 1
      %s25 = ssub.s32 %s19, 2
      %s26 = sadd.s32 %s19, 1
      %s27 = ssub.s32 %s19, %s26
      %p28 = scmp.eq.s32.totalorder %s27, 0
      %s30 = sadd.s32 %s29, 1
      %s31 = scalar_select %p28, %s29, %s30
      %p34 = pneg %p28
      %p35 = scmp.eq.s32.totalorder %s19, 1
      %p36 = por %p34, %p35
      %p37 = scmp.ne.s32.totalorder %s29, %s32
      %p38 = scmp.eq.s32.totalorder %s19, 0
      %p39 = por %p37, %p38
      %p40 = scmp.ne.s32.totalorder %s29, %s32
      %p41 = scmp.eq.s32.totalorder %s24, 1
      %p42 = por %p40, %p41
      %p43 = scmp.ne.s32.totalorder %s32, %s33
      %p44 = scmp.eq.s32.totalorder %s24, 0
      %p45 = por %p43, %p44
      %p46 = scmp.ne.s32.totalorder %s32, %s33
      %p47 = scmp.eq.s32.totalorder %s25, 1
      %p48 = por %p46, %p47
      %p50 = scmp.ne.s32.totalorder %s33, %s49
      %p51 = scmp.eq.s32.totalorder %s25, 0
      %p52 = por %p50, %p51
      %s54 = sadd.s32 %s53, 1
      %p57 = scmp.eq.s32.totalorder %s19, 1
      %p58 = scmp.ne.s32.totalorder %s53, %s55
      %p59 = scmp.eq.s32.totalorder %s19, 0
      %p60 = por %p58, %p59
      %p61 = scmp.ne.s32.totalorder %s53, %s55
      %p62 = scmp.eq.s32.totalorder %s24, 1
      %p63 = por %p61, %p62
      %p64 = scmp.ne.s32.totalorder %s55, %s56
      %p65 = scmp.eq.s32.totalorder %s24, 0
      %p66 = por %p64, %p65
      %p67 = scmp.ne.s32.totalorder %s55, %s56
      %p68 = scmp.eq.s32.totalorder %s25, 1
      %p69 = por %p67, %p68
      %p71 = scmp.ne.s32.totalorder %s56, %s70
      %p72 = scmp.eq.s32.totalorder %s25, 0
      %p73 = por %p71, %p72
      %s75 = sadd.s32 %s74, 1
      %p78 = scmp.eq.s32.totalorder %s19, 1
      %p79 = scmp.ne.s32.totalorder %s74, %s76
      %p80 = scmp.eq.s32.totalorder %s19, 0
      %p81 = por %p79, %p80
      %p82 = scmp.ne.s32.totalorder %s74, %s76
      %p83 = scmp.eq.s32.totalorder %s24, 1
      %p84 = por %p82, %p83
      %p85 = scmp.ne.s32.totalorder %s76, %s77
      %p86 = scmp.eq.s32.totalorder %s24, 0
      %p87 = por %p85, %p86
      %p88 = scmp.ne.s32.totalorder %s76, %s77
      %p89 = scmp.eq.s32.totalorder %s25, 1
      %p90 = por %p88, %p89
      %p92 = scmp.ne.s32.totalorder %s77, %s91
      %p93 = scmp.eq.s32.totalorder %s25, 0
      %p94 = por %p92, %p93
      %s96 = sadd.s32 %s95, 1
      %p99 = scmp.eq.s32.totalorder %s19, 1
      %p100 = scmp.ne.s32.totalorder %s95, %s97
      %p101 = scmp.eq.s32.totalorder %s19, 0
      %p102 = por %p100, %p101
      %p103 = scmp.ne.s32.totalorder %s95, %s97
      %p104 = scmp.eq.s32.totalorder %s24, 1
      %p105 = por %p103, %p104
      %p106 = scmp.ne.s32.totalorder %s97, %s98
      %p107 = scmp.eq.s32.totalorder %s24, 0
      %p108 = por %p106, %p107
      %p109 = scmp.ne.s32.totalorder %s97, %s98
      %p110 = scmp.eq.s32.totalorder %s25, 1
      %p111 = por %p109, %p110
      %p113 = scmp.ne.s32.totalorder %s98, %s112
      %p114 = scmp.eq.s32.totalorder %s25, 0
      %p115 = por %p113, %p114
      %s117 = sadd.s32 %s116, 1
      %p120 = scmp.eq.s32.totalorder %s19, 1
      %p121 = scmp.ne.s32.totalorder %s116, %s118
      %p122 = scmp.eq.s32.totalorder %s19, 0
      %p123 = por %p121, %p122
      %p124 = scmp.ne.s32.totalorder %s116, %s118
      %p125 = scmp.eq.s32.totalorder %s24, 1
      %p126 = por %p124, %p125
      %p127 = scmp.ne.s32.totalorder %s118, %s119
      %p128 = scmp.eq.s32.totalorder %s24, 0
      %p129 = por %p127, %p128
      %p130 = scmp.ne.s32.totalorder %s118, %s119
      %p131 = scmp.eq.s32.totalorder %s25, 1
      %p132 = por %p130, %p131
      %p134 = scmp.ne.s32.totalorder %s119, %s133
      %p135 = scmp.eq.s32.totalorder %s25, 0
      %p136 = por %p134, %p135
      %s138 = sadd.s32 %s137, 1
      %p141 = scmp.eq.s32.totalorder %s19, 1
      %p142 = scmp.ne.s32.totalorder %s137, %s139
      %p143 = scmp.eq.s32.totalorder %s19, 0
      %p144 = por %p142, %p143
      %p145 = scmp.ne.s32.totalorder %s137, %s139
      %p146 = scmp.eq.s32.totalorder %s24, 1
      %p147 = por %p145, %p146
      %p148 = scmp.ne.s32.totalorder %s139, %s140
      %p149 = scmp.eq.s32.totalorder %s24, 0
      %p150 = por %p148, %p149
      %p151 = scmp.ne.s32.totalorder %s139, %s140
      %p152 = scmp.eq.s32.totalorder %s25, 1
      %p153 = por %p151, %p152
      %p155 = scmp.ne.s32.totalorder %s140, %s154
      %p156 = scmp.eq.s32.totalorder %s25, 0
      %p157 = por %p155, %p156
      %s159 = sadd.s32 %s158, 1
      %p162 = scmp.eq.s32.totalorder %s19, 1
      %p163 = scmp.ne.s32.totalorder %s158, %s160
      %p164 = scmp.eq.s32.totalorder %s19, 0
      %p165 = por %p163, %p164
      %p166 = scmp.ne.s32.totalorder %s158, %s160
      %p167 = scmp.eq.s32.totalorder %s24, 1
      %p168 = por %p166, %p167
      %p169 = scmp.ne.s32.totalorder %s160, %s161
      %p170 = scmp.eq.s32.totalorder %s24, 0
      %p171 = por %p169, %p170
      %p172 = scmp.ne.s32.totalorder %s160, %s161
      %p173 = scmp.eq.s32.totalorder %s25, 1
      %p174 = por %p172, %p173
      %p176 = scmp.ne.s32.totalorder %s161, %s175
      %p177 = scmp.eq.s32.totalorder %s25, 0
      %p178 = por %p176, %p177
      %s180 = sadd.s32 %s179, 1
      %p183 = scmp.eq.s32.totalorder %s19, 1
      %p184 = scmp.ne.s32.totalorder %s179, %s181
      %p185 = scmp.eq.s32.totalorder %s19, 0
      %p186 = por %p184, %p185
      %p187 = scmp.ne.s32.totalorder %s179, %s181
      %p188 = scmp.eq.s32.totalorder %s24, 1
      %p189 = por %p187, %p188
      %p190 = scmp.ne.s32.totalorder %s181, %s182
      %p191 = scmp.eq.s32.totalorder %s24, 0
      %p192 = por %p190, %p191
      %p193 = scmp.ne.s32.totalorder %s181, %s182
      %p194 = scmp.eq.s32.totalorder %s25, 1
      %p195 = por %p193, %p194
      %p197 = scmp.ne.s32.totalorder %s182, %s196
      %p198 = scmp.eq.s32.totalorder %s25, 0
      %p199 = por %p197, %p198
      %s200 = ssub.s32 %s19, %s26
      %p201 = scmp.eq.s32.totalorder %s200, 0
      %s203 = sadd.s32 %s202, 1
      %s204 = scalar_select %p201, %s202, %s203
      %p207 = pneg %p201
      %p208 = scmp.eq.s32.totalorder %s19, 1
      %p209 = por %p207, %p208
      %p210 = scmp.ne.s32.totalorder %s202, %s205
      %p211 = scmp.eq.s32.totalorder %s19, 0
      %p212 = por %p210, %p211
      %p213 = scmp.ne.s32.totalorder %s202, %s205
      %p214 = scmp.eq.s32.totalorder %s24, 1
      %p215 = por %p213, %p214
      %p216 = scmp.ne.s32.totalorder %s205, %s206
      %p217 = scmp.eq.s32.totalorder %s24, 0
      %p218 = por %p216, %p217
      %p219 = scmp.ne.s32.totalorder %s205, %s206
      %p220 = scmp.eq.s32.totalorder %s25, 1
      %p221 = por %p219, %p220
      %p223 = scmp.ne.s32.totalorder %s206, %s222
      %p224 = scmp.eq.s32.totalorder %s25, 0
      %p225 = por %p223, %p224
      %p226 = scmp.le.s32.totalorder 1, %s19
      %p227 = scmp.lt.s32.totalorder %s19, 3
      %p228 = pnand %p226, %p227
      %p229 = pneg %p228
      // Predicated region
      $region9: #{attn_block_forward.2} parent=5 // pred_check
        _
      $region10: #{attn_block_forward.2} parent=5 // pred_check_branch
        %231 = sbr.rel (%p228) target = $region12
      $region11: #{attn_block_forward.2} parent=5 // pred_region
        %s232 = ssub.s32 %s19, 1
        // Predicated region
        $region13: #{attn_block_forward.2} parent=11 // pred_check
          %p233 = pneg %p66
        $region14: #{attn_block_forward.2} parent=11 // pred_check_branch
          %235 = sbr.rel (%p233) target = $region16
        $region15: #{attn_block_forward.2} parent=11 // pred_region
          _
        $region16: #{attn_block_forward.2} parent=11 // pred_fallthru
          _
        // Predicated region
        $region17: #{attn_block_forward.2} parent=11 // pred_check
          %p236 = pneg %p87
        $region18: #{attn_block_forward.2} parent=11 // pred_check_branch
          %238 = sbr.rel (%p236) target = $region20
        $region19: #{attn_block_forward.2} parent=11 // pred_region
          _
        $region20: #{attn_block_forward.2} parent=11 // pred_fallthru
          _
        // Predicated region
        $region21: #{attn_block_forward.2} parent=11 // pred_check
          %p239 = pneg %p108
        $region22: #{attn_block_forward.2} parent=11 // pred_check_branch
          %241 = sbr.rel (%p239) target = $region24
        $region23: #{attn_block_forward.2} parent=11 // pred_region
          _
        $region24: #{attn_block_forward.2} parent=11 // pred_fallthru
          _
        // Predicated region
        $region25: #{attn_block_forward.2} parent=11 // pred_check
          %p242 = pneg %p129
        $region26: #{attn_block_forward.2} parent=11 // pred_check_branch
          %244 = sbr.rel (%p242) target = $region28
        $region27: #{attn_block_forward.2} parent=11 // pred_region
          _
        $region28: #{attn_block_forward.2} parent=11 // pred_fallthru
          _
        // Predicated region
        $region29: #{attn_block_forward.2} parent=11 // pred_check
          %p245 = pneg %p150
        $region30: #{attn_block_forward.2} parent=11 // pred_check_branch
          %247 = sbr.rel (%p245) target = $region32
        $region31: #{attn_block_forward.2} parent=11 // pred_region
          %s249 = ssub.s32 64, 64
          %250 = vsyncadd [#allocation4], %s249
          %253 = dma.hbm_to_smem %s5, 64, [#allocation5], [#allocation4]
        $region32: #{attn_block_forward.2} parent=11 // pred_fallthru
          _
        // Predicated region
        $region33: #{attn_block_forward.2} parent=11 // pred_check
          %p254 = pneg %p171
        $region34: #{attn_block_forward.2} parent=11 // pred_check_branch
          %256 = sbr.rel (%p254) target = $region36
        $region35: #{attn_block_forward.2} parent=11 // pred_region
          %s258 = ssub.s32 64, 64
          %259 = vsyncadd [#allocation7], %s258
          %262 = dma.hbm_to_smem %s6, 64, [#allocation6], [#allocation7]
        $region36: #{attn_block_forward.2} parent=11 // pred_fallthru
          _
        // Predicated region
        $region37: #{attn_block_forward.2} parent=11 // pred_check
          %p263 = pneg %p192
        $region38: #{attn_block_forward.2} parent=11 // pred_check_branch
          %265 = sbr.rel (%p263) target = $region40
        $region39: #{attn_block_forward.2} parent=11 // pred_region
          %s267 = ssub.s32 64, 64
          %268 = vsyncadd [#allocation7], %s267
          %271 = dma.hbm_to_smem %s7, 64, [#allocation8], [#allocation7]
        $region40: #{attn_block_forward.2} parent=11 // pred_fallthru
          _
      $region12: #{attn_block_forward.2} parent=5 // pred_fallthru
        _
      %p272 = scmp.lt.s32.totalorder %s19, 2
      // Predicated region
      $region41: #{attn_block_forward.2} parent=5 // pred_check
        %p273 = pneg %p272
      $region42: #{attn_block_forward.2} parent=5 // pred_check_branch
        %275 = sbr.rel (%p273) target = $region44
      $region43: #{attn_block_forward.2} parent=5 // pred_region
        // Predicated region
        $region45: #{attn_block_forward.2} parent=43 // pred_check
          %p276 = pneg %p39
        $region46: #{attn_block_forward.2} parent=43 // pred_check_branch
          %278 = sbr.rel (%p276) target = $region48
        $region47: #{attn_block_forward.2} parent=43 // pred_region
          %s279 = sand.u32 %s29, 1
          %s280 = scalar_lea.sflag [#allocation3], %s279
          %s281 = sand.u32 %s29, 1
          %s282 = smul.addr %s281, 16
          %s283 = scalar_lea.vmem [#allocation2], %s282
          %s285 = ssub.s32 256, 256
          %286 = vsyncadd %s280, %s285
          %s287 = smul.addr %s19, 2
          %s288 = smul.addr %s287, 128
          %s289 = scalar_lea.hbm %s0, %s288
          %s290 = sshll.u32 %s283, 4
          %s291 = int_to_ptr.vmem [resolvable:$true] %s290
          %296 = dma.hbm_to_vmem [thread:$0]  %s289, 256, %s291, %s280, 128, 128, 8
        $region48: #{attn_block_forward.2} parent=43 // pred_fallthru
          _
      $region44: #{attn_block_forward.2} parent=5 // pred_fallthru
        _
      %p297 = scmp.le.s32.totalorder 1, %s19
      %p298 = scmp.lt.s32.totalorder %s19, 3
      %p299 = pnand %p297, %p298
      %p300 = pneg %p299
      // Predicated region
      $region49: #{attn_block_forward.2} parent=5 // pred_check
        _
      $region50: #{attn_block_forward.2} parent=5 // pred_check_branch
        %302 = sbr.rel (%p299) target = $region52
      $region51: #{attn_block_forward.2} parent=5 // pred_region
        %s303 = ssub.s32 %s19, 1
        %s304 = sand.u32 %s32, 1
        %s305 = scalar_lea.sflag [#allocation3], %s304
        %s306 = sand.u32 %s32, 1
        %s307 = smul.addr %s306, 16
        %s308 = scalar_lea.vmem [#allocation2], %s307
        // Predicated region
        $region53: #{attn_block_forward.2} parent=51 // pred_check
          %p309 = pneg %p45
        $region54: #{attn_block_forward.2} parent=51 // pred_check_branch
          %311 = sbr.rel (%p309) target = $region56
        $region55: #{attn_block_forward.2} parent=51 // pred_region
          %312 = dma.done %s305, 256
        $region56: #{attn_block_forward.2} parent=51 // pred_fallthru
          _
        // Predicated region
        $region57: #{attn_block_forward.2} parent=51 // pred_check
          %p313 = pneg %p150
        $region58: #{attn_block_forward.2} parent=51 // pred_check_branch
          %315 = sbr.rel (%p313) target = $region60
        $region59: #{attn_block_forward.2} parent=51 // pred_region
          %316 = dma.done [#allocation4], 64
        $region60: #{attn_block_forward.2} parent=51 // pred_fallthru
          _
        // Predicated region
        $region61: #{attn_block_forward.2} parent=51 // pred_check
          %p317 = pneg %p171
        $region62: #{attn_block_forward.2} parent=51 // pred_check_branch
          %319 = sbr.rel (%p317) target = $region64
        $region63: #{attn_block_forward.2} parent=51 // pred_region
          %320 = dma.done [#allocation7], 64
        $region64: #{attn_block_forward.2} parent=51 // pred_fallthru
          _
        // Predicated region
        $region65: #{attn_block_forward.2} parent=51 // pred_check
          %p321 = pneg %p192
        $region66: #{attn_block_forward.2} parent=51 // pred_check_branch
          %323 = sbr.rel (%p321) target = $region68
        $region67: #{attn_block_forward.2} parent=51 // pred_region
          %324 = dma.done [#allocation7], 64
        $region68: #{attn_block_forward.2} parent=51 // pred_fallthru
          _
        %325 = sfence
        %s326 = sand.u32 %s32, 1
        %s327 = scalar_lea.sflag [#allocation3], %s326
        %s328 = sand.u32 %s32, 1
        %s329 = smul.addr %s328, 16
        %s330 = scalar_lea.vmem [#allocation2], %s329
        %p331 = pneg %p45
        %p332 = pneg %p42
        %p333 = pneg %p66
        %p334 = pneg %p63
        %p335 = pneg %p87
        %p336 = pneg %p84
        %p337 = pneg %p108
        %p338 = pneg %p105
        %p339 = pneg %p129
        %p340 = pneg %p126
        %p341 = pneg %p150
        %p342 = pneg %p147
        %p343 = pneg %p171
        %p344 = pneg %p168
        %p345 = pneg %p192
        %p346 = pneg %p189
        %p347 = pneg %p218
        %p348 = pneg %p215
        %p349 = scmp.lt.s32.totalorder %s24, 1
        %s350 = scalar_select %p349, %s24, 1
        %s351 = smul.addr %s350, 2
        %s352 = smul.addr %s351, 8
        %s353 = scalar_lea.vmem %s8, %s352
        %p354 = scmp.lt.s32.totalorder %s24, 1
        %s355 = scalar_select %p354, %s24, 1
        %s356 = smul.addr %s355, 2
        %s357 = smul.addr %s356, 8
        %s358 = scalar_lea.vmem %s8, %s357
        %v360 = vld [vmem:[%s308] sm:$0xff]
        %v361 = vld [vmem:[%s308 + $0x8] sm:$0xff]
        %v362 = vpack.c.bf16 %v361, %v360
        %v363 = vld [vmem:[%s1] sm:$0xf]
        %v364 = vld [vmem:[%s1 + $0x4] sm:$0xf]
        %v365 = vld [vmem:[%s1 + $0x8] sm:$0xf]
        %v366 = vld [vmem:[%s1 + $0xc] sm:$0xf]
        %v371 = vunpack.c.l.b16 %v363
        %v372 = vunpack.c.l.b16 %v364
        %v373 = vunpack.c.l.b16 %v365
        %v374 = vunpack.c.l.b16 %v366
        %v375 = vpack.c.b16 %v372, %v371
        %v376 = vpack.c.b16 %v374, %v373
        %vm379 = vcmask 261120
        %v381 = vsel %vm379, %v362, 0
        %383 = vmatprep.subr.bf16.mxu0 0
        %384 = vmatpush1.bf16.msra.mxu0 %v375
        %385 = vmatprep.subr.bf16.mxu0 0
        %386 = vmatpush1.bf16.msra.mxu0 %v376
        %387 = vmatprep.subr.bf16.mxu0 0
        %388 = vmatpush1.bf16.msra.mxu0 0
        %389 = vmatprep.subr.bf16.mxu0 0
        %390 = vmatpush1.bf16.msra.mxu0 0
        %391 = vmatprep.subr.bf16.mxu0 0
        %392 = vmatpush1.bf16.msra.mxu0 0
        %393 = vmatprep.subr.bf16.mxu0 0
        %394 = vmatpush1.bf16.msra.mxu0 0
        %395 = vmatprep.subr.bf16.mxu0 0
        %396 = vmatpush1.bf16.msra.mxu0 0
        %397 = vmatprep.subr.bf16.mxu0 0
        %398 = vmatpush1.bf16.msra.mxu0 0
        %399 = vmatprep.subr.bf16.mxu0 0
        %400 = vmatpush1.bf16.msra.mxu0 0
        %401 = vmatprep.subr.bf16.mxu0 0
        %402 = vmatpush1.bf16.msra.mxu0 0
        %403 = vmatprep.subr.bf16.mxu0 0
        %404 = vmatpush1.bf16.msra.mxu0 0
        %405 = vmatprep.subr.bf16.mxu0 0
        %406 = vmatpush1.bf16.msra.mxu0 0
        %407 = vmatprep.subr.bf16.mxu0 0
        %408 = vmatpush1.bf16.msra.mxu0 0
        %409 = vmatprep.subr.bf16.mxu0 0
        %410 = vmatpush1.bf16.msra.mxu0 0
        %411 = vmatprep.subr.bf16.mxu0 0
        %412 = vmatpush1.bf16.msra.mxu0 0
        %413 = vmatprep.subr.bf16.mxu0 0
        %414 = vmatpush1.bf16.msra.mxu0 0
        %415 = vmatprep.mubr.bf16.mxu0 0
        %416 = vmatmul.mubr.bf16.gmra.mrb[0].mxu0 %v381
        %v417 = vpop.f32.mrb[0].mxu0
        %v418 = vadd.f32 0.0, %v417
        %v419 = vpop.f32.mrb[0].mxu0
        %v420 = vpop.f32.mrb[0].mxu0
        %v421 = vadd.f32 0.0, %v420
        %v422 = vpop.f32.mrb[0].mxu0
        %423 = vdwg.mxu0
        %v424 = vlaneseq
        %v425 = vand.u32 %v424, 127
        %v426 = vlaneseq
        %v427 = vshrl.u32 %v426, 7
        %v428 = vadd.s32 %v427, 8
        %v429 = vsub.s32 %v425, %v427
        %v430 = vsub.s32 %v425, %v428
        %v431 = vcvt.s32.f32 %v429
        %v432 = vcvt.s32.f32 %v430
        %v433 = vpack.c.bf16 %v421, %v418
        %v434 = vmul.f32 %v418, 0.35355338
        %v435 = vmul.f32 %v421, 0.35355338
        %v436 = vpack.c.bf16 %v435, %v434
        %s437 = sld [smem:[#allocation5]]
        %s438 = sld [smem:[#allocation6]]
        %s439 = sld [smem:[#allocation8]]
        %s440 = sand.u32 2147483647, %s439
        %s441 = ssub.f32 0.0, %s440
        %v442 = vstv %s438
        %v443 = vsub.f32 %v431, %v442
        %v444 = vsub.f32 %v432, %v442
        %v445 = vmul.f32 %v443, %v443
        %v446 = vmul.f32 %v444, %v444
        %v447 = vstv %s441
        %v448 = vmul.f32 %v447, %v445
        %v449 = vmul.f32 %v447, %v446
        %v450 = vmul.f32 %v448, 1.442695
        %v451 = vpow.pop %v450
        %v452 = vmul.f32 %v449, 1.442695
        %v453 = vpow.pop %v452
        %v454 = vstv %s437
        %v455 = vmul.f32 %v454, %v451
        %v456 = vmul.f32 %v454, %v453
        %v457 = vadd.f32 %v455, 0.0
        %v458 = vadd.f32 %v456, 0.0
        %s459 = sld [smem:[#allocation5 + $0x1]]
        %s460 = sld [smem:[#allocation6 + $0x1]]
        %s461 = sld [smem:[#allocation8 + $0x1]]
        %s462 = sand.u32 2147483647, %s461
        %s463 = ssub.f32 0.0, %s462
        %v464 = vstv %s460
        %v465 = vsub.f32 %v431, %v464
        %v466 = vsub.f32 %v432, %v464
        %v467 = vmul.f32 %v465, %v465
        %v468 = vmul.f32 %v466, %v466
        %v469 = vstv %s463
        %v470 = vmul.f32 %v469, %v467
        %v471 = vmul.f32 %v469, %v468
        %v472 = vmul.f32 %v470, 1.442695
        %v473 = vpow.pop %v472
        %v474 = vmul.f32 %v471, 1.442695
        %v475 = vpow.pop %v474
        %v476 = vstv %s459
        %v477 = vmul.f32 %v476, %v473
        %v478 = vmul.f32 %v476, %v475
        %v479 = vadd.f32 %v457, %v477
        %v480 = vadd.f32 %v458, %v478
        %s481 = sld [smem:[#allocation5 + $0x2]]
        %s482 = sld [smem:[#allocation6 + $0x2]]
        %s483 = sld [smem:[#allocation8 + $0x2]]
        %s484 = sand.u32 2147483647, %s483
        %s485 = ssub.f32 0.0, %s484
        %v486 = vstv %s482
        %v487 = vsub.f32 %v431, %v486
        %v488 = vsub.f32 %v432, %v486
        %v489 = vmul.f32 %v487, %v487
        %v490 = vmul.f32 %v488, %v488
        %v491 = vstv %s485
        %v492 = vmul.f32 %v491, %v489
        %v493 = vmul.f32 %v491, %v490
        %v494 = vmul.f32 %v492, 1.442695
        %v495 = vpow.pop %v494
        %v496 = vmul.f32 %v493, 1.442695
        %v497 = vpow.pop %v496
        %v498 = vstv %s481
        %v499 = vmul.f32 %v498, %v495
        %v500 = vmul.f32 %v498, %v497
        %v501 = vadd.f32 %v479, %v499
        %v502 = vadd.f32 %v480, %v500
        %s503 = sld [smem:[#allocation5 + $0x3]]
        %s504 = sld [smem:[#allocation6 + $0x3]]
        %s505 = sld [smem:[#allocation8 + $0x3]]
        %s506 = sand.u32 2147483647, %s505
        %s507 = ssub.f32 0.0, %s506
        %v508 = vstv %s504
        %v509 = vsub.f32 %v431, %v508
        %v510 = vsub.f32 %v432, %v508
        %v511 = vmul.f32 %v509, %v509
        %v512 = vmul.f32 %v510, %v510
        %v513 = vstv %s507
        %v514 = vmul.f32 %v513, %v511
        %v515 = vmul.f32 %v513, %v512
        %v516 = vmul.f32 %v514, 1.442695
        %v517 = vpow.pop %v516
        %v518 = vmul.f32 %v515, 1.442695
        %v519 = vpow.pop %v518
        %v520 = vstv %s503
        %v521 = vmul.f32 %v520, %v517
        %v522 = vmul.f32 %v520, %v519
        %v523 = vadd.f32 %v501, %v521
        %v524 = vadd.f32 %v502, %v522
        %s525 = sld [smem:[#allocation5 + $0x4]]
        %s526 = sld [smem:[#allocation6 + $0x4]]
        %s527 = sld [smem:[#allocation8 + $0x4]]
        %s528 = sand.u32 2147483647, %s527
        %s529 = ssub.f32 0.0, %s528
        %v530 = vstv %s526
        %v531 = vsub.f32 %v431, %v530
        %v532 = vsub.f32 %v432, %v530
        %v533 = vmul.f32 %v531, %v531
        %v534 = vmul.f32 %v532, %v532
        %v535 = vstv %s529
        %v536 = vmul.f32 %v535, %v533
        %v537 = vmul.f32 %v535, %v534
        %v538 = vmul.f32 %v536, 1.442695
        %v539 = vpow.pop %v538
        %v540 = vmul.f32 %v537, 1.442695
        %v541 = vpow.pop %v540
        %v542 = vstv %s525
        %v543 = vmul.f32 %v542, %v539
        %v544 = vmul.f32 %v542, %v541
        %v545 = vadd.f32 %v523, %v543
        %v546 = vadd.f32 %v524, %v544
        %548 = vrot.lane.b32.xlu0 %v436, 64
        %v549 = vpop.permute.xlu0 %548
        %vm550 = vcmask 64512
        %v552 = vsel %vm550, %v549, 0
        %v555 = vsel %vm550, %v433, 0
        %557 = vmatprep.subr.bf16.mxu0 0
        %558 = vmatpush1.bf16.xpose.msra.mxu0 %v555
        %559 = vmatprep.subr.bf16.mxu0 0
        %560 = vmatpush1.bf16.xpose.msra.mxu0 0
        %561 = vmatprep.subr.bf16.mxu0 0
        %562 = vmatpush1.bf16.xpose.msra.mxu0 0
        %563 = vmatprep.subr.bf16.mxu0 0
        %564 = vmatpush1.bf16.xpose.msra.mxu0 0
        %565 = vmatprep.subr.bf16.mxu0 0
        %566 = vmatpush1.bf16.xpose.msra.mxu0 0
        %567 = vmatprep.subr.bf16.mxu0 0
        %568 = vmatpush1.bf16.xpose.msra.mxu0 0
        %569 = vmatprep.subr.bf16.mxu0 0
        %570 = vmatpush1.bf16.xpose.msra.mxu0 0
        %571 = vmatprep.subr.bf16.mxu0 0
        %572 = vmatpush1.bf16.xpose.msra.mxu0 0
        %573 = vmatprep.subr.bf16.mxu0 0
        %574 = vmatpush1.bf16.xpose.msra.mxu0 0
        %575 = vmatprep.subr.bf16.mxu0 0
        %576 = vmatpush1.bf16.xpose.msra.mxu0 0
        %577 = vmatprep.subr.bf16.mxu0 0
        %578 = vmatpush1.bf16.xpose.msra.mxu0 0
        %579 = vmatprep.subr.bf16.mxu0 0
        %580 = vmatpush1.bf16.xpose.msra.mxu0 0
        %581 = vmatprep.subr.bf16.mxu0 0
        %582 = vmatpush1.bf16.xpose.msra.mxu0 0
        %583 = vmatprep.subr.bf16.mxu0 0
        %584 = vmatpush1.bf16.xpose.msra.mxu0 0
        %585 = vmatprep.subr.bf16.mxu0 0
        %586 = vmatpush1.bf16.xpose.msra.mxu0 0
        %587 = vmatprep.subr.bf16.mxu0 0
        %588 = vmatpush1.bf16.xpose.msra.mxu0 0
        %589 = vmatprep.mubr.bf16.mxu0 0
        %590 = vmatmul.mubr.bf16.gmra.mrb[0].mxu0 %v552
        %v591 = vpop.f32.mrb[0].mxu0
        %v592 = vadd.f32 %v545, %v591
        %v593 = vpop.f32.mrb[0].mxu0
        %v594 = vpop.f32.mrb[0].mxu0
        %v595 = vadd.f32 %v546, %v594
        %v596 = vpop.f32.mrb[0].mxu0
        %597 = vdwg.mxu0
        %vm598 = vcmask 130048
        %v599 = vsel %vm598, %v592, -inf
        %600 = vmax.xlane.f32.xlu0 %v599
        %v601 = vpop.xlane.xlu0 %600
        %v602 = vsel %vm598, %v595, -inf
        %603 = vmax.xlane.f32.xlu0 %v602
        %v604 = vpop.xlane.xlu0 %603
        %v605 = vsub.f32 %v592, %v601
        %v606 = vsub.f32 %v595, %v604
        %v607 = vmul.f32 %v605, 1.442695
        %v608 = vpow.pop %v607
        %v609 = vmul.f32 %v606, 1.442695
        %v610 = vpow.pop %v609
        %v611 = vsel %vm598, %v608, 0.0
        %612 = vadd.xlane.f32.xlu0 %v611
        %v613 = vpop.xlane.xlu0 %612
        %v614 = vsel %vm598, %v610, 0.0
        %615 = vadd.xlane.f32.xlu0 %v614
        %v616 = vpop.xlane.xlu0 %615
        %v617 = vrcp.pop %v613
        %v618 = vrcp.pop %v616
        %v619 = vmul.f32 %v608, %v617
        %v620 = vmul.f32 %v610, %v618
        %v621 = vpack.c.bf16 %v620, %v619
        %623 = vrot.lane.b32.xlu0 %v433, 96
        %v624 = vpop.permute.xlu0 %623
        %v627 = vsel %vm598, %v621, 0
        %629 = vmatprep.subr.bf16.mxu0 0
        %630 = vmatpush1.bf16.msra.mxu0 %v624
        %631 = vmatprep.subr.bf16.mxu0 0
        %632 = vmatpush1.bf16.msra.mxu0 0
        %633 = vmatprep.subr.bf16.mxu0 0
        %634 = vmatpush1.bf16.msra.mxu0 0
        %635 = vmatprep.subr.bf16.mxu0 0
        %636 = vmatpush1.bf16.msra.mxu0 0
        %637 = vmatprep.subr.bf16.mxu0 0
        %638 = vmatpush1.bf16.msra.mxu0 0
        %639 = vmatprep.subr.bf16.mxu0 0
        %640 = vmatpush1.bf16.msra.mxu0 0
        %641 = vmatprep.subr.bf16.mxu0 0
        %642 = vmatpush1.bf16.msra.mxu0 0
        %643 = vmatprep.subr.bf16.mxu0 0
        %644 = vmatpush1.bf16.msra.mxu0 0
        %645 = vmatprep.subr.bf16.mxu0 0
        %646 = vmatpush1.bf16.msra.mxu0 0
        %647 = vmatprep.subr.bf16.mxu0 0
        %648 = vmatpush1.bf16.msra.mxu0 0
        %649 = vmatprep.subr.bf16.mxu0 0
        %650 = vmatpush1.bf16.msra.mxu0 0
        %651 = vmatprep.subr.bf16.mxu0 0
        %652 = vmatpush1.bf16.msra.mxu0 0
        %653 = vmatprep.subr.bf16.mxu0 0
        %654 = vmatpush1.bf16.msra.mxu0 0
        %655 = vmatprep.subr.bf16.mxu0 0
        %656 = vmatpush1.bf16.msra.mxu0 0
        %657 = vmatprep.subr.bf16.mxu0 0
        %658 = vmatpush1.bf16.msra.mxu0 0
        %659 = vmatprep.subr.bf16.mxu0 0
        %660 = vmatpush1.bf16.msra.mxu0 0
        %661 = vmatprep.mubr.bf16.mxu0 0
        %662 = vmatmul.mubr.bf16.gmra.mrb[0].mxu0 %v627
        %v663 = vpop.f32.mrb[0].mxu0
        %v664 = vadd.f32 0.0, %v663
        %v665 = vpop.f32.mrb[0].mxu0
        %v666 = vpop.f32.mrb[0].mxu0
        %v667 = vadd.f32 0.0, %v666
        %v668 = vpop.f32.mrb[0].mxu0
        %669 = vdwg.mxu0
        %s670 = sld [smem:[#allocation5 + $0x80]]
        %s671 = sld [smem:[#allocation6 + $0x80]]
        %s672 = sld [smem:[#allocation8 + $0x80]]
        %s673 = sand.u32 2147483647, %s672
        %s674 = ssub.f32 0.0, %s673
        %v675 = vstv %s671
        %v676 = vsub.f32 %v431, %v675
        %v677 = vsub.f32 %v432, %v675
        %v678 = vmul.f32 %v676, %v676
        %v679 = vmul.f32 %v677, %v677
        %v680 = vstv %s674
        %v681 = vmul.f32 %v680, %v678
        %v682 = vmul.f32 %v680, %v679
        %v683 = vmul.f32 %v681, 1.442695
        %v684 = vpow.pop %v683
        %v685 = vmul.f32 %v682, 1.442695
        %v686 = vpow.pop %v685
        %v687 = vstv %s670
        %v688 = vmul.f32 %v687, %v684
        %v689 = vmul.f32 %v687, %v686
        %v690 = vadd.f32 %v688, 0.0
        %v691 = vadd.f32 %v689, 0.0
        %s692 = sld [smem:[#allocation5 + $0x81]]
        %s693 = sld [smem:[#allocation6 + $0x81]]
        %s694 = sld [smem:[#allocation8 + $0x81]]
        %s695 = sand.u32 2147483647, %s694
        %s696 = ssub.f32 0.0, %s695
        %v697 = vstv %s693
        %v698 = vsub.f32 %v431, %v697
        %v699 = vsub.f32 %v432, %v697
        %v700 = vmul.f32 %v698, %v698
        %v701 = vmul.f32 %v699, %v699
        %v702 = vstv %s696
        %v703 = vmul.f32 %v702, %v700
        %v704 = vmul.f32 %v702, %v701
        %v705 = vmul.f32 %v703, 1.442695
        %v706 = vpow.pop %v705
        %v707 = vmul.f32 %v704, 1.442695
        %v708 = vpow.pop %v707
        %v709 = vstv %s692
        %v710 = vmul.f32 %v709, %v706
        %v711 = vmul.f32 %v709, %v708
        %v712 = vadd.f32 %v690, %v710
        %v713 = vadd.f32 %v691, %v711
        %s714 = sld [smem:[#allocation5 + $0x82]]
        %s715 = sld [smem:[#allocation6 + $0x82]]
        %s716 = sld [smem:[#allocation8 + $0x82]]
        %s717 = sand.u32 2147483647, %s716
        %s718 = ssub.f32 0.0, %s717
        %v719 = vstv %s715
        %v720 = vsub.f32 %v431, %v719
        %v721 = vsub.f32 %v432, %v719
        %v722 = vmul.f32 %v720, %v720
        %v723 = vmul.f32 %v721, %v721
        %v724 = vstv %s718
        %v725 = vmul.f32 %v724, %v722
        %v726 = vmul.f32 %v724, %v723
        %v727 = vmul.f32 %v725, 1.442695
        %v728 = vpow.pop %v727
        %v729 = vmul.f32 %v726, 1.442695
        %v730 = vpow.pop %v729
        %v731 = vstv %s714
        %v732 = vmul.f32 %v731, %v728
        %v733 = vmul.f32 %v731, %v730
        %v734 = vadd.f32 %v712, %v732
        %v735 = vadd.f32 %v713, %v733
        %s736 = sld [smem:[#allocation5 + $0x83]]
        %s737 = sld [smem:[#allocation6 + $0x83]]
        %s738 = sld [smem:[#allocation8 + $0x83]]
        %s739 = sand.u32 2147483647, %s738
        %s740 = ssub.f32 0.0, %s739
        %v741 = vstv %s737
        %v742 = vsub.f32 %v431, %v741
        %v743 = vsub.f32 %v432, %v741
        %v744 = vmul.f32 %v742, %v742
        %v745 = vmul.f32 %v743, %v743
        %v746 = vstv %s740
        %v747 = vmul.f32 %v746, %v744
        %v748 = vmul.f32 %v746, %v745
        %v749 = vmul.f32 %v747, 1.442695
        %v750 = vpow.pop %v749
        %v751 = vmul.f32 %v748, 1.442695
        %v752 = vpow.pop %v751
        %v753 = vstv %s736
        %v754 = vmul.f32 %v753, %v750
        %v755 = vmul.f32 %v753, %v752
        %v756 = vadd.f32 %v734, %v754
        %v757 = vadd.f32 %v735, %v755
        %s758 = sld [smem:[#allocation5 + $0x84]]
        %s759 = sld [smem:[#allocation6 + $0x84]]
        %s760 = sld [smem:[#allocation8 + $0x84]]
        %s761 = sand.u32 2147483647, %s760
        %s762 = ssub.f32 0.0, %s761
        %v763 = vstv %s759
        %v764 = vsub.f32 %v431, %v763
        %v765 = vsub.f32 %v432, %v763
        %v766 = vmul.f32 %v764, %v764
        %v767 = vmul.f32 %v765, %v765
        %v768 = vstv %s762
        %v769 = vmul.f32 %v768, %v766
        %v770 = vmul.f32 %v768, %v767
        %v771 = vmul.f32 %v769, 1.442695
        %v772 = vpow.pop %v771
        %v773 = vmul.f32 %v770, 1.442695
        %v774 = vpow.pop %v773
        %v775 = vstv %s758
        %v776 = vmul.f32 %v775, %v772
        %v777 = vmul.f32 %v775, %v774
        %v778 = vadd.f32 %v756, %v776
        %v779 = vadd.f32 %v757, %v777
        %780 = vrot.lane.b32.xlu0 %v436, 56
        %v781 = vpop.permute.xlu0 %780
        %782 = vrot.lane.b32.xlu0 %v433, 120
        %v783 = vpop.permute.xlu0 %782
        %v785 = vsel %vm550, %v781, 0
        %v788 = vsel %vm550, %v783, 0
        %790 = vmatprep.subr.bf16.mxu0 0
        %791 = vmatpush1.bf16.xpose.msra.mxu0 %v788
        %792 = vmatprep.subr.bf16.mxu0 0
        %793 = vmatpush1.bf16.xpose.msra.mxu0 0
        %794 = vmatprep.subr.bf16.mxu0 0
        %795 = vmatpush1.bf16.xpose.msra.mxu0 0
        %796 = vmatprep.subr.bf16.mxu0 0
        %797 = vmatpush1.bf16.xpose.msra.mxu0 0
        %798 = vmatprep.subr.bf16.mxu0 0
        %799 = vmatpush1.bf16.xpose.msra.mxu0 0
        %800 = vmatprep.subr.bf16.mxu0 0
        %801 = vmatpush1.bf16.xpose.msra.mxu0 0
        %802 = vmatprep.subr.bf16.mxu0 0
        %803 = vmatpush1.bf16.xpose.msra.mxu0 0
        %804 = vmatprep.subr.bf16.mxu0 0
        %805 = vmatpush1.bf16.xpose.msra.mxu0 0
        %806 = vmatprep.subr.bf16.mxu0 0
        %807 = vmatpush1.bf16.xpose.msra.mxu0 0
        %808 = vmatprep.subr.bf16.mxu0 0
        %809 = vmatpush1.bf16.xpose.msra.mxu0 0
        %810 = vmatprep.subr.bf16.mxu0 0
        %811 = vmatpush1.bf16.xpose.msra.mxu0 0
        %812 = vmatprep.subr.bf16.mxu0 0
        %813 = vmatpush1.bf16.xpose.msra.mxu0 0
        %814 = vmatprep.subr.bf16.mxu0 0
        %815 = vmatpush1.bf16.xpose.msra.mxu0 0
        %816 = vmatprep.subr.bf16.mxu0 0
        %817 = vmatpush1.bf16.xpose.msra.mxu0 0
        %818 = vmatprep.subr.bf16.mxu0 0
        %819 = vmatpush1.bf16.xpose.msra.mxu0 0
        %820 = vmatprep.subr.bf16.mxu0 0
        %821 = vmatpush1.bf16.xpose.msra.mxu0 0
        %822 = vmatprep.mubr.bf16.mxu0 0
        %823 = vmatmul.mubr.bf16.gmra.mrb[0].mxu0 %v785
        %v824 = vpop.f32.mrb[0].mxu0
        %v825 = vadd.f32 %v778, %v824
        %v826 = vpop.f32.mrb[0].mxu0
        %v827 = vpop.f32.mrb[0].mxu0
        %v828 = vadd.f32 %v779, %v827
        %v829 = vpop.f32.mrb[0].mxu0
        %830 = vdwg.mxu0
        %v831 = vsel %vm598, %v825, -inf
        %832 = vmax.xlane.f32.xlu0 %v831
        %v833 = vpop.xlane.xlu0 %832
        %v834 = vsel %vm598, %v828, -inf
        %835 = vmax.xlane.f32.xlu0 %v834
        %v836 = vpop.xlane.xlu0 %835
        %v837 = vsub.f32 %v825, %v833
        %v838 = vsub.f32 %v828, %v836
        %v839 = vmul.f32 %v837, 1.442695
        %v840 = vpow.pop %v839
        %v841 = vmul.f32 %v838, 1.442695
        %v842 = vpow.pop %v841
        %v843 = vsel %vm598, %v840, 0.0
        %844 = vadd.xlane.f32.xlu0 %v843
        %v845 = vpop.xlane.xlu0 %844
        %v846 = vsel %vm598, %v842, 0.0
        %847 = vadd.xlane.f32.xlu0 %v846
        %v848 = vpop.xlane.xlu0 %847
        %v849 = vrcp.pop %v845
        %v850 = vrcp.pop %v848
        %v851 = vmul.f32 %v840, %v849
        %v852 = vmul.f32 %v842, %v850
        %v853 = vpack.c.bf16 %v852, %v851
        %854 = vrot.lane.b32.xlu0 %v433, 88
        %v855 = vpop.permute.xlu0 %854
        %v858 = vsel %vm598, %v853, 0
        %860 = vmatprep.subr.bf16.mxu0 0
        %861 = vmatpush1.bf16.msra.mxu0 %v855
        %862 = vmatprep.subr.bf16.mxu0 0
        %863 = vmatpush1.bf16.msra.mxu0 0
        %864 = vmatprep.subr.bf16.mxu0 0
        %865 = vmatpush1.bf16.msra.mxu0 0
        %866 = vmatprep.subr.bf16.mxu0 0
        %867 = vmatpush1.bf16.msra.mxu0 0
        %868 = vmatprep.subr.bf16.mxu0 0
        %869 = vmatpush1.bf16.msra.mxu0 0
        %870 = vmatprep.subr.bf16.mxu0 0
        %871 = vmatpush1.bf16.msra.mxu0 0
        %872 = vmatprep.subr.bf16.mxu0 0
        %873 = vmatpush1.bf16.msra.mxu0 0
        %874 = vmatprep.subr.bf16.mxu0 0
        %875 = vmatpush1.bf16.msra.mxu0 0
        %876 = vmatprep.subr.bf16.mxu0 0
        %877 = vmatpush1.bf16.msra.mxu0 0
        %878 = vmatprep.subr.bf16.mxu0 0
        %879 = vmatpush1.bf16.msra.mxu0 0
        %880 = vmatprep.subr.bf16.mxu0 0
        %881 = vmatpush1.bf16.msra.mxu0 0
        %882 = vmatprep.subr.bf16.mxu0 0
        %883 = vmatpush1.bf16.msra.mxu0 0
        %884 = vmatprep.subr.bf16.mxu0 0
        %885 = vmatpush1.bf16.msra.mxu0 0
        %886 = vmatprep.subr.bf16.mxu0 0
        %887 = vmatpush1.bf16.msra.mxu0 0
        %888 = vmatprep.subr.bf16.mxu0 0
        %889 = vmatpush1.bf16.msra.mxu0 0
        %890 = vmatprep.subr.bf16.mxu0 0
        %891 = vmatpush1.bf16.msra.mxu0 0
        %892 = vmatprep.mubr.bf16.mxu0 0
        %893 = vmatmul.mubr.bf16.gmra.mrb[0].mxu0 %v858
        %v894 = vpop.f32.mrb[0].mxu0
        %v895 = vadd.f32 0.0, %v894
        %v896 = vpop.f32.mrb[0].mxu0
        %v897 = vpop.f32.mrb[0].mxu0
        %v898 = vadd.f32 0.0, %v897
        %v899 = vpop.f32.mrb[0].mxu0
        %900 = vdwg.mxu0
        %s901 = sld [smem:[#allocation5 + $0x100]]
        %s902 = sld [smem:[#allocation6 + $0x100]]
        %s903 = sld [smem:[#allocation8 + $0x100]]
        %s904 = sand.u32 2147483647, %s903
        %s905 = ssub.f32 0.0, %s904
        %v906 = vstv %s902
        %v907 = vsub.f32 %v431, %v906
        %v908 = vsub.f32 %v432, %v906
        %v909 = vmul.f32 %v907, %v907
        %v910 = vmul.f32 %v908, %v908
        %v911 = vstv %s905
        %v912 = vmul.f32 %v911, %v909
        %v913 = vmul.f32 %v911, %v910
        %v914 = vmul.f32 %v912, 1.442695
        %v915 = vpow.pop %v914
        %v916 = vmul.f32 %v913, 1.442695
        %v917 = vpow.pop %v916
        %v918 = vstv %s901
        %v919 = vmul.f32 %v918, %v915
        %v920 = vmul.f32 %v918, %v917
        %v921 = vadd.f32 %v919, 0.0
        %v922 = vadd.f32 %v920, 0.0
        %s923 = sld [smem:[#allocation5 + $0x101]]
        %s924 = sld [smem:[#allocation6 + $0x101]]
        %s925 = sld [smem:[#allocation8 + $0x101]]
        %s926 = sand.u32 2147483647, %s925
        %s927 = ssub.f32 0.0, %s926
        %v928 = vstv %s924
        %v929 = vsub.f32 %v431, %v928
        %v930 = vsub.f32 %v432, %v928
        %v931 = vmul.f32 %v929, %v929
        %v932 = vmul.f32 %v930, %v930
        %v933 = vstv %s927
        %v934 = vmul.f32 %v933, %v931
        %v935 = vmul.f32 %v933, %v932
        %v936 = vmul.f32 %v934, 1.442695
        %v937 = vpow.pop %v936
        %v938 = vmul.f32 %v935, 1.442695
        %v939 = vpow.pop %v938
        %v940 = vstv %s923
        %v941 = vmul.f32 %v940, %v937
        %v942 = vmul.f32 %v940, %v939
        %v943 = vadd.f32 %v921, %v941
        %v944 = vadd.f32 %v922, %v942
        %s945 = sld [smem:[#allocation5 + $0x102]]
        %s946 = sld [smem:[#allocation6 + $0x102]]
        %s947 = sld [smem:[#allocation8 + $0x102]]
        %s948 = sand.u32 2147483647, %s947
        %s949 = ssub.f32 0.0, %s948
        %v950 = vstv %s946
        %v951 = vsub.f32 %v431, %v950
        %v952 = vsub.f32 %v432, %v950
        %v953 = vmul.f32 %v951, %v951
        %v954 = vmul.f32 %v952, %v952
        %v955 = vstv %s949
        %v956 = vmul.f32 %v955, %v953
        %v957 = vmul.f32 %v955, %v954
        %v958 = vmul.f32 %v956, 1.442695
        %v959 = vpow.pop %v958
        %v960 = vmul.f32 %v957, 1.442695
        %v961 = vpow.pop %v960
        %v962 = vstv %s945
        %v963 = vmul.f32 %v962, %v959
        %v964 = vmul.f32 %v962, %v961
        %v965 = vadd.f32 %v943, %v963
        %v966 = vadd.f32 %v944, %v964
        %s967 = sld [smem:[#allocation5 + $0x103]]
        %s968 = sld [smem:[#allocation6 + $0x103]]
        %s969 = sld [smem:[#allocation8 + $0x103]]
        %s970 = sand.u32 2147483647, %s969
        %s971 = ssub.f32 0.0, %s970
        %v972 = vstv %s968
        %v973 = vsub.f32 %v431, %v972
        %v974 = vsub.f32 %v432, %v972
        %v975 = vmul.f32 %v973, %v973
        %v976 = vmul.f32 %v974, %v974
        %v977 = vstv %s971
        %v978 = vmul.f32 %v977, %v975
        %v979 = vmul.f32 %v977, %v976
        %v980 = vmul.f32 %v978, 1.442695
        %v981 = vpow.pop %v980
        %v982 = vmul.f32 %v979, 1.442695
        %v983 = vpow.pop %v982
        %v984 = vstv %s967
        %v985 = vmul.f32 %v984, %v981
        %v986 = vmul.f32 %v984, %v983
        %v987 = vadd.f32 %v965, %v985
        %v988 = vadd.f32 %v966, %v986
        %s989 = sld [smem:[#allocation5 + $0x104]]
        %s990 = sld [smem:[#allocation6 + $0x104]]
        %s991 = sld [smem:[#allocation8 + $0x104]]
        %s992 = sand.u32 2147483647, %s991
        %s993 = ssub.f32 0.0, %s992
        %v994 = vstv %s990
        %v995 = vsub.f32 %v431, %v994
        %v996 = vsub.f32 %v432, %v994
        %v997 = vmul.f32 %v995, %v995
        %v998 = vmul.f32 %v996, %v996
        %v999 = vstv %s993
        %v1000 = vmul.f32 %v999, %v997
        %v1001 = vmul.f32 %v999, %v998
        %v1002 = vmul.f32 %v1000, 1.442695
        %v1003 = vpow.pop %v1002
        %v1004 = vmul.f32 %v1001, 1.442695
        %v1005 = vpow.pop %v1004
        %v1006 = vstv %s989
        %v1007 = vmul.f32 %v1006, %v1003
        %v1008 = vmul.f32 %v1006, %v1005
        %v1009 = vadd.f32 %v987, %v1007
        %v1010 = vadd.f32 %v988, %v1008
        %1011 = vrot.lane.b32.xlu0 %v436, 48
        %v1012 = vpop.permute.xlu0 %1011
        %1013 = vrot.lane.b32.xlu0 %v433, 112
        %v1014 = vpop.permute.xlu0 %1013
        %v1016 = vsel %vm550, %v1012, 0
        %v1019 = vsel %vm550, %v1014, 0
        %1021 = vmatprep.subr.bf16.mxu0 0
        %1022 = vmatpush1.bf16.xpose.msra.mxu0 %v1019
        %1023 = vmatprep.subr.bf16.mxu0 0
        %1024 = vmatpush1.bf16.xpose.msra.mxu0 0
        %1025 = vmatprep.subr.bf16.mxu0 0
        %1026 = vmatpush1.bf16.xpose.msra.mxu0 0
        %1027 = vmatprep.subr.bf16.mxu0 0
        %1028 = vmatpush1.bf16.xpose.msra.mxu0 0
        %1029 = vmatprep.subr.bf16.mxu0 0
        %1030 = vmatpush1.bf16.xpose.msra.mxu0 0
        %1031 = vmatprep.subr.bf16.mxu0 0
        %1032 = vmatpush1.bf16.xpose.msra.mxu0 0
        %1033 = vmatprep.subr.bf16.mxu0 0
        %1034 = vmatpush1.bf16.xpose.msra.mxu0 0
        %1035 = vmatprep.subr.bf16.mxu0 0
        %1036 = vmatpush1.bf16.xpose.msra.mxu0 0
        %1037 = vmatprep.subr.bf16.mxu0 0
        %1038 = vmatpush1.bf16.xpose.msra.mxu0 0
        %1039 = vmatprep.subr.bf16.mxu0 0
        %1040 = vmatpush1.bf16.xpose.msra.mxu0 0
        %1041 = vmatprep.subr.bf16.mxu0 0
        %1042 = vmatpush1.bf16.xpose.msra.mxu0 0
        %1043 = vmatprep.subr.bf16.mxu0 0
        %1044 = vmatpush1.bf16.xpose.msra.mxu0 0
        %1045 = vmatprep.subr.bf16.mxu0 0
        %1046 = vmatpush1.bf16.xpose.msra.mxu0 0
        %1047 = vmatprep.subr.bf16.mxu0 0
        %1048 = vmatpush1.bf16.xpose.msra.mxu0 0
        %1049 = vmatprep.subr.bf16.mxu0 0
        %1050 = vmatpush1.bf16.xpose.msra.mxu0 0
        %1051 = vmatprep.subr.bf16.mxu0 0
        %1052 = vmatpush1.bf16.xpose.msra.mxu0 0
        %1053 = vmatprep.mubr.bf16.mxu0 0
        %1054 = vmatmul.mubr.bf16.gmra.mrb[0].mxu0 %v1016
        %v1055 = vpop.f32.mrb[0].mxu0
        %v1056 = vadd.f32 %v1009, %v1055
        %v1057 = vpop.f32.mrb[0].mxu0
        %v1058 = vpop.f32.mrb[0].mxu0
        %v1059 = vadd.f32 %v1010, %v1058
        %v1060 = vpop.f32.mrb[0].mxu0
        %1061 = vdwg.mxu0
        %v1062 = vsel %vm598, %v1056, -inf
        %1063 = vmax.xlane.f32.xlu0 %v1062
        %v1064 = vpop.xlane.xlu0 %1063
        %v1065 = vsel %vm598, %v1059, -inf
        %1066 = vmax.xlane.f32.xlu0 %v1065
        %v1067 = vpop.xlane.xlu0 %1066
        %v1068 = vsub.f32 %v1056, %v1064
        %v1069 = vsub.f32 %v1059, %v1067
        %v1070 = vmul.f32 %v1068, 1.442695
        %v1071 = vpow.pop %v1070
        %v1072 = vmul.f32 %v1069, 1.442695
        %v1073 = vpow.pop %v1072
        %v1074 = vsel %vm598, %v1071, 0.0
        %1075 = vadd.xlane.f32.xlu0 %v1074
        %v1076 = vpop.xlane.xlu0 %1075
        %v1077 = vsel %vm598, %v1073, 0.0
        %1078 = vadd.xlane.f32.xlu0 %v1077
        %v1079 = vpop.xlane.xlu0 %1078
        %v1080 = vrcp.pop %v1076
        %v1081 = vrcp.pop %v1079
        %v1082 = vmul.f32 %v1071, %v1080
        %v1083 = vmul.f32 %v1073, %v1081
        %v1084 = vpack.c.bf16 %v1083, %v1082
        %1085 = vrot.lane.b32.xlu0 %v433, 80
        %v1086 = vpop.permute.xlu0 %1085
        %v1089 = vsel %vm598, %v1084, 0
        %1091 = vmatprep.subr.bf16.mxu0 0
        %1092 = vmatpush1.bf16.msra.mxu0 %v1086
        %1093 = vmatprep.subr.bf16.mxu0 0
        %1094 = vmatpush1.bf16.msra.mxu0 0
        %1095 = vmatprep.subr.bf16.mxu0 0
        %1096 = vmatpush1.bf16.msra.mxu0 0
        %1097 = vmatprep.subr.bf16.mxu0 0
        %1098 = vmatpush1.bf16.msra.mxu0 0
        %1099 = vmatprep.subr.bf16.mxu0 0
        %1100 = vmatpush1.bf16.msra.mxu0 0
        %1101 = vmatprep.subr.bf16.mxu0 0
        %1102 = vmatpush1.bf16.msra.mxu0 0
        %1103 = vmatprep.subr.bf16.mxu0 0
        %1104 = vmatpush1.bf16.msra.mxu0 0
        %1105 = vmatprep.subr.bf16.mxu0 0
        %1106 = vmatpush1.bf16.msra.mxu0 0
        %1107 = vmatprep.subr.bf16.mxu0 0
        %1108 = vmatpush1.bf16.msra.mxu0 0
        %1109 = vmatprep.subr.bf16.mxu0 0
        %1110 = vmatpush1.bf16.msra.mxu0 0
        %1111 = vmatprep.subr.bf16.mxu0 0
        %1112 = vmatpush1.bf16.msra.mxu0 0
        %1113 = vmatprep.subr.bf16.mxu0 0
        %1114 = vmatpush1.bf16.msra.mxu0 0
        %1115 = vmatprep.subr.bf16.mxu0 0
        %1116 = vmatpush1.bf16.msra.mxu0 0
        %1117 = vmatprep.subr.bf16.mxu0 0
        %1118 = vmatpush1.bf16.msra.mxu0 0
        %1119 = vmatprep.subr.bf16.mxu0 0
        %1120 = vmatpush1.bf16.msra.mxu0 0
        %1121 = vmatprep.subr.bf16.mxu0 0
        %1122 = vmatpush1.bf16.msra.mxu0 0
        %1123 = vmatprep.mubr.bf16.mxu0 0
        %1124 = vmatmul.mubr.bf16.gmra.mrb[0].mxu0 %v1089
        %v1125 = vpop.f32.mrb[0].mxu0
        %v1126 = vadd.f32 0.0, %v1125
        %v1127 = vpop.f32.mrb[0].mxu0
        %v1128 = vpop.f32.mrb[0].mxu0
        %v1129 = vadd.f32 0.0, %v1128
        %v1130 = vpop.f32.mrb[0].mxu0
        %1131 = vdwg.mxu0
        %s1132 = sld [smem:[#allocation5 + $0x180]]
        %s1133 = sld [smem:[#allocation6 + $0x180]]
        %s1134 = sld [smem:[#allocation8 + $0x180]]
        %s1135 = sand.u32 2147483647, %s1134
        %s1136 = ssub.f32 0.0, %s1135
        %v1137 = vstv %s1133
        %v1138 = vsub.f32 %v431, %v1137
        %v1139 = vsub.f32 %v432, %v1137
        %v1140 = vmul.f32 %v1138, %v1138
        %v1141 = vmul.f32 %v1139, %v1139
        %v1142 = vstv %s1136
        %v1143 = vmul.f32 %v1142, %v1140
        %v1144 = vmul.f32 %v1142, %v1141
        %v1145 = vmul.f32 %v1143, 1.442695
        %v1146 = vpow.pop %v1145
        %v1147 = vmul.f32 %v1144, 1.442695
        %v1148 = vpow.pop %v1147
        %v1149 = vstv %s1132
        %v1150 = vmul.f32 %v1149, %v1146
        %v1151 = vmul.f32 %v1149, %v1148
        %v1152 = vadd.f32 %v1150, 0.0
        %v1153 = vadd.f32 %v1151, 0.0
        %s1154 = sld [smem:[#allocation5 + $0x181]]
        %s1155 = sld [smem:[#allocation6 + $0x181]]
        %s1156 = sld [smem:[#allocation8 + $0x181]]
        %s1157 = sand.u32 2147483647, %s1156
        %s1158 = ssub.f32 0.0, %s1157
        %v1159 = vstv %s1155
        %v1160 = vsub.f32 %v431, %v1159
        %v1161 = vsub.f32 %v432, %v1159
        %v1162 = vmul.f32 %v1160, %v1160
        %v1163 = vmul.f32 %v1161, %v1161
        %v1164 = vstv %s1158
        %v1165 = vmul.f32 %v1164, %v1162
        %v1166 = vmul.f32 %v1164, %v1163
        %v1167 = vmul.f32 %v1165, 1.442695
        %v1168 = vpow.pop %v1167
        %v1169 = vmul.f32 %v1166, 1.442695
        %v1170 = vpow.pop %v1169
        %v1171 = vstv %s1154
        %v1172 = vmul.f32 %v1171, %v1168
        %v1173 = vmul.f32 %v1171, %v1170
        %v1174 = vadd.f32 %v1152, %v1172
        %v1175 = vadd.f32 %v1153, %v1173
        %s1176 = sld [smem:[#allocation5 + $0x182]]
        %s1177 = sld [smem:[#allocation6 + $0x182]]
        %s1178 = sld [smem:[#allocation8 + $0x182]]
        %s1179 = sand.u32 2147483647, %s1178
        %s1180 = ssub.f32 0.0, %s1179
        %v1181 = vstv %s1177
        %v1182 = vsub.f32 %v431, %v1181
        %v1183 = vsub.f32 %v432, %v1181
        %v1184 = vmul.f32 %v1182, %v1182
        %v1185 = vmul.f32 %v1183, %v1183
        %v1186 = vstv %s1180
        %v1187 = vmul.f32 %v1186, %v1184
        %v1188 = vmul.f32 %v1186, %v1185
        %v1189 = vmul.f32 %v1187, 1.442695
        %v1190 = vpow.pop %v1189
        %v1191 = vmul.f32 %v1188, 1.442695
        %v1192 = vpow.pop %v1191
        %v1193 = vstv %s1176
        %v1194 = vmul.f32 %v1193, %v1190
        %v1195 = vmul.f32 %v1193, %v1192
        %v1196 = vadd.f32 %v1174, %v1194
        %v1197 = vadd.f32 %v1175, %v1195
        %s1198 = sld [smem:[#allocation5 + $0x183]]
        %s1199 = sld [smem:[#allocation6 + $0x183]]
        %s1200 = sld [smem:[#allocation8 + $0x183]]
        %s1201 = sand.u32 2147483647, %s1200
        %s1202 = ssub.f32 0.0, %s1201
        %v1203 = vstv %s1199
        %v1204 = vsub.f32 %v431, %v1203
        %v1205 = vsub.f32 %v432, %v1203
        %v1206 = vmul.f32 %v1204, %v1204
        %v1207 = vmul.f32 %v1205, %v1205
        %v1208 = vstv %s1202
        %v1209 = vmul.f32 %v1208, %v1206
        %v1210 = vmul.f32 %v1208, %v1207
        %v1211 = vmul.f32 %v1209, 1.442695
        %v1212 = vpow.pop %v1211
        %v1213 = vmul.f32 %v1210, 1.442695
        %v1214 = vpow.pop %v1213
        %v1215 = vstv %s1198
        %v1216 = vmul.f32 %v1215, %v1212
        %v1217 = vmul.f32 %v1215, %v1214
        %v1218 = vadd.f32 %v1196, %v1216
        %v1219 = vadd.f32 %v1197, %v1217
        %s1220 = sld [smem:[#allocation5 + $0x184]]
        %s1221 = sld [smem:[#allocation6 + $0x184]]
        %s1222 = sld [smem:[#allocation8 + $0x184]]
        %s1223 = sand.u32 2147483647, %s1222
        %s1224 = ssub.f32 0.0, %s1223
        %v1225 = vstv %s1221
        %v1226 = vsub.f32 %v431, %v1225
        %v1227 = vsub.f32 %v432, %v1225
        %v1228 = vmul.f32 %v1226, %v1226
        %v1229 = vmul.f32 %v1227, %v1227
        %v1230 = vstv %s1224
        %v1231 = vmul.f32 %v1230, %v1228
        %v1232 = vmul.f32 %v1230, %v1229
        %v1233 = vmul.f32 %v1231, 1.442695
        %v1234 = vpow.pop %v1233
        %v1235 = vmul.f32 %v1232, 1.442695
        %v1236 = vpow.pop %v1235
        %v1237 = vstv %s1220
        %v1238 = vmul.f32 %v1237, %v1234
        %v1239 = vmul.f32 %v1237, %v1236
        %v1240 = vadd.f32 %v1218, %v1238
        %v1241 = vadd.f32 %v1219, %v1239
        %1242 = vrot.lane.b32.xlu0 %v436, 40
        %v1243 = vpop.permute.xlu0 %1242
        %1244 = vrot.lane.b32.xlu0 %v433, 104
        %v1245 = vpop.permute.xlu0 %1244
        %v1247 = vsel %vm550, %v1243, 0
        %v1250 = vsel %vm550, %v1245, 0
        %1252 = vmatprep.subr.bf16.mxu0 0
        %1253 = vmatpush1.bf16.xpose.msra.mxu0 %v1250
        %1254 = vmatprep.subr.bf16.mxu0 0
        %1255 = vmatpush1.bf16.xpose.msra.mxu0 0
        %1256 = vmatprep.subr.bf16.mxu0 0
        %1257 = vmatpush1.bf16.xpose.msra.mxu0 0
        %1258 = vmatprep.subr.bf16.mxu0 0
        %1259 = vmatpush1.bf16.xpose.msra.mxu0 0
        %1260 = vmatprep.subr.bf16.mxu0 0
        %1261 = vmatpush1.bf16.xpose.msra.mxu0 0
        %1262 = vmatprep.subr.bf16.mxu0 0
        %1263 = vmatpush1.bf16.xpose.msra.mxu0 0
        %1264 = vmatprep.subr.bf16.mxu0 0
        %1265 = vmatpush1.bf16.xpose.msra.mxu0 0
        %1266 = vmatprep.subr.bf16.mxu0 0
        %1267 = vmatpush1.bf16.xpose.msra.mxu0 0
        %1268 = vmatprep.subr.bf16.mxu0 0
        %1269 = vmatpush1.bf16.xpose.msra.mxu0 0
        %1270 = vmatprep.subr.bf16.mxu0 0
        %1271 = vmatpush1.bf16.xpose.msra.mxu0 0
        %1272 = vmatprep.subr.bf16.mxu0 0
        %1273 = vmatpush1.bf16.xpose.msra.mxu0 0
        %1274 = vmatprep.subr.bf16.mxu0 0
        %1275 = vmatpush1.bf16.xpose.msra.mxu0 0
        %1276 = vmatprep.subr.bf16.mxu0 0
        %1277 = vmatpush1.bf16.xpose.msra.mxu0 0
        %1278 = vmatprep.subr.bf16.mxu0 0
        %1279 = vmatpush1.bf16.xpose.msra.mxu0 0
        %1280 = vmatprep.subr.bf16.mxu0 0
        %1281 = vmatpush1.bf16.xpose.msra.mxu0 0
        %1282 = vmatprep.subr.bf16.mxu0 0
        %1283 = vmatpush1.bf16.xpose.msra.mxu0 0
        %1284 = vmatprep.mubr.bf16.mxu0 0
        %1285 = vmatmul.mubr.bf16.gmra.mrb[0].mxu0 %v1247
        %v1286 = vpop.f32.mrb[0].mxu0
        %v1287 = vadd.f32 %v1240, %v1286
        %v1288 = vpop.f32.mrb[0].mxu0
        %v1289 = vpop.f32.mrb[0].mxu0
        %v1290 = vadd.f32 %v1241, %v1289
        %v1291 = vpop.f32.mrb[0].mxu0
        %1292 = vdwg.mxu0
        %v1293 = vsel %vm598, %v1287, -inf
        %1294 = vmax.xlane.f32.xlu0 %v1293
        %v1295 = vpop.xlane.xlu0 %1294
        %v1296 = vsel %vm598, %v1290, -inf
        %1297 = vmax.xlane.f32.xlu0 %v1296
        %v1298 = vpop.xlane.xlu0 %1297
        %v1299 = vsub.f32 %v1287, %v1295
        %v1300 = vsub.f32 %v1290, %v1298
        %v1301 = vmul.f32 %v1299, 1.442695
        %v1302 = vpow.pop %v1301
        %v1303 = vmul.f32 %v1300, 1.442695
        %v1304 = vpow.pop %v1303
        %v1305 = vsel %vm598, %v1302, 0.0
        %1306 = vadd.xlane.f32.xlu0 %v1305
        %v1307 = vpop.xlane.xlu0 %1306
        %v1308 = vsel %vm598, %v1304, 0.0
        %1309 = vadd.xlane.f32.xlu0 %v1308
        %v1310 = vpop.xlane.xlu0 %1309
        %v1311 = vrcp.pop %v1307
        %v1312 = vrcp.pop %v1310
        %v1313 = vmul.f32 %v1302, %v1311
        %v1314 = vmul.f32 %v1304, %v1312
        %v1315 = vpack.c.bf16 %v1314, %v1313
        %1316 = vrot.lane.b32.xlu0 %v433, 72
        %v1317 = vpop.permute.xlu0 %1316
        %v1320 = vsel %vm598, %v1315, 0
        %1322 = vmatprep.subr.bf16.mxu0 0
        %1323 = vmatpush1.bf16.msra.mxu0 %v1317
        %1324 = vmatprep.subr.bf16.mxu0 0
        %1325 = vmatpush1.bf16.msra.mxu0 0
        %1326 = vmatprep.subr.bf16.mxu0 0
        %1327 = vmatpush1.bf16.msra.mxu0 0
        %1328 = vmatprep.subr.bf16.mxu0 0
        %1329 = vmatpush1.bf16.msra.mxu0 0
        %1330 = vmatprep.subr.bf16.mxu0 0
        %1331 = vmatpush1.bf16.msra.mxu0 0
        %1332 = vmatprep.subr.bf16.mxu0 0
        %1333 = vmatpush1.bf16.msra.mxu0 0
        %1334 = vmatprep.subr.bf16.mxu0 0
        %1335 = vmatpush1.bf16.msra.mxu0 0
        %1336 = vmatprep.subr.bf16.mxu0 0
        %1337 = vmatpush1.bf16.msra.mxu0 0
        %1338 = vmatprep.subr.bf16.mxu0 0
        %1339 = vmatpush1.bf16.msra.mxu0 0
        %1340 = vmatprep.subr.bf16.mxu0 0
        %1341 = vmatpush1.bf16.msra.mxu0 0
        %1342 = vmatprep.subr.bf16.mxu0 0
        %1343 = vmatpush1.bf16.msra.mxu0 0
        %1344 = vmatprep.subr.bf16.mxu0 0
        %1345 = vmatpush1.bf16.msra.mxu0 0
        %1346 = vmatprep.subr.bf16.mxu0 0
        %1347 = vmatpush1.bf16.msra.mxu0 0
        %1348 = vmatprep.subr.bf16.mxu0 0
        %1349 = vmatpush1.bf16.msra.mxu0 0
        %1350 = vmatprep.subr.bf16.mxu0 0
        %1351 = vmatpush1.bf16.msra.mxu0 0
        %1352 = vmatprep.subr.bf16.mxu0 0
        %1353 = vmatpush1.bf16.msra.mxu0 0
        %1354 = vmatprep.mubr.bf16.mxu0 0
        %1355 = vmatmul.mubr.bf16.gmra.mrb[0].mxu0 %v1320
        %v1356 = vpop.f32.mrb[0].mxu0
        %v1357 = vadd.f32 0.0, %v1356
        %v1358 = vpop.f32.mrb[0].mxu0
        %v1359 = vpop.f32.mrb[0].mxu0
        %v1360 = vadd.f32 0.0, %v1359
        %v1361 = vpop.f32.mrb[0].mxu0
        %1362 = vdwg.mxu0
        %1365 = vrot.lane.b32.xlu0 %v895, 8
        %v1366 = vpop.permute.xlu0 %1365
        %1367 = vrot.lane.b32.xlu0 %v898, 8
        %v1368 = vpop.permute.xlu0 %1367
        %1373 = vrot.lane.b32.xlu0 %v1126, 16
        %v1374 = vpop.permute.xlu0 %1373
        %1375 = vrot.lane.b32.xlu0 %v1129, 16
        %v1376 = vpop.permute.xlu0 %1375
        %1381 = vrot.lane.b32.xlu0 %v1357, 24
        %v1382 = vpop.permute.xlu0 %1381
        %1383 = vrot.lane.b32.xlu0 %v1360, 24
        %v1384 = vpop.permute.xlu0 %1383
        %v1387 = vsel %vm550, %v664, %v1366
        %v1388 = vsel %vm550, %v667, %v1368
        %v1389 = vsel %vm598, %v1387, %v1374
        %v1390 = vsel %vm598, %v1388, %v1376
        %vm1391 = vcmask 195584
        %v1392 = vsel %vm1391, %v1389, %v1382
        %v1393 = vsel %vm1391, %v1390, %v1384
        %v1394 = vpack.c.bf16 %v1393, %v1392
        %v1395 = vld [vmem:[%s2] sm:$0xf]
        %v1396 = vld [vmem:[%s2 + $0x4] sm:$0xf]
        %v1397 = vld [vmem:[%s2 + $0x8] sm:$0xf]
        %v1398 = vld [vmem:[%s2 + $0xc] sm:$0xf]
        %v1399 = vld [vmem:[%s3] sm:$0x1]
        %v1401 = vlaneseq
        %v1402 = vshrl.u32 %v1401, 7
        %v1403 = vsub.s32 0, %v1402
        %v1404 = vrot.slane %v1399, %v1403
        %v1410 = vunpack.c.l.b16 %v1395
        %v1411 = vunpack.c.l.b16 %v1396
        %v1412 = vunpack.c.l.b16 %v1397
        %v1413 = vunpack.c.l.b16 %v1398
        %v1414 = vpack.c.b16 %v1411, %v1410
        %v1415 = vpack.c.b16 %v1413, %v1412
        %v1419 = vsel %vm379, %v1394, 0
        %1421 = vmatprep.subr.bf16.mxu0 0
        %1422 = vmatpush1.bf16.msra.mxu0 %v1414
        %1423 = vmatprep.subr.bf16.mxu0 0
        %1424 = vmatpush1.bf16.msra.mxu0 %v1415
        %1425 = vmatprep.subr.bf16.mxu0 0
        %1426 = vmatpush1.bf16.msra.mxu0 0
        %1427 = vmatprep.subr.bf16.mxu0 0
        %1428 = vmatpush1.bf16.msra.mxu0 0
        %1429 = vmatprep.subr.bf16.mxu0 0
        %1430 = vmatpush1.bf16.msra.mxu0 0
        %1431 = vmatprep.subr.bf16.mxu0 0
        %1432 = vmatpush1.bf16.msra.mxu0 0
        %1433 = vmatprep.subr.bf16.mxu0 0
        %1434 = vmatpush1.bf16.msra.mxu0 0
        %1435 = vmatprep.subr.bf16.mxu0 0
        %1436 = vmatpush1.bf16.msra.mxu0 0
        %1437 = vmatprep.subr.bf16.mxu0 0
        %1438 = vmatpush1.bf16.msra.mxu0 0
        %1439 = vmatprep.subr.bf16.mxu0 0
        %1440 = vmatpush1.bf16.msra.mxu0 0
        %1441 = vmatprep.subr.bf16.mxu0 0
        %1442 = vmatpush1.bf16.msra.mxu0 0
        %1443 = vmatprep.subr.bf16.mxu0 0
        %1444 = vmatpush1.bf16.msra.mxu0 0
        %1445 = vmatprep.subr.bf16.mxu0 0
        %1446 = vmatpush1.bf16.msra.mxu0 0
        %1447 = vmatprep.subr.bf16.mxu0 0
        %1448 = vmatpush1.bf16.msra.mxu0 0
        %1449 = vmatprep.subr.bf16.mxu0 0
        %1450 = vmatpush1.bf16.msra.mxu0 0
        %1451 = vmatprep.subr.bf16.mxu0 0
        %1452 = vmatpush1.bf16.msra.mxu0 0
        %1453 = vmatprep.mubr.bf16.mxu0 0
        %1454 = vmatmul.mubr.bf16.gmra.mrb[0].mxu0 %v1419
        %v1455 = vpop.f32.mrb[0].mxu0
        %v1456 = vadd.f32 %v1404, %v1455
        %v1457 = vpop.f32.mrb[0].mxu0
        %v1458 = vpop.f32.mrb[0].mxu0
        %v1459 = vadd.f32 %v1404, %v1458
        %v1460 = vpop.f32.mrb[0].mxu0
        %1461 = vdwg.mxu0
        %v1462 = vxor.u32 %v1456, 2147483648
        %v1463 = vxor.u32 %v1459, 2147483648
        %v1464 = vmul.f32 %v1462, 1.442695
        %v1465 = vpow.pop %v1464
        %v1466 = vmul.f32 %v1463, 1.442695
        %v1467 = vpow.pop %v1466
        %v1468 = vadd.f32 %v1465, 1.0
        %v1469 = vadd.f32 %v1467, 1.0
        %v1470 = vrcp.pop %v1468
        %v1471 = vmul.f32 1.0, %v1470
        %v1472 = vrcp.pop %v1469
        %v1473 = vmul.f32 1.0, %v1472
        %1476 = vrot.lane.b32.xlu0 %v1471, 96
        %v1477 = vpop.permute.xlu0 %1476
        %1478 = vrot.lane.b32.xlu0 %v1473, 96
        %v1479 = vpop.permute.xlu0 %1478
        %v1482 = vmul.f32 %v1456, %v1477
        %v1483 = vmul.f32 %v1459, %v1479
        %v1484 = vadd.f32 %v1482, %v360
        %v1485 = vadd.f32 %v1483, %v361
        %v1486 = vmul.f32 %v1484, %v1484
        %v1487 = vmul.f32 %v1485, %v1485
        %v1488 = vsel %vm379, %v1486, 0.0
        %1489 = vadd.xlane.f32.xlu0 %v1488
        %v1490 = vpop.xlane.xlu0 %1489
        %v1491 = vsel %vm379, %v1487, 0.0
        %1492 = vadd.xlane.f32.xlu0 %v1491
        %v1493 = vpop.xlane.xlu0 %1492
        %v1494 = vrcp.pop 32.0
        %v1495 = vmul.f32 %v1490, %v1494
        %v1496 = vmul.f32 %v1493, %v1494
        %v1497 = vld [vmem:[%s4] sm:$0x1]
        %v1498 = vadd.f32 %v1495, 1e-06
        %v1499 = vadd.f32 %v1496, 1e-06
        %v1500 = vrsqrt.pop %v1498
        %v1501 = vrsqrt.pop %v1499
        %v1502 = vmul.f32 %v1484, %v1500
        %v1503 = vmul.f32 %v1485, %v1501
        %v1505 = vlaneseq
        %v1506 = vshrl.u32 %v1505, 7
        %v1507 = vsub.s32 0, %v1506
        %v1508 = vrot.slane %v1497, %v1507
        %v1510 = vmul.f32 %v1508, %v1502
        %v1511 = vmul.f32 %v1508, %v1503
        %1512 = vst.msk [vmem:[%s358] sm:$0xff] %vm379, %v1510
        %1513 = vst.msk [vmem:[%s358 + $0x8] sm:$0xff] %vm379, %v1511
        %p1514 = scmp.lt.s32.totalorder %s24, 1
        %s1515 = scalar_select %p1514, %s24, 1
        %s1516 = smul.addr %s1515, 2
        %s1517 = smul.addr %s1516, 8
        %s1518 = scalar_lea.vmem %s8, %s1517
        // Predicated region
        $region69: #{attn_block_forward.2} parent=51 // pred_check
          %p1519 = pneg %p215
        $region70: #{attn_block_forward.2} parent=51 // pred_check_branch
          %1521 = sbr.rel (%p1519) target = $region72
        $region71: #{attn_block_forward.2} parent=51 // pred_region
          _
        $region72: #{attn_block_forward.2} parent=51 // pred_fallthru
          _
      $region52: #{attn_block_forward.2} parent=5 // pred_fallthru
        _
      %p1522 = scmp.le.s32.totalorder 2, %s19
      // Predicated region
      $region73: #{attn_block_forward.2} parent=5 // pred_check
        %p1523 = pneg %p1522
      $region74: #{attn_block_forward.2} parent=5 // pred_check_branch
        %1525 = sbr.rel (%p1523) target = $region76
      $region75: #{attn_block_forward.2} parent=5 // pred_region
        %s1526 = ssub.s32 %s19, 2
        // Predicated region
        $region77: #{attn_block_forward.2} parent=75 // pred_check
          %p1527 = pneg %p221
        $region78: #{attn_block_forward.2} parent=75 // pred_check_branch
          %1529 = sbr.rel (%p1527) target = $region80
        $region79: #{attn_block_forward.2} parent=75 // pred_region
          %p1530 = scmp.lt.s32.totalorder %s25, 1
          %s1531 = scalar_select %p1530, %s25, 1
          %s1532 = smul.addr %s1531, 2
          %s1533 = smul.addr %s1532, 8
          %s1534 = scalar_lea.vmem %s8, %s1533
        $region80: #{attn_block_forward.2} parent=75 // pred_fallthru
          _
      $region76: #{attn_block_forward.2} parent=5 // pred_fallthru
        _
    $region6: #{attn_block_forward.2} parent=1 // loop_footer
      %s23 = sadd.s32 1, %s19
    $region7: #{attn_block_forward.2} parent=1 // loop_footer_branch
      %18 = sbr.rel target = $region3
    $region8: #{attn_block_forward.2} parent=1 // loop_exit
      _
    %1535 = vsyncpa [#allocation3], 1
    %s1536 = scalar_lea.sflag [#allocation3], 1
    %1537 = vsyncpa %s1536, 1
    %1538 = vsyncpa [#allocation4], 1
    %s1539 = scalar_lea.sflag [#allocation4], 1
    %1540 = vsyncpa %s1539, 1
    %1541 = vsyncpa [#allocation7], 1

</llo_original>
